<compile_context>
chip_gen: v7x
topology: tpu7x:2x2x1
jax: 0.10.0
libtpu: 0.0.40
codegen_flags: <defaults>
</compile_context>

<pallas_src>
import math
import functools

import jax
import jax.numpy as jnp
from jax.experimental import pallas as pl
from jax.experimental.pallas import tpu as pltpu


# --------------------------------------------------------------------------- #
# Kernel: whole transformer block for one (Bb, S, D) batch-block per grid step.
# --------------------------------------------------------------------------- #
def transformer_block_kernel(
    x_ref, cos_ref, sin_ref,
    attn_nw_ref, wqkv_ref, wo_ref,
    ffn_nw_ref, w13_ref, w2_ref,
    out_ref,
    *, n_heads, head_dim, eps,
):
    f32, bf16 = jnp.float32, jnp.bfloat16
    Bb, S, D = x_ref.shape
    Hff = w2_ref.shape[0]
    N = Bb * S

    x = x_ref[...].reshape(N, D)                     # fold batch into sublanes

    def rms_norm(v, w):
        ms = jnp.mean(v * v, axis=-1, keepdims=True)
        return (v * jax.lax.rsqrt(ms + eps)) * w     # w: (1, D) broadcasts

    # ---------------- attention ----------------
    xn = rms_norm(x, attn_nw_ref[...]).astype(bf16)
    # Fused QKV: one weight DMA + one MXU pass with 3*D output lanes.
    qkv = jnp.dot(xn, wqkv_ref[...], preferred_element_type=f32)     # (N, 3D)
    q, k, v = qkv[:, :D], qkv[:, D:2 * D], qkv[:, 2 * D:]

    # Rotary embedding on interleaved (real, imag) pairs.  cos/sin arrive as
    # (S, head_dim) and are expanded in-kernel (cheap copies vs n_heads x DMA).
    cos_d = jnp.concatenate([cos_ref[...]] * n_heads, axis=-1)        # (S, D)
    sin_d = jnp.concatenate([sin_ref[...]] * n_heads, axis=-1)        # (S, D), sign folded in
    cos_b = jnp.concatenate([cos_d] * Bb, axis=0)                     # (N, D)
    sin_b = jnp.concatenate([sin_d] * Bb, axis=0)
    col = jax.lax.broadcasted_iota(jnp.int32, (N, D), 1)
    even = (col % 2) == 0

    def rope(t):
        # Even lanes read t[:, i+1] (imag), odd lanes read t[:, i-1] (real);
        # lane-roll wraparound is never selected by the even/odd mask.
        nxt = pltpu.roll(t, D - 1, 1)
        prv = pltpu.roll(t, 1, 1)
        return t * cos_b + jnp.where(even, nxt, prv) * sin_b

    q = rope(q)
    k = rope(k)

    # Split heads via static 128-aligned-stride lane slices -> (H*Bb, S, hd).
    def to_heads(t):                                  # t: (N, D) bf16
        heads = [t[:, h * head_dim:(h + 1) * head_dim].reshape(Bb, S, head_dim)
                 for h in range(n_heads)]
        return jnp.stack(heads, axis=0).reshape(n_heads * Bb, S, head_dim)

    qh = to_heads(q.astype(bf16))
    kh = to_heads(k.astype(bf16))
    vh = to_heads(v.astype(bf16))

    # Scores / causal softmax / PV, batched over (head, batch).
    scale = 1.0 / math.sqrt(head_dim)
    s = jnp.einsum("bqd,bkd->bqk", qh, kh, preferred_element_type=f32) * scale
    rows = jax.lax.broadcasted_iota(jnp.int32, (S, S), 0)
    cols = jax.lax.broadcasted_iota(jnp.int32, (S, S), 1)
    causal = jnp.where(cols > rows, -jnp.inf, 0.0).astype(f32)        # in-kernel mask
    s = s + causal[None, :, :]
    m = jnp.max(s, axis=-1, keepdims=True)
    p = jnp.exp(s - m)                                                # f32 (v5e-safe)
    denom = jnp.sum(p, axis=-1, keepdims=True)
    p = p * pl.reciprocal(denom, approx=True)                         # EUP reciprocal
    o = jnp.einsum("bqk,bkd->bqd", p.astype(bf16), vh,
                   preferred_element_type=f32)                        # (H*Bb, S, hd)

    # Combine heads along lanes (bf16), then ONE (N, D) @ (D, D) projection:
    # the head-sum rides the MXU K-contraction (no (H, S, D) f32 temp).
    o4 = o.astype(bf16).reshape(n_heads, Bb, S, head_dim)
    o_cat = jnp.concatenate(
        [o4[h].reshape(N, head_dim) for h in range(n_heads)], axis=-1)  # (N, D)
    attn = jnp.dot(o_cat, wo_ref[...], preferred_element_type=f32)
    h_res = x + attn                     # residual 1 (dropout p=0 -> identity)

    # ---------------- SwiGLU feed-forward ----------------
    hn = rms_norm(h_res, ffn_nw_ref[...]).astype(bf16)
    # Fused W1|W3 up-projection: one weight DMA + one MXU pass with 2*H lanes.
    gu = jnp.dot(hn, w13_ref[...], preferred_element_type=f32)        # (N, 2H)
    g, u = gu[:, :Hff], gu[:, Hff:]
    # TODO(synk): on v6e/v7x the sigmoid could run in bf16 (native bf16 VPU/EUP);
    # kept f32 so the same kernel is exact on v5e.
    act = (g * jax.nn.sigmoid(g)) * u                                 # SiLU(w1 x) * w3 x
    ffn = jnp.dot(act.astype(bf16), w2_ref[...], preferred_element_type=f32)

    out_ref[...] = (h_res + ffn).reshape(Bb, S, D)                    # residual 2


# --------------------------------------------------------------------------- #
# Host wrapper
# --------------------------------------------------------------------------- #
def transformer_block(x, cos_hd, sin_hd, params, *, n_heads, head_dim, eps,
                      batch_block=None):
    B, S, D = x.shape
    Hff = params["w1_t"].shape[1]
    bf16 = jnp.bfloat16
    Bb = B if batch_block is None else batch_block
    assert B % Bb == 0, "batch_block must divide batch"

    # Host prep: fused bf16 weights (halves DMA + VMEM, one MXU pass each).
    wqkv = jnp.concatenate(
        [params["wq_t"], params["wk_t"], params["wv_t"]], axis=1).astype(bf16)   # (D, 3D)
    wo = params["wo_t"].astype(bf16)                                             # (D, D)
    w13 = jnp.concatenate([params["w1_t"], params["w3_t"]], axis=1).astype(bf16) # (D, 2H)
    w2 = params["w2_t"].astype(bf16)                                             # (H, D)

    kernel = functools.partial(
        transformer_block_kernel, n_heads=n_heads, head_dim=head_dim, eps=eps)

    c2 = lambda b: (0, 0)            # same full block every grid step
    in_specs = [
        pl.BlockSpec((Bb, S, D), lambda b: (b, 0, 0)),     # x
        pl.BlockSpec((S, head_dim), c2),                   # RoPE cos (interleaved pairs)
        pl.BlockSpec((S, head_dim), c2),                   # RoPE sin (sign folded in)
        pl.BlockSpec((1, D), c2),                          # attention_norm weight (f32)
        pl.BlockSpec((D, 3 * D), c2),                      # wq|wk|wv fused (bf16)
        pl.BlockSpec((D, D), c2),                          # wo (bf16)
        pl.BlockSpec((1, D), c2),                          # ffn_norm weight (f32)
        pl.BlockSpec((D, 2 * Hff), c2),                    # w1|w3 fused (bf16)
        pl.BlockSpec((Hff, D), c2),                        # w2 (bf16)
    ]

    # Scoped-VMEM budget: double-buffered operands + activation headroom.
    operands = (cos_hd, sin_hd, params["attn_norm_w"], wqkv, wo,
                params["ffn_norm_w"], w13, w2)
    operand_bytes = sum(int(a.size) * a.dtype.itemsize for a in operands)
    block_bytes = Bb * S * D * x.dtype.itemsize
    vmem_limit = int(min(2 * (operand_bytes + 2 * block_bytes) + (16 << 20),
                         100 << 20))

    return pl.pallas_call(
        kernel,
        out_shape=jax.ShapeDtypeStruct((B, S, D), x.dtype),
        grid_spec=pltpu.PrefetchScalarGridSpec(
            num_scalar_prefetch=0,
            grid=(B // Bb,),
            in_specs=in_specs,
            out_specs=pl.BlockSpec((Bb, S, D), lambda b: (b, 0, 0)),
        ),
        compiler_params=pltpu.CompilerParams(
            dimension_semantics=("parallel",),             # v7x megacore over batch blocks
            vmem_limit_bytes=vmem_limit),
    )(x, cos_hd, sin_hd,
      params["attn_norm_w"], wqkv, wo,
      params["ffn_norm_w"], w13, w2)


# --------------------------------------------------------------------------- #
# Pure-JAX reference (mirrors the torch forward, full f32) for correctness.
# --------------------------------------------------------------------------- #
def ref_transformer_block(x, cos, sin, params, *, n_heads, head_dim, eps):
    hp = jax.lax.Precision.HIGHEST
    B, S, D = x.shape

    def rmsnorm(v, w):
        ms = jnp.mean(v * v, axis=-1, keepdims=True)
        return v * jax.lax.rsqrt(ms + eps) * w

    def rope(t):  # t: (B, S, nh, hd), interleaved pairs
        tr, ti = t[..., 0::2], t[..., 1::2]
        c = cos[None, :, None, :]
        s = sin[None, :, None, :]
        o_r = tr * c - ti * s
        o_i = tr * s + ti * c
        return jnp.stack([o_r, o_i], axis=-1).reshape(t.shape)

    xn = rmsnorm(x, params["attn_norm_w"][0])
    q = jnp.einsum("bsd,de->bse", xn, params["wq_t"], precision=hp).reshape(B, S, n_heads, head_dim)
    k = jnp.einsum("bsd,de->bse", xn, params["wk_t"], precision=hp).reshape(B, S, n_heads, head_dim)
    v = jnp.einsum("bsd,de->bse", xn, params["wv_t"], precision=hp).reshape(B, S, n_heads, head_dim)
    q, k = rope(q), rope(k)
    q, k, v = (t.transpose(0, 2, 1, 3) for t in (q, k, v))  # (B, nh, S, hd)

    scores = jnp.einsum("bhqd,bhkd->bhqk", q, k, precision=hp) / math.sqrt(head_dim)
    mask = jnp.where(jnp.arange(S)[None, :] > jnp.arange(S)[:, None], -jnp.inf, 0.0)
    probs = jax.nn.softmax(scores + mask[None, None], axis=-1)
    out = jnp.einsum("bhqk,bhkd->bhqd", probs, v, precision=hp)
    out = out.transpose(0, 2, 1, 3).reshape(B, S, D)
    attn = jnp.einsum("bsd,de->bse", out, params["wo_t"], precision=hp)
    h = x + attn

    hn = rmsnorm(h, params["ffn_norm_w"][0])
    g = jnp.einsum("bsd,dh->bsh", hn, params["w1_t"], precision=hp)
    u = jnp.einsum("bsd,dh->bsh", hn, params["w3_t"], precision=hp)
    ffn = jnp.einsum("bsh,hd->bsd", (g * jax.nn.sigmoid(g)) * u, params["w2_t"], precision=hp)
    return h + ffn


# --------------------------------------------------------------------------- #
if __name__ == "__main__":
    # Small, module-consistent shapes: dim=128, n_heads=8, head_dim=16,
    # multiple_of=256 -> hidden_dim=512, seq=16, batch=2, eps=1e-6.
    B, S, D = 2, 16, 128
    n_heads = 8
    head_dim = D // n_heads
    multiple_of = 256
    hidden = multiple_of * ((int(2 * (4 * D) / 3) + multiple_of - 1) // multiple_of)  # 512
    eps = 1e-6

    key = jax.random.PRNGKey(0)
    keys = jax.random.split(key, 9)
    init = lambda k, shape: (0.02 * jax.random.normal(k, shape)).astype(jnp.float32)

    params = {
        "attn_norm_w": jnp.ones((1, D), jnp.float32),
        "ffn_norm_w": jnp.ones((1, D), jnp.float32),
        "wq_t": init(keys[0], (D, D)),
        "wk_t": init(keys[1], (D, D)),
        "wv_t": init(keys[2], (D, D)),
        "wo_t": init(keys[3], (D, D)),
        "w1_t": init(keys[4], (D, hidden)),
        "w3_t": init(keys[5], (D, hidden)),
        "w2_t": init(keys[6], (hidden, D)),
    }

    x = jax.random.normal(keys[7], (B, S, D), jnp.float32)

    # RoPE tables: base cos/sin of shape (S, head_dim//2), as in llama2.
    inv_freq = 1.0 / (10000.0 ** (jnp.arange(0, head_dim, 2, dtype=jnp.float32) / head_dim))
    t = jnp.arange(S, dtype=jnp.float32)
    angles = jnp.outer(t, inv_freq)                     # (S, head_dim//2)
    cos_base = jnp.cos(angles)
    sin_base = jnp.sin(angles)

    # Kernel layout: (S, head_dim) interleaved-pair tables; sin sign folded in
    # (-sin on even lanes, +sin on odd lanes).  Expanded to (S, D) in-kernel.
    sign = jnp.where(jnp.arange(head_dim) % 2 == 0, -1.0, 1.0).astype(jnp.float32)
    cos_hd = jnp.repeat(cos_base, 2, axis=-1)                       # (S, head_dim)
    sin_hd = jnp.repeat(sin_base, 2, axis=-1) * sign[None, :]       # (S, head_dim)

    out = transformer_block(
        x, cos_hd, sin_hd, params,
        n_heads=n_heads, head_dim=head_dim, eps=eps)
    out = jax.block_until_ready(out)

    ref = ref_transformer_block(
        x, cos_base, sin_base, params,
        n_heads=n_heads, head_dim=head_dim, eps=eps)
    ref = jax.block_until_ready(ref)

    assert out.shape == (B, S, D) and out.dtype == jnp.float32
    # bf16 MXU operands (f32 accumulation) + approx softmax reciprocal.
    assert jnp.allclose(out, ref, atol=2e-2, rtol=2e-2), (
        f"max abs diff {float(jnp.max(jnp.abs(out - ref)))}")

    print("KERNEL_OK")
</pallas_src>

<mosaic_0001>
module attributes {stable_mosaic.version = 11 : i64} {
  func.func @transformer_block_kernel(%arg0: i32, %arg1: memref<2x16x128xf32, #tpu.memory_space<vmem>>, %arg2: memref<16x16xf32, #tpu.memory_space<vmem>>, %arg3: memref<16x16xf32, #tpu.memory_space<vmem>>, %arg4: memref<1x128xf32, #tpu.memory_space<vmem>>, %arg5: memref<128x384xbf16, #tpu.memory_space<vmem>>, %arg6: memref<128x128xbf16, #tpu.memory_space<vmem>>, %arg7: memref<1x128xf32, #tpu.memory_space<vmem>>, %arg8: memref<128x1024xbf16, #tpu.memory_space<vmem>>, %arg9: memref<512x128xbf16, #tpu.memory_space<vmem>>, %arg10: memref<2x16x128xf32, #tpu.memory_space<vmem>>) attributes {dimension_semantics = [#tpu.dimension_semantics<parallel>], iteration_bounds = array<i64: 1>, scalar_prefetch = 0 : i64, scratch_operands = 0 : i64, tpu.core_type = #tpu.core_type<tc>, window_params = [{transform_indices = @transform_0, window_bounds = array<i64: 2, 16, 128>}, {pipeline_mode = #tpu.pipeline_mode<synchronous>, transform_indices = @transform_1, window_bounds = array<i64: 16, 16>}, {pipeline_mode = #tpu.pipeline_mode<synchronous>, transform_indices = @transform_2, window_bounds = array<i64: 16, 16>}, {pipeline_mode = #tpu.pipeline_mode<synchronous>, transform_indices = @transform_3, window_bounds = array<i64: 1, 128>}, {pipeline_mode = #tpu.pipeline_mode<synchronous>, transform_indices = @transform_4, window_bounds = array<i64: 128, 384>}, {pipeline_mode = #tpu.pipeline_mode<synchronous>, transform_indices = @transform_5, window_bounds = array<i64: 128, 128>}, {pipeline_mode = #tpu.pipeline_mode<synchronous>, transform_indices = @transform_6, window_bounds = array<i64: 1, 128>}, {pipeline_mode = #tpu.pipeline_mode<synchronous>, transform_indices = @transform_7, window_bounds = array<i64: 128, 1024>}, {pipeline_mode = #tpu.pipeline_mode<synchronous>, transform_indices = @transform_8, window_bounds = array<i64: 512, 128>}, {transform_indices = @transform_9, window_bounds = array<i64: 2, 16, 128>}]} {
    %c0 = arith.constant 0 : index
    %c0_0 = arith.constant 0 : index
    %c0_1 = arith.constant 0 : index
    %0 = vector.load %arg1[%c0, %c0_0, %c0_1] : memref<2x16x128xf32, #tpu.memory_space<vmem>>, vector<2x16x128xf32>
    %1 = vector.shape_cast %0 : vector<2x16x128xf32> to vector<32x128xf32>
    %c0_2 = arith.constant 0 : index
    %c0_3 = arith.constant 0 : index
    %2 = vector.load %arg4[%c0_2, %c0_3] : memref<1x128xf32, #tpu.memory_space<vmem>>, vector<1x128xf32>
    %3 = arith.mulf %1, %1 : vector<32x128xf32>
    %cst = arith.constant dense<0.000000e+00> : vector<32xf32>
    %4 = vector.multi_reduction <add>, %3, %cst [1] : vector<32x128xf32> to vector<32xf32>
    %5 = vector.shape_cast %4 : vector<32xf32> to vector<32x1xf32>
    %cst_4 = arith.constant 1.280000e+02 : f32
    %6 = vector.broadcast %cst_4 : f32 to vector<32x1xf32>
    %7 = arith.divf %5, %6 : vector<32x1xf32>
    %cst_5 = arith.constant 9.99999997E-7 : f32
    %8 = vector.broadcast %cst_5 : f32 to vector<32x1xf32>
    %9 = arith.addf %7, %8 : vector<32x1xf32>
    %10 = math.rsqrt %9 : vector<32x1xf32>
    %11 = vector.broadcast %10 : vector<32x1xf32> to vector<32x128xf32>
    %12 = arith.mulf %1, %11 : vector<32x128xf32>
    %13 = vector.broadcast %2 : vector<1x128xf32> to vector<32x128xf32>
    %14 = arith.mulf %12, %13 : vector<32x128xf32>
    %15 = arith.truncf %14 : vector<32x128xf32> to vector<32x128xbf16>
    %c0_6 = arith.constant 0 : index
    %c0_7 = arith.constant 0 : index
    %16 = vector.load %arg5[%c0_6, %c0_7] : memref<128x384xbf16, #tpu.memory_space<vmem>>, vector<128x384xbf16>
    %cst_8 = arith.constant dense<0.000000e+00> : vector<32x384xf32>
    %17 = tpu.matmul %15, %16, %cst_8 {dimension_numbers = #tpu.dot_dimension_numbers<[1], [0], [0], [1], [0, 0, 1, 1], [], []>} : vector<32x128xbf16>, vector<128x384xbf16>, vector<32x384xf32> -> vector<32x384xf32>
    %18 = vector.extract_strided_slice %17 {offsets = [0, 0], sizes = [32, 128], strides = [1, 1]} : vector<32x384xf32> to vector<32x128xf32>
    %19 = vector.extract_strided_slice %17 {offsets = [0, 128], sizes = [32, 128], strides = [1, 1]} : vector<32x384xf32> to vector<32x128xf32>
    %20 = vector.extract_strided_slice %17 {offsets = [0, 256], sizes = [32, 128], strides = [1, 1]} : vector<32x384xf32> to vector<32x128xf32>
    %c0_9 = arith.constant 0 : index
    %c0_10 = arith.constant 0 : index
    %21 = vector.load %arg2[%c0_9, %c0_10] : memref<16x16xf32, #tpu.memory_space<vmem>>, vector<16x16xf32>
    %22 = tpu.concatenate %21, %21, %21, %21, %21, %21, %21, %21 in 1 : vector<16x16xf32>, vector<16x16xf32>, vector<16x16xf32>, vector<16x16xf32>, vector<16x16xf32>, vector<16x16xf32>, vector<16x16xf32>, vector<16x16xf32> -> vector<16x128xf32>
    %c0_11 = arith.constant 0 : index
    %c0_12 = arith.constant 0 : index
    %23 = vector.load %arg3[%c0_11, %c0_12] : memref<16x16xf32, #tpu.memory_space<vmem>>, vector<16x16xf32>
    %24 = tpu.concatenate %23, %23, %23, %23, %23, %23, %23, %23 in 1 : vector<16x16xf32>, vector<16x16xf32>, vector<16x16xf32>, vector<16x16xf32>, vector<16x16xf32>, vector<16x16xf32>, vector<16x16xf32>, vector<16x16xf32> -> vector<16x128xf32>
    %25 = tpu.concatenate %22, %22 in 0 : vector<16x128xf32>, vector<16x128xf32> -> vector<32x128xf32>
    %26 = tpu.concatenate %24, %24 in 0 : vector<16x128xf32>, vector<16x128xf32> -> vector<32x128xf32>
    %27 = tpu.iota {dimensions = array<i32: 1>} : vector<32x128xi32>
    %c2_i32 = arith.constant 2 : i32
    %c0_i32 = arith.constant 0 : i32
    %28 = arith.cmpi eq, %c2_i32, %c0_i32 : i32
    %c1_i32 = arith.constant 1 : i32
    %29 = arith.select %28, %c1_i32, %c2_i32 : i32
    %30 = vector.broadcast %29 : i32 to vector<32x128xi32>
    %31 = arith.remsi %27, %30 : vector<32x128xi32>
    %c0_i32_13 = arith.constant 0 : i32
    %32 = vector.broadcast %c0_i32_13 : i32 to vector<32x128xi32>
    %33 = arith.cmpi ne, %31, %32 : vector<32x128xi32>
    %c0_i32_14 = arith.constant 0 : i32
    %34 = vector.broadcast %c0_i32_14 : i32 to vector<32x128xi32>
    %35 = arith.cmpi slt, %31, %34 : vector<32x128xi32>
    %c0_i32_15 = arith.constant 0 : i32
    %36 = arith.cmpi slt, %29, %c0_i32_15 : i32
    %37 = vector.broadcast %36 : i1 to vector<32x128xi1>
    %38 = vector.broadcast %37 : vector<32x128xi1> to vector<32x128xi1>
    %39 = arith.xori %35, %38 : vector<32x128xi1>
    %40 = arith.andi %39, %33 : vector<32x128xi1>
    %41 = vector.broadcast %29 : i32 to vector<32x128xi32>
    %42 = arith.addi %31, %41 : vector<32x128xi32>
    %43 = arith.select %40, %42, %31 : vector<32x128xi1>, vector<32x128xi32>
    %c0_i32_16 = arith.constant 0 : i32
    %44 = vector.broadcast %c0_i32_16 : i32 to vector<32x128xi32>
    %45 = arith.cmpi eq, %43, %44 : vector<32x128xi32>
    %c127_i32 = arith.constant 127 : i32
    %46 = tpu.dynamic_rotate %18 by %c127_i32 dim 1 : vector<32x128xf32>, i32 -> vector<32x128xf32>
    %c1_i32_17 = arith.constant 1 : i32
    %47 = tpu.dynamic_rotate %18 by %c1_i32_17 dim 1 : vector<32x128xf32>, i32 -> vector<32x128xf32>
    %48 = arith.mulf %18, %25 : vector<32x128xf32>
    %49 = arith.select %45, %46, %47 : vector<32x128xi1>, vector<32x128xf32>
    %50 = arith.mulf %49, %26 : vector<32x128xf32>
    %51 = arith.addf %48, %50 : vector<32x128xf32>
    %c127_i32_18 = arith.constant 127 : i32
    %52 = tpu.dynamic_rotate %19 by %c127_i32_18 dim 1 : vector<32x128xf32>, i32 -> vector<32x128xf32>
    %c1_i32_19 = arith.constant 1 : i32
    %53 = tpu.dynamic_rotate %19 by %c1_i32_19 dim 1 : vector<32x128xf32>, i32 -> vector<32x128xf32>
    %54 = arith.mulf %19, %25 : vector<32x128xf32>
    %55 = arith.select %45, %52, %53 : vector<32x128xi1>, vector<32x128xf32>
    %56 = arith.mulf %55, %26 : vector<32x128xf32>
    %57 = arith.addf %54, %56 : vector<32x128xf32>
    %58 = arith.truncf %51 : vector<32x128xf32> to vector<32x128xbf16>
    %59 = vector.extract_strided_slice %58 {offsets = [0, 0], sizes = [32, 16], strides = [1, 1]} : vector<32x128xbf16> to vector<32x16xbf16>
    %60 = vector.shape_cast %59 : vector<32x16xbf16> to vector<2x16x16xbf16>
    %61 = vector.extract_strided_slice %58 {offsets = [0, 16], sizes = [32, 16], strides = [1, 1]} : vector<32x128xbf16> to vector<32x16xbf16>
    %62 = vector.shape_cast %61 : vector<32x16xbf16> to vector<2x16x16xbf16>
    %63 = vector.extract_strided_slice %58 {offsets = [0, 32], sizes = [32, 16], strides = [1, 1]} : vector<32x128xbf16> to vector<32x16xbf16>
    %64 = vector.shape_cast %63 : vector<32x16xbf16> to vector<2x16x16xbf16>
    %65 = vector.extract_strided_slice %58 {offsets = [0, 48], sizes = [32, 16], strides = [1, 1]} : vector<32x128xbf16> to vector<32x16xbf16>
    %66 = vector.shape_cast %65 : vector<32x16xbf16> to vector<2x16x16xbf16>
    %67 = vector.extract_strided_slice %58 {offsets = [0, 64], sizes = [32, 16], strides = [1, 1]} : vector<32x128xbf16> to vector<32x16xbf16>
    %68 = vector.shape_cast %67 : vector<32x16xbf16> to vector<2x16x16xbf16>
    %69 = vector.extract_strided_slice %58 {offsets = [0, 80], sizes = [32, 16], strides = [1, 1]} : vector<32x128xbf16> to vector<32x16xbf16>
    %70 = vector.shape_cast %69 : vector<32x16xbf16> to vector<2x16x16xbf16>
    %71 = vector.extract_strided_slice %58 {offsets = [0, 96], sizes = [32, 16], strides = [1, 1]} : vector<32x128xbf16> to vector<32x16xbf16>
    %72 = vector.shape_cast %71 : vector<32x16xbf16> to vector<2x16x16xbf16>
    %73 = vector.extract_strided_slice %58 {offsets = [0, 112], sizes = [32, 16], strides = [1, 1]} : vector<32x128xbf16> to vector<32x16xbf16>
    %74 = vector.shape_cast %73 : vector<32x16xbf16> to vector<2x16x16xbf16>
    %75 = vector.shape_cast %60 : vector<2x16x16xbf16> to vector<1x2x16x16xbf16>
    %76 = vector.shape_cast %62 : vector<2x16x16xbf16> to vector<1x2x16x16xbf16>
    %77 = vector.shape_cast %64 : vector<2x16x16xbf16> to vector<1x2x16x16xbf16>
    %78 = vector.shape_cast %66 : vector<2x16x16xbf16> to vector<1x2x16x16xbf16>
    %79 = vector.shape_cast %68 : vector<2x16x16xbf16> to vector<1x2x16x16xbf16>
    %80 = vector.shape_cast %70 : vector<2x16x16xbf16> to vector<1x2x16x16xbf16>
    %81 = vector.shape_cast %72 : vector<2x16x16xbf16> to vector<1x2x16x16xbf16>
    %82 = vector.shape_cast %74 : vector<2x16x16xbf16> to vector<1x2x16x16xbf16>
    %83 = tpu.concatenate %75, %76, %77, %78, %79, %80, %81, %82 in 0 : vector<1x2x16x16xbf16>, vector<1x2x16x16xbf16>, vector<1x2x16x16xbf16>, vector<1x2x16x16xbf16>, vector<1x2x16x16xbf16>, vector<1x2x16x16xbf16>, vector<1x2x16x16xbf16>, vector<1x2x16x16xbf16> -> vector<8x2x16x16xbf16>
    %84 = vector.shape_cast %83 : vector<8x2x16x16xbf16> to vector<16x16x16xbf16>
    %85 = arith.truncf %57 : vector<32x128xf32> to vector<32x128xbf16>
    %86 = vector.extract_strided_slice %85 {offsets = [0, 0], sizes = [32, 16], strides = [1, 1]} : vector<32x128xbf16> to vector<32x16xbf16>
    %87 = vector.shape_cast %86 : vector<32x16xbf16> to vector<2x16x16xbf16>
    %88 = vector.extract_strided_slice %85 {offsets = [0, 16], sizes = [32, 16], strides = [1, 1]} : vector<32x128xbf16> to vector<32x16xbf16>
    %89 = vector.shape_cast %88 : vector<32x16xbf16> to vector<2x16x16xbf16>
    %90 = vector.extract_strided_slice %85 {offsets = [0, 32], sizes = [32, 16], strides = [1, 1]} : vector<32x128xbf16> to vector<32x16xbf16>
    %91 = vector.shape_cast %90 : vector<32x16xbf16> to vector<2x16x16xbf16>
    %92 = vector.extract_strided_slice %85 {offsets = [0, 48], sizes = [32, 16], strides = [1, 1]} : vector<32x128xbf16> to vector<32x16xbf16>
    %93 = vector.shape_cast %92 : vector<32x16xbf16> to vector<2x16x16xbf16>
    %94 = vector.extract_strided_slice %85 {offsets = [0, 64], sizes = [32, 16], strides = [1, 1]} : vector<32x128xbf16> to vector<32x16xbf16>
    %95 = vector.shape_cast %94 : vector<32x16xbf16> to vector<2x16x16xbf16>
    %96 = vector.extract_strided_slice %85 {offsets = [0, 80], sizes = [32, 16], strides = [1, 1]} : vector<32x128xbf16> to vector<32x16xbf16>
    %97 = vector.shape_cast %96 : vector<32x16xbf16> to vector<2x16x16xbf16>
    %98 = vector.extract_strided_slice %85 {offsets = [0, 96], sizes = [32, 16], strides = [1, 1]} : vector<32x128xbf16> to vector<32x16xbf16>
    %99 = vector.shape_cast %98 : vector<32x16xbf16> to vector<2x16x16xbf16>
    %100 = vector.extract_strided_slice %85 {offsets = [0, 112], sizes = [32, 16], strides = [1, 1]} : vector<32x128xbf16> to vector<32x16xbf16>
    %101 = vector.shape_cast %100 : vector<32x16xbf16> to vector<2x16x16xbf16>
    %102 = vector.shape_cast %87 : vector<2x16x16xbf16> to vector<1x2x16x16xbf16>
    %103 = vector.shape_cast %89 : vector<2x16x16xbf16> to vector<1x2x16x16xbf16>
    %104 = vector.shape_cast %91 : vector<2x16x16xbf16> to vector<1x2x16x16xbf16>
    %105 = vector.shape_cast %93 : vector<2x16x16xbf16> to vector<1x2x16x16xbf16>
    %106 = vector.shape_cast %95 : vector<2x16x16xbf16> to vector<1x2x16x16xbf16>
    %107 = vector.shape_cast %97 : vector<2x16x16xbf16> to vector<1x2x16x16xbf16>
    %108 = vector.shape_cast %99 : vector<2x16x16xbf16> to vector<1x2x16x16xbf16>
    %109 = vector.shape_cast %101 : vector<2x16x16xbf16> to vector<1x2x16x16xbf16>
    %110 = tpu.concatenate %102, %103, %104, %105, %106, %107, %108, %109 in 0 : vector<1x2x16x16xbf16>, vector<1x2x16x16xbf16>, vector<1x2x16x16xbf16>, vector<1x2x16x16xbf16>, vector<1x2x16x16xbf16>, vector<1x2x16x16xbf16>, vector<1x2x16x16xbf16>, vector<1x2x16x16xbf16> -> vector<8x2x16x16xbf16>
    %111 = vector.shape_cast %110 : vector<8x2x16x16xbf16> to vector<16x16x16xbf16>
    %112 = arith.truncf %20 : vector<32x128xf32> to vector<32x128xbf16>
    %113 = vector.extract_strided_slice %112 {offsets = [0, 0], sizes = [32, 16], strides = [1, 1]} : vector<32x128xbf16> to vector<32x16xbf16>
    %114 = vector.shape_cast %113 : vector<32x16xbf16> to vector<2x16x16xbf16>
    %115 = vector.extract_strided_slice %112 {offsets = [0, 16], sizes = [32, 16], strides = [1, 1]} : vector<32x128xbf16> to vector<32x16xbf16>
    %116 = vector.shape_cast %115 : vector<32x16xbf16> to vector<2x16x16xbf16>
    %117 = vector.extract_strided_slice %112 {offsets = [0, 32], sizes = [32, 16], strides = [1, 1]} : vector<32x128xbf16> to vector<32x16xbf16>
    %118 = vector.shape_cast %117 : vector<32x16xbf16> to vector<2x16x16xbf16>
    %119 = vector.extract_strided_slice %112 {offsets = [0, 48], sizes = [32, 16], strides = [1, 1]} : vector<32x128xbf16> to vector<32x16xbf16>
    %120 = vector.shape_cast %119 : vector<32x16xbf16> to vector<2x16x16xbf16>
    %121 = vector.extract_strided_slice %112 {offsets = [0, 64], sizes = [32, 16], strides = [1, 1]} : vector<32x128xbf16> to vector<32x16xbf16>
    %122 = vector.shape_cast %121 : vector<32x16xbf16> to vector<2x16x16xbf16>
    %123 = vector.extract_strided_slice %112 {offsets = [0, 80], sizes = [32, 16], strides = [1, 1]} : vector<32x128xbf16> to vector<32x16xbf16>
    %124 = vector.shape_cast %123 : vector<32x16xbf16> to vector<2x16x16xbf16>
    %125 = vector.extract_strided_slice %112 {offsets = [0, 96], sizes = [32, 16], strides = [1, 1]} : vector<32x128xbf16> to vector<32x16xbf16>
    %126 = vector.shape_cast %125 : vector<32x16xbf16> to vector<2x16x16xbf16>
    %127 = vector.extract_strided_slice %112 {offsets = [0, 112], sizes = [32, 16], strides = [1, 1]} : vector<32x128xbf16> to vector<32x16xbf16>
    %128 = vector.shape_cast %127 : vector<32x16xbf16> to vector<2x16x16xbf16>
    %129 = vector.shape_cast %114 : vector<2x16x16xbf16> to vector<1x2x16x16xbf16>
    %130 = vector.shape_cast %116 : vector<2x16x16xbf16> to vector<1x2x16x16xbf16>
    %131 = vector.shape_cast %118 : vector<2x16x16xbf16> to vector<1x2x16x16xbf16>
    %132 = vector.shape_cast %120 : vector<2x16x16xbf16> to vector<1x2x16x16xbf16>
    %133 = vector.shape_cast %122 : vector<2x16x16xbf16> to vector<1x2x16x16xbf16>
    %134 = vector.shape_cast %124 : vector<2x16x16xbf16> to vector<1x2x16x16xbf16>
    %135 = vector.shape_cast %126 : vector<2x16x16xbf16> to vector<1x2x16x16xbf16>
    %136 = vector.shape_cast %128 : vector<2x16x16xbf16> to vector<1x2x16x16xbf16>
    %137 = tpu.concatenate %129, %130, %131, %132, %133, %134, %135, %136 in 0 : vector<1x2x16x16xbf16>, vector<1x2x16x16xbf16>, vector<1x2x16x16xbf16>, vector<1x2x16x16xbf16>, vector<1x2x16x16xbf16>, vector<1x2x16x16xbf16>, vector<1x2x16x16xbf16>, vector<1x2x16x16xbf16> -> vector<8x2x16x16xbf16>
    %138 = vector.shape_cast %137 : vector<8x2x16x16xbf16> to vector<16x16x16xbf16>
    "tpu.trace_start"() <{level = 10 : i32, message = "bqd,bkd->bqk"}> : () -> ()
    %cst_20 = arith.constant dense<0.000000e+00> : vector<16x16x16xf32>
    %139 = tpu.matmul %84, %111, %cst_20 {dimension_numbers = #tpu.dot_dimension_numbers<[2], [2], [1], [1], [0, 0, 0, 1, 1, 1], [0], [0]>} : vector<16x16x16xbf16>, vector<16x16x16xbf16>, vector<16x16x16xf32> -> vector<16x16x16xf32>
    "tpu.trace_stop"() : () -> ()
    %cst_21 = arith.constant 2.500000e-01 : f32
    %140 = vector.broadcast %cst_21 : f32 to vector<16x16x16xf32>
    %141 = arith.mulf %139, %140 : vector<16x16x16xf32>
    %142 = tpu.iota {dimensions = array<i32: 0>} : vector<16x16xi32>
    %143 = tpu.iota {dimensions = array<i32: 1>} : vector<16x16xi32>
    %144 = arith.cmpi sgt, %143, %142 : vector<16x16xi32>
    %cst_22 = arith.constant 0xFF800000 : f32
    %cst_23 = arith.constant 0.000000e+00 : f32
    %145 = vector.broadcast %cst_22 : f32 to vector<16x16xf32>
    %146 = vector.broadcast %cst_23 : f32 to vector<16x16xf32>
    %147 = arith.select %144, %145, %146 : vector<16x16xi1>, vector<16x16xf32>
    %148 = vector.shape_cast %147 : vector<16x16xf32> to vector<1x16x16xf32>
    %149 = vector.broadcast %148 : vector<1x16x16xf32> to vector<16x16x16xf32>
    %150 = arith.addf %141, %149 : vector<16x16x16xf32>
    %cst_24 = arith.constant dense<0xFF800000> : vector<16x16xf32>
    %151 = vector.multi_reduction <maximumf>, %150, %cst_24 [2] : vector<16x16x16xf32> to vector<16x16xf32>
    %152 = vector.shape_cast %151 : vector<16x16xf32> to vector<16x16x1xf32>
    %153 = vector.broadcast %152 : vector<16x16x1xf32> to vector<16x16x16xf32>
    %154 = arith.subf %150, %153 : vector<16x16x16xf32>
    %155 = math.exp %154 : vector<16x16x16xf32>
    %cst_25 = arith.constant dense<0.000000e+00> : vector<16x16xf32>
    %156 = vector.multi_reduction <add>, %155, %cst_25 [2] : vector<16x16x16xf32> to vector<16x16xf32>
    %157 = vector.shape_cast %156 : vector<16x16xf32> to vector<16x16x1xf32>
    %158 = tpu.reciprocal %157 {approx = true} : vector<16x16x1xf32> -> vector<16x16x1xf32>
    %159 = vector.broadcast %158 : vector<16x16x1xf32> to vector<16x16x16xf32>
    %160 = arith.mulf %155, %159 : vector<16x16x16xf32>
    %161 = arith.truncf %160 : vector<16x16x16xf32> to vector<16x16x16xbf16>
    "tpu.trace_start"() <{level = 10 : i32, message = "bqk,bkd->bqd"}> : () -> ()
    %cst_26 = arith.constant dense<0.000000e+00> : vector<16x16x16xf32>
    %162 = tpu.matmul %161, %138, %cst_26 {dimension_numbers = #tpu.dot_dimension_numbers<[2], [1], [1], [2], [0, 0, 0, 1, 1, 2], [0], [0]>} : vector<16x16x16xbf16>, vector<16x16x16xbf16>, vector<16x16x16xf32> -> vector<16x16x16xf32>
    "tpu.trace_stop"() : () -> ()
    %163 = arith.truncf %162 : vector<16x16x16xf32> to vector<16x16x16xbf16>
    %164 = vector.shape_cast %163 : vector<16x16x16xbf16> to vector<8x2x16x16xbf16>
    %165 = vector.extract_strided_slice %164 {offsets = [0, 0, 0, 0], sizes = [1, 2, 16, 16], strides = [1, 1, 1, 1]} : vector<8x2x16x16xbf16> to vector<1x2x16x16xbf16>
    %166 = vector.shape_cast %165 : vector<1x2x16x16xbf16> to vector<2x16x16xbf16>
    %167 = vector.shape_cast %166 : vector<2x16x16xbf16> to vector<32x16xbf16>
    %168 = vector.extract_strided_slice %164 {offsets = [1, 0, 0, 0], sizes = [1, 2, 16, 16], strides = [1, 1, 1, 1]} : vector<8x2x16x16xbf16> to vector<1x2x16x16xbf16>
    %169 = vector.shape_cast %168 : vector<1x2x16x16xbf16> to vector<2x16x16xbf16>
    %170 = vector.shape_cast %169 : vector<2x16x16xbf16> to vector<32x16xbf16>
    %171 = vector.extract_strided_slice %164 {offsets = [2, 0, 0, 0], sizes = [1, 2, 16, 16], strides = [1, 1, 1, 1]} : vector<8x2x16x16xbf16> to vector<1x2x16x16xbf16>
    %172 = vector.shape_cast %171 : vector<1x2x16x16xbf16> to vector<2x16x16xbf16>
    %173 = vector.shape_cast %172 : vector<2x16x16xbf16> to vector<32x16xbf16>
    %174 = vector.extract_strided_slice %164 {offsets = [3, 0, 0, 0], sizes = [1, 2, 16, 16], strides = [1, 1, 1, 1]} : vector<8x2x16x16xbf16> to vector<1x2x16x16xbf16>
    %175 = vector.shape_cast %174 : vector<1x2x16x16xbf16> to vector<2x16x16xbf16>
    %176 = vector.shape_cast %175 : vector<2x16x16xbf16> to vector<32x16xbf16>
    %177 = vector.extract_strided_slice %164 {offsets = [4, 0, 0, 0], sizes = [1, 2, 16, 16], strides = [1, 1, 1, 1]} : vector<8x2x16x16xbf16> to vector<1x2x16x16xbf16>
    %178 = vector.shape_cast %177 : vector<1x2x16x16xbf16> to vector<2x16x16xbf16>
    %179 = vector.shape_cast %178 : vector<2x16x16xbf16> to vector<32x16xbf16>
    %180 = vector.extract_strided_slice %164 {offsets = [5, 0, 0, 0], sizes = [1, 2, 16, 16], strides = [1, 1, 1, 1]} : vector<8x2x16x16xbf16> to vector<1x2x16x16xbf16>
    %181 = vector.shape_cast %180 : vector<1x2x16x16xbf16> to vector<2x16x16xbf16>
    %182 = vector.shape_cast %181 : vector<2x16x16xbf16> to vector<32x16xbf16>
    %183 = vector.extract_strided_slice %164 {offsets = [6, 0, 0, 0], sizes = [1, 2, 16, 16], strides = [1, 1, 1, 1]} : vector<8x2x16x16xbf16> to vector<1x2x16x16xbf16>
    %184 = vector.shape_cast %183 : vector<1x2x16x16xbf16> to vector<2x16x16xbf16>
    %185 = vector.shape_cast %184 : vector<2x16x16xbf16> to vector<32x16xbf16>
    %186 = vector.extract_strided_slice %164 {offsets = [7, 0, 0, 0], sizes = [1, 2, 16, 16], strides = [1, 1, 1, 1]} : vector<8x2x16x16xbf16> to vector<1x2x16x16xbf16>
    %187 = vector.shape_cast %186 : vector<1x2x16x16xbf16> to vector<2x16x16xbf16>
    %188 = vector.shape_cast %187 : vector<2x16x16xbf16> to vector<32x16xbf16>
    %189 = tpu.concatenate %167, %170, %173, %176, %179, %182, %185, %188 in 1 : vector<32x16xbf16>, vector<32x16xbf16>, vector<32x16xbf16>, vector<32x16xbf16>, vector<32x16xbf16>, vector<32x16xbf16>, vector<32x16xbf16>, vector<32x16xbf16> -> vector<32x128xbf16>
    %c0_27 = arith.constant 0 : index
    %c0_28 = arith.constant 0 : index
    %190 = vector.load %arg6[%c0_27, %c0_28] : memref<128x128xbf16, #tpu.memory_space<vmem>>, vector<128x128xbf16>
    %cst_29 = arith.constant dense<0.000000e+00> : vector<32x128xf32>
    %191 = tpu.matmul %189, %190, %cst_29 {dimension_numbers = #tpu.dot_dimension_numbers<[1], [0], [0], [1], [0, 0, 1, 1], [], []>} : vector<32x128xbf16>, vector<128x128xbf16>, vector<32x128xf32> -> vector<32x128xf32>
    %192 = arith.addf %1, %191 : vector<32x128xf32>
    %c0_30 = arith.constant 0 : index
    %c0_31 = arith.constant 0 : index
    %193 = vector.load %arg7[%c0_30, %c0_31] : memref<1x128xf32, #tpu.memory_space<vmem>>, vector<1x128xf32>
    %194 = arith.mulf %192, %192 : vector<32x128xf32>
    %cst_32 = arith.constant dense<0.000000e+00> : vector<32xf32>
    %195 = vector.multi_reduction <add>, %194, %cst_32 [1] : vector<32x128xf32> to vector<32xf32>
    %196 = vector.shape_cast %195 : vector<32xf32> to vector<32x1xf32>
    %cst_33 = arith.constant 1.280000e+02 : f32
    %197 = vector.broadcast %cst_33 : f32 to vector<32x1xf32>
    %198 = arith.divf %196, %197 : vector<32x1xf32>
    %cst_34 = arith.constant 9.99999997E-7 : f32
    %199 = vector.broadcast %cst_34 : f32 to vector<32x1xf32>
    %200 = arith.addf %198, %199 : vector<32x1xf32>
    %201 = math.rsqrt %200 : vector<32x1xf32>
    %202 = vector.broadcast %201 : vector<32x1xf32> to vector<32x128xf32>
    %203 = arith.mulf %192, %202 : vector<32x128xf32>
    %204 = vector.broadcast %193 : vector<1x128xf32> to vector<32x128xf32>
    %205 = arith.mulf %203, %204 : vector<32x128xf32>
    %206 = arith.truncf %205 : vector<32x128xf32> to vector<32x128xbf16>
    %c0_35 = arith.constant 0 : index
    %c0_36 = arith.constant 0 : index
    %207 = vector.load %arg8[%c0_35, %c0_36] : memref<128x1024xbf16, #tpu.memory_space<vmem>>, vector<128x1024xbf16>
    %cst_37 = arith.constant dense<0.000000e+00> : vector<32x1024xf32>
    %208 = tpu.matmul %206, %207, %cst_37 {dimension_numbers = #tpu.dot_dimension_numbers<[1], [0], [0], [1], [0, 0, 1, 1], [], []>} : vector<32x128xbf16>, vector<128x1024xbf16>, vector<32x1024xf32> -> vector<32x1024xf32>
    %209 = vector.extract_strided_slice %208 {offsets = [0, 0], sizes = [32, 512], strides = [1, 1]} : vector<32x1024xf32> to vector<32x512xf32>
    %210 = vector.extract_strided_slice %208 {offsets = [0, 512], sizes = [32, 512], strides = [1, 1]} : vector<32x1024xf32> to vector<32x512xf32>
    %211 = arith.negf %209 : vector<32x512xf32>
    %212 = math.exp %211 : vector<32x512xf32>
    %cst_38 = arith.constant 1.000000e+00 : f32
    %213 = vector.broadcast %cst_38 : f32 to vector<32x512xf32>
    %214 = arith.addf %213, %212 : vector<32x512xf32>
    %215 = arith.divf %213, %214 : vector<32x512xf32>
    %216 = arith.mulf %209, %215 : vector<32x512xf32>
    %217 = arith.mulf %216, %210 : vector<32x512xf32>
    %218 = arith.truncf %217 : vector<32x512xf32> to vector<32x512xbf16>
    %c0_39 = arith.constant 0 : index
    %c0_40 = arith.constant 0 : index
    %219 = vector.load %arg9[%c0_39, %c0_40] : memref<512x128xbf16, #tpu.memory_space<vmem>>, vector<512x128xbf16>
    %cst_41 = arith.constant dense<0.000000e+00> : vector<32x128xf32>
    %220 = tpu.matmul %218, %219, %cst_41 {dimension_numbers = #tpu.dot_dimension_numbers<[1], [0], [0], [1], [0, 0, 1, 1], [], []>} : vector<32x512xbf16>, vector<512x128xbf16>, vector<32x128xf32> -> vector<32x128xf32>
    %221 = arith.addf %192, %220 : vector<32x128xf32>
    %222 = vector.shape_cast %221 : vector<32x128xf32> to vector<2x16x128xf32>
    %c0_42 = arith.constant 0 : index
    %c0_43 = arith.constant 0 : index
    %c0_44 = arith.constant 0 : index
    %223 = vector.load %arg10[%c0_42, %c0_43, %c0_44] : memref<2x16x128xf32, #tpu.memory_space<vmem>>, vector<2x16x128xf32>
    tpu.vector_store %arg10[%c0_42, %c0_43, %c0_44], %222 {strides = array<i32>} : memref<2x16x128xf32, #tpu.memory_space<vmem>>, vector<2x16x128xf32>,
    return
  }
  func.func @transform_0(%arg0: i32) -> (i32, i32, i32) {
    %c0_i32 = arith.constant 0 : i32
    %c0_i32_0 = arith.constant 0 : i32
    %c0_i32_1 = arith.constant 0 : i32
    return %arg0, %c0_i32, %c0_i32_0 : i32, i32, i32
  }
  func.func @transform_1(%arg0: i32) -> (i32, i32) {
    %c0_i32 = arith.constant 0 : i32
    %c0_i32_0 = arith.constant 0 : i32
    %c0_i32_1 = arith.constant 0 : i32
    return %c0_i32, %c0_i32_0 : i32, i32
  }
  func.func @transform_2(%arg0: i32) -> (i32, i32) {
    %c0_i32 = arith.constant 0 : i32
    %c0_i32_0 = arith.constant 0 : i32
    %c0_i32_1 = arith.constant 0 : i32
    return %c0_i32, %c0_i32_0 : i32, i32
  }
  func.func @transform_3(%arg0: i32) -> (i32, i32) {
    %c0_i32 = arith.constant 0 : i32
    %c0_i32_0 = arith.constant 0 : i32
    %c0_i32_1 = arith.constant 0 : i32
    return %c0_i32, %c0_i32_0 : i32, i32
  }
  func.func @transform_4(%arg0: i32) -> (i32, i32) {
    %c0_i32 = arith.constant 0 : i32
    %c0_i32_0 = arith.constant 0 : i32
    %c0_i32_1 = arith.constant 0 : i32
    return %c0_i32, %c0_i32_0 : i32, i32
  }
  func.func @transform_5(%arg0: i32) -> (i32, i32) {
    %c0_i32 = arith.constant 0 : i32
    %c0_i32_0 = arith.constant 0 : i32
    %c0_i32_1 = arith.constant 0 : i32
    return %c0_i32, %c0_i32_0 : i32, i32
  }
  func.func @transform_6(%arg0: i32) -> (i32, i32) {
    %c0_i32 = arith.constant 0 : i32
    %c0_i32_0 = arith.constant 0 : i32
    %c0_i32_1 = arith.constant 0 : i32
    return %c0_i32, %c0_i32_0 : i32, i32
  }
  func.func @transform_7(%arg0: i32) -> (i32, i32) {
    %c0_i32 = arith.constant 0 : i32
    %c0_i32_0 = arith.constant 0 : i32
    %c0_i32_1 = arith.constant 0 : i32
    return %c0_i32, %c0_i32_0 : i32, i32
  }
  func.func @transform_8(%arg0: i32) -> (i32, i32) {
    %c0_i32 = arith.constant 0 : i32
    %c0_i32_0 = arith.constant 0 : i32
    %c0_i32_1 = arith.constant 0 : i32
    return %c0_i32, %c0_i32_0 : i32, i32
  }
  func.func @transform_9(%arg0: i32) -> (i32, i32, i32) {
    %c0_i32 = arith.constant 0 : i32
    %c0_i32_0 = arith.constant 0 : i32
    %c0_i32_1 = arith.constant 0 : i32
    return %arg0, %c0_i32, %c0_i32_0 : i32, i32, i32
  }
}

</mosaic_0001>

<llo_original>
// kernel: tpu_custom_call.1
$region0: #{tpu_custom_call.1}
  #allocation0 [shape = 'u32[]', space=smem, size = 0x4, offset = 0x4, fixed_abs, tag = 'smem constant byte address 0x4 - core index']
  #allocation1 [shape = 'u32[144,128]{1,0:T(1,128)}', space=vmem, size = 0x12000, scoped, tag = 'internal scratch']
  %s0 = inlined_call_operand.hbm [shape: f32[2,16,128], index: 0, kind: input, shape index: {}]
  %s1 = inlined_call_operand.hbm [shape: f32[16,16], index: 1, kind: input, shape index: {}]
  %s2 = inlined_call_operand.hbm [shape: f32[16,16], index: 2, kind: input, shape index: {}]
  %s3 = inlined_call_operand.vmem [shape: f32[1,128], index: 3, kind: input, shape index: {}]
  %s4 = inlined_call_operand.hbm [shape: bf16[128,384], index: 4, kind: input, shape index: {}]
  %s5 = inlined_call_operand.hbm [shape: bf16[128,128], index: 5, kind: input, shape index: {}]
  %s6 = inlined_call_operand.vmem [shape: f32[1,128], index: 6, kind: input, shape index: {}]
  %s7 = inlined_call_operand.hbm [shape: bf16[128,1024], index: 7, kind: input, shape index: {}]
  %s8 = inlined_call_operand.hbm [shape: bf16[512,128], index: 8, kind: input, shape index: {}]
  %s9 = inlined_call_operand.hbm [shape: f32[2,16,128], index: 9, kind: output, shape index: {}]
  %s10 = sld [smem:[#allocation0]]
  $region74: #{tpu_custom_call.1} parent=0
    _
  %s12 = ssub.s32 1, %s10
  %s13 = scalar_select 0, %s12, %s10
  $region1: #{tpu_custom_call.1} parent=0
    #allocation2 [shape = 'u8[16384]{0}', space=vmem, size = 0x4000, scoped, tag = 'input window, operand 0, single buffered']
    #allocation3 [shape = 's32[1]{0}', space=sflag, size = 0x4, scoped, tag = 'scoped memory for tpu_custom_call.1']
    #allocation4 [shape = 's32[1]{0}', space=sflag, size = 0x4, scoped, tag = 'scoped memory for tpu_custom_call.1']
    #allocation5 [shape = 'u8[8192]{0}', space=vmem, size = 0x2000, scoped, tag = 'input window, operand 1, single buffered']
    #allocation6 [shape = 's32[1]{0}', space=sflag, size = 0x4, scoped, tag = 'scoped memory for tpu_custom_call.1']
    #allocation7 [shape = 'u8[8192]{0}', space=vmem, size = 0x2000, scoped, tag = 'input window, operand 2, single buffered']
    #allocation8 [shape = 'u8[98304]{0}', space=vmem, size = 0x18000, scoped, tag = 'input window, operand 4, single buffered']
    #allocation9 [shape = 's32[1]{0}', space=sflag, size = 0x4, scoped, tag = 'scoped memory for tpu_custom_call.1']
    #allocation10 [shape = 'u8[32768]{0}', space=vmem, size = 0x8000, scoped, tag = 'input window, operand 5, single buffered']
    #allocation11 [shape = 'u8[262144]{0}', space=vmem, size = 0x40000, scoped, tag = 'input window, operand 7, single buffered']
    #allocation12 [shape = 's32[1]{0}', space=sflag, size = 0x4, scoped, tag = 'scoped memory for tpu_custom_call.1']
    #allocation13 [shape = 'u8[131072]{0}', space=vmem, size = 0x20000, scoped, tag = 'input window, operand 8, single buffered']
    #allocation14 [shape = 'u8[16384]{0}', space=vmem, size = 0x4000, scoped, tag = 'output window, operand 0, single buffered']
    %14 = vsyncpa [#allocation3], 0
    %15 = vsyncpa [#allocation6], 0
    %16 = vsyncpa [#allocation9], 0
    %17 = vsyncpa [#allocation12], 0
    %18 = vsyncpa [#allocation4], 0
    // Predicated region
    $region2: #{tpu_custom_call.1} parent=1 // pred_check
      _
    $region3: #{tpu_custom_call.1} parent=1 // pred_check_branch
      %20 = sbr.rel (0) target = $region5
    $region4: #{tpu_custom_call.1} parent=1 // pred_region
      %s22 = ssub.s32 512, 512
      %23 = vsyncadd [#allocation3], %s22
      %s24 = sshll.u32 [#allocation2], 4
      %s25 = int_to_ptr.vmem [resolvable:$true] %s24
      %30 = dma.hbm_to_vmem [thread:$0]  %s0, 512, %s25, [#allocation3], 128, 128, 8
    $region5: #{tpu_custom_call.1} parent=1 // pred_fallthru
      _
    // Predicated region
    $region6: #{tpu_custom_call.1} parent=1 // pred_check
      _
    $region7: #{tpu_custom_call.1} parent=1 // pred_check_branch
      %32 = sbr.rel (0) target = $region9
    $region8: #{tpu_custom_call.1} parent=1 // pred_region
      %s34 = ssub.s32 256, 256
      %35 = vsyncadd [#allocation6], %s34
      %s36 = sshll.u32 [#allocation5], 4
      %s37 = int_to_ptr.vmem [resolvable:$true] %s36
      %42 = dma.hbm_to_vmem [thread:$0]  %s1, 256, %s37, [#allocation6], 128, 128, 8
    $region9: #{tpu_custom_call.1} parent=1 // pred_fallthru
      _
    // Predicated region
    $region10: #{tpu_custom_call.1} parent=1 // pred_check
      _
    $region11: #{tpu_custom_call.1} parent=1 // pred_check_branch
      %44 = sbr.rel (0) target = $region13
    $region12: #{tpu_custom_call.1} parent=1 // pred_region
      %s46 = ssub.s32 256, 256
      %47 = vsyncadd [#allocation6], %s46
      %s48 = sshll.u32 [#allocation7], 4
      %s49 = int_to_ptr.vmem [resolvable:$true] %s48
      %54 = dma.hbm_to_vmem [thread:$0]  %s2, 256, %s49, [#allocation6], 128, 128, 8
    $region13: #{tpu_custom_call.1} parent=1 // pred_fallthru
      _
    // Predicated region
    $region14: #{tpu_custom_call.1} parent=1 // pred_check
      _
    $region15: #{tpu_custom_call.1} parent=1 // pred_check_branch
      %56 = sbr.rel (0) target = $region17
    $region16: #{tpu_custom_call.1} parent=1 // pred_region
      _
    $region17: #{tpu_custom_call.1} parent=1 // pred_fallthru
      _
    // Predicated region
    $region18: #{tpu_custom_call.1} parent=1 // pred_check
      _
    $region19: #{tpu_custom_call.1} parent=1 // pred_check_branch
      %58 = sbr.rel (0) target = $region21
    $region20: #{tpu_custom_call.1} parent=1 // pred_region
      %s60 = ssub.s32 3072, 3072
      %61 = vsyncadd [#allocation9], %s60
      %s62 = sshll.u32 [#allocation8], 4
      %s63 = int_to_ptr.vmem [resolvable:$true] %s62
      %68 = dma.hbm_to_vmem [thread:$0]  %s4, 3072, %s63, [#allocation9], 192, 192, 12
    $region21: #{tpu_custom_call.1} parent=1 // pred_fallthru
      _
    // Predicated region
    $region22: #{tpu_custom_call.1} parent=1 // pred_check
      _
    $region23: #{tpu_custom_call.1} parent=1 // pred_check_branch
      %70 = sbr.rel (0) target = $region25
    $region24: #{tpu_custom_call.1} parent=1 // pred_region
      %s72 = ssub.s32 1024, 1024
      %73 = vsyncadd [#allocation9], %s72
      %s74 = sshll.u32 [#allocation10], 4
      %s75 = int_to_ptr.vmem [resolvable:$true] %s74
      %80 = dma.hbm_to_vmem [thread:$0]  %s5, 1024, %s75, [#allocation9], 64, 64, 4
    $region25: #{tpu_custom_call.1} parent=1 // pred_fallthru
      _
    // Predicated region
    $region26: #{tpu_custom_call.1} parent=1 // pred_check
      _
    $region27: #{tpu_custom_call.1} parent=1 // pred_check_branch
      %82 = sbr.rel (0) target = $region29
    $region28: #{tpu_custom_call.1} parent=1 // pred_region
      _
    $region29: #{tpu_custom_call.1} parent=1 // pred_fallthru
      _
    // Predicated region
    $region30: #{tpu_custom_call.1} parent=1 // pred_check
      _
    $region31: #{tpu_custom_call.1} parent=1 // pred_check_branch
      %84 = sbr.rel (0) target = $region33
    $region32: #{tpu_custom_call.1} parent=1 // pred_region
      %s86 = ssub.s32 8192, 8192
      %87 = vsyncadd [#allocation12], %s86
      %s88 = sshll.u32 [#allocation11], 4
      %s89 = int_to_ptr.vmem [resolvable:$true] %s88
      %94 = dma.hbm_to_vmem [thread:$0]  %s7, 8192, %s89, [#allocation12], 512, 512, 32
    $region33: #{tpu_custom_call.1} parent=1 // pred_fallthru
      _
    // Predicated region
    $region34: #{tpu_custom_call.1} parent=1 // pred_check
      _
    $region35: #{tpu_custom_call.1} parent=1 // pred_check_branch
      %96 = sbr.rel (0) target = $region37
    $region36: #{tpu_custom_call.1} parent=1 // pred_region
      %s98 = ssub.s32 4096, 4096
      %99 = vsyncadd [#allocation12], %s98
      %s100 = sshll.u32 [#allocation13], 4
      %s101 = int_to_ptr.vmem [resolvable:$true] %s100
      %106 = dma.hbm_to_vmem [thread:$0]  %s8, 4096, %s101, [#allocation12], 64, 64, 4
    $region37: #{tpu_custom_call.1} parent=1 // pred_fallthru
      _
    // Predicated region
    $region38: #{tpu_custom_call.1} parent=1 // pred_check
      _
    $region39: #{tpu_custom_call.1} parent=1 // pred_check_branch
      %108 = sbr.rel (0) target = $region41
    $region40: #{tpu_custom_call.1} parent=1 // pred_region
      %109 = dma.done [#allocation3], 512
    $region41: #{tpu_custom_call.1} parent=1 // pred_fallthru
      _
    // Predicated region
    $region42: #{tpu_custom_call.1} parent=1 // pred_check
      _
    $region43: #{tpu_custom_call.1} parent=1 // pred_check_branch
      %111 = sbr.rel (0) target = $region45
    $region44: #{tpu_custom_call.1} parent=1 // pred_region
      %112 = dma.done [#allocation6], 256
    $region45: #{tpu_custom_call.1} parent=1 // pred_fallthru
      _
    // Predicated region
    $region46: #{tpu_custom_call.1} parent=1 // pred_check
      _
    $region47: #{tpu_custom_call.1} parent=1 // pred_check_branch
      %114 = sbr.rel (0) target = $region49
    $region48: #{tpu_custom_call.1} parent=1 // pred_region
      %115 = dma.done [#allocation6], 256
    $region49: #{tpu_custom_call.1} parent=1 // pred_fallthru
      _
    // Predicated region
    $region50: #{tpu_custom_call.1} parent=1 // pred_check
      _
    $region51: #{tpu_custom_call.1} parent=1 // pred_check_branch
      %117 = sbr.rel (0) target = $region53
    $region52: #{tpu_custom_call.1} parent=1 // pred_region
      %118 = dma.done [#allocation9], 3072
    $region53: #{tpu_custom_call.1} parent=1 // pred_fallthru
      _
    // Predicated region
    $region54: #{tpu_custom_call.1} parent=1 // pred_check
      _
    $region55: #{tpu_custom_call.1} parent=1 // pred_check_branch
      %120 = sbr.rel (0) target = $region57
    $region56: #{tpu_custom_call.1} parent=1 // pred_region
      %121 = dma.done [#allocation9], 1024
    $region57: #{tpu_custom_call.1} parent=1 // pred_fallthru
      _
    // Predicated region
    $region58: #{tpu_custom_call.1} parent=1 // pred_check
      _
    $region59: #{tpu_custom_call.1} parent=1 // pred_check_branch
      %123 = sbr.rel (0) target = $region61
    $region60: #{tpu_custom_call.1} parent=1 // pred_region
      %124 = dma.done [#allocation12], 8192
    $region61: #{tpu_custom_call.1} parent=1 // pred_fallthru
      _
    // Predicated region
    $region62: #{tpu_custom_call.1} parent=1 // pred_check
      _
    $region63: #{tpu_custom_call.1} parent=1 // pred_check_branch
      %126 = sbr.rel (0) target = $region65
    $region64: #{tpu_custom_call.1} parent=1 // pred_region
      %127 = dma.done [#allocation12], 4096
    $region65: #{tpu_custom_call.1} parent=1 // pred_fallthru
      _
    %v129 = vld [vmem:[#allocation2] sm:$0xff]
    %v130 = vld [vmem:[#allocation2 + $0x8] sm:$0xff]
    %v131 = vld [vmem:[#allocation2 + $0x10] sm:$0xff]
    %v132 = vld [vmem:[#allocation2 + $0x18] sm:$0xff]
    %v133 = vld [vmem:[%s3] sm:$0x1]
    %v134 = vmul.f32 %v129, %v129
    %v135 = vmul.f32 %v130, %v130
    %v136 = vmul.f32 %v131, %v131
    %v137 = vmul.f32 %v132, %v132
    %138 = vadd.xlane.f32.xlu0 %v134
    %v139 = vpop.xlane.xlu0 %138
    %140 = vadd.xlane.f32.xlu0 %v135
    %v141 = vpop.xlane.xlu0 %140
    %142 = vadd.xlane.f32.xlu0 %v136
    %v143 = vpop.xlane.xlu0 %142
    %144 = vadd.xlane.f32.xlu0 %v137
    %v145 = vpop.xlane.xlu0 %144
    %v146 = vrcp.pop 128.0
    %v147 = vmul.f32 %v139, %v146
    %v148 = vmul.f32 %v141, %v146
    %v149 = vmul.f32 %v143, %v146
    %v150 = vmul.f32 %v145, %v146
    %v151 = vadd.f32 %v147, 1e-06
    %v152 = vadd.f32 %v148, 1e-06
    %v153 = vadd.f32 %v149, 1e-06
    %v154 = vadd.f32 %v150, 1e-06
    %v155 = vrsqrt.pop %v151
    %v156 = vrsqrt.pop %v152
    %v157 = vrsqrt.pop %v153
    %v158 = vrsqrt.pop %v154
    %v159 = vmul.f32 %v129, %v155
    %v160 = vmul.f32 %v130, %v156
    %v161 = vmul.f32 %v131, %v157
    %v162 = vmul.f32 %v132, %v158
    %v164 = vlaneseq
    %v165 = vshrl.u32 %v164, 7
    %v166 = vsub.s32 0, %v165
    %v167 = vrot.slane %v133, %v166
    %v169 = vmul.f32 %v159, %v167
    %v170 = vmul.f32 %v160, %v167
    %v171 = vmul.f32 %v161, %v167
    %v172 = vmul.f32 %v162, %v167
    %v173 = vpack.c.bf16 %v170, %v169
    %v174 = vpack.c.bf16 %v172, %v171
    %v175 = vld [vmem:[#allocation8] sm:$0xff]
    %v176 = vld [vmem:[#allocation8 + $0x8] sm:$0xf]
    %v177 = vld [vmem:[#allocation8 + $0xc] sm:$0xff]
    %v178 = vld [vmem:[#allocation8 + $0x14] sm:$0xf]
    %v179 = vld [vmem:[#allocation8 + $0x18] sm:$0xff]
    %v180 = vld [vmem:[#allocation8 + $0x20] sm:$0xf]
    %v181 = vld [vmem:[#allocation8 + $0x24] sm:$0xff]
    %v182 = vld [vmem:[#allocation8 + $0x2c] sm:$0xf]
    %v183 = vld [vmem:[#allocation8 + $0x30] sm:$0xff]
    %v184 = vld [vmem:[#allocation8 + $0x38] sm:$0xf]
    %v185 = vld [vmem:[#allocation8 + $0x3c] sm:$0xff]
    %v186 = vld [vmem:[#allocation8 + $0x44] sm:$0xf]
    %v187 = vld [vmem:[#allocation8 + $0x48] sm:$0xff]
    %v188 = vld [vmem:[#allocation8 + $0x50] sm:$0xf]
    %v189 = vld [vmem:[#allocation8 + $0x54] sm:$0xff]
    %v190 = vld [vmem:[#allocation8 + $0x5c] sm:$0xf]
    %v191 = vld [vmem:[#allocation8 + $0x60] sm:$0xff]
    %v192 = vld [vmem:[#allocation8 + $0x68] sm:$0xf]
    %v193 = vld [vmem:[#allocation8 + $0x6c] sm:$0xff]
    %v194 = vld [vmem:[#allocation8 + $0x74] sm:$0xf]
    %v195 = vld [vmem:[#allocation8 + $0x78] sm:$0xff]
    %v196 = vld [vmem:[#allocation8 + $0x80] sm:$0xf]
    %v197 = vld [vmem:[#allocation8 + $0x84] sm:$0xff]
    %v198 = vld [vmem:[#allocation8 + $0x8c] sm:$0xf]
    %v199 = vld [vmem:[#allocation8 + $0x90] sm:$0xff]
    %v200 = vld [vmem:[#allocation8 + $0x98] sm:$0xf]
    %v201 = vld [vmem:[#allocation8 + $0x9c] sm:$0xff]
    %v202 = vld [vmem:[#allocation8 + $0xa4] sm:$0xf]
    %v203 = vld [vmem:[#allocation8 + $0xa8] sm:$0xff]
    %v204 = vld [vmem:[#allocation8 + $0xb0] sm:$0xf]
    %v205 = vld [vmem:[#allocation8 + $0xb4] sm:$0xff]
    %v206 = vld [vmem:[#allocation8 + $0xbc] sm:$0xf]
    %v239 = vunpack.c.l.b16 %v175
    %v240 = vunpack.c.h.b16 %v175
    %v241 = vunpack.c.l.b16 %v176
    %v242 = vunpack.c.l.b16 %v177
    %v243 = vunpack.c.h.b16 %v177
    %v244 = vunpack.c.l.b16 %v178
    %v245 = vunpack.c.l.b16 %v179
    %v246 = vunpack.c.h.b16 %v179
    %v247 = vunpack.c.l.b16 %v180
    %v248 = vunpack.c.l.b16 %v181
    %v249 = vunpack.c.h.b16 %v181
    %v250 = vunpack.c.l.b16 %v182
    %v251 = vunpack.c.l.b16 %v183
    %v252 = vunpack.c.h.b16 %v183
    %v253 = vunpack.c.l.b16 %v184
    %v254 = vunpack.c.l.b16 %v185
    %v255 = vunpack.c.h.b16 %v185
    %v256 = vunpack.c.l.b16 %v186
    %v257 = vunpack.c.l.b16 %v187
    %v258 = vunpack.c.h.b16 %v187
    %v259 = vunpack.c.l.b16 %v188
    %v260 = vunpack.c.l.b16 %v189
    %v261 = vunpack.c.h.b16 %v189
    %v262 = vunpack.c.l.b16 %v190
    %v263 = vunpack.c.l.b16 %v191
    %v264 = vunpack.c.h.b16 %v191
    %v265 = vunpack.c.l.b16 %v192
    %v266 = vunpack.c.l.b16 %v193
    %v267 = vunpack.c.h.b16 %v193
    %v268 = vunpack.c.l.b16 %v194
    %v269 = vunpack.c.l.b16 %v195
    %v270 = vunpack.c.h.b16 %v195
    %v271 = vunpack.c.l.b16 %v196
    %v272 = vunpack.c.l.b16 %v197
    %v273 = vunpack.c.h.b16 %v197
    %v274 = vunpack.c.l.b16 %v198
    %v275 = vunpack.c.l.b16 %v199
    %v276 = vunpack.c.h.b16 %v199
    %v277 = vunpack.c.l.b16 %v200
    %v278 = vunpack.c.l.b16 %v201
    %v279 = vunpack.c.h.b16 %v201
    %v280 = vunpack.c.l.b16 %v202
    %v281 = vunpack.c.l.b16 %v203
    %v282 = vunpack.c.h.b16 %v203
    %v283 = vunpack.c.l.b16 %v204
    %v284 = vunpack.c.l.b16 %v205
    %v285 = vunpack.c.h.b16 %v205
    %v286 = vunpack.c.l.b16 %v206
    %v287 = vpack.c.b16 %v242, %v239
    %v288 = vpack.c.b16 %v243, %v240
    %v289 = vpack.c.b16 %v244, %v241
    %v290 = vpack.c.b16 %v248, %v245
    %v291 = vpack.c.b16 %v249, %v246
    %v292 = vpack.c.b16 %v250, %v247
    %v293 = vpack.c.b16 %v254, %v251
    %v294 = vpack.c.b16 %v255, %v252
    %v295 = vpack.c.b16 %v256, %v253
    %v296 = vpack.c.b16 %v260, %v257
    %v297 = vpack.c.b16 %v261, %v258
    %v298 = vpack.c.b16 %v262, %v259
    %v299 = vpack.c.b16 %v266, %v263
    %v300 = vpack.c.b16 %v267, %v264
    %v301 = vpack.c.b16 %v268, %v265
    %v302 = vpack.c.b16 %v272, %v269
    %v303 = vpack.c.b16 %v273, %v270
    %v304 = vpack.c.b16 %v274, %v271
    %v305 = vpack.c.b16 %v278, %v275
    %v306 = vpack.c.b16 %v279, %v276
    %v307 = vpack.c.b16 %v280, %v277
    %v308 = vpack.c.b16 %v284, %v281
    %v309 = vpack.c.b16 %v285, %v282
    %v310 = vpack.c.b16 %v286, %v283
    %335 = vmatprep.subr.bf16.mxu0 %v288
    %336 = vmatpush1.bf16.msra.mxu0 %v287
    %337 = vmatprep.subr.bf16.mxu0 %v291
    %338 = vmatpush1.bf16.msra.mxu0 %v290
    %339 = vmatprep.subr.bf16.mxu0 %v294
    %340 = vmatpush1.bf16.msra.mxu0 %v293
    %341 = vmatprep.subr.bf16.mxu0 %v297
    %342 = vmatpush1.bf16.msra.mxu0 %v296
    %343 = vmatprep.subr.bf16.mxu0 %v300
    %344 = vmatpush1.bf16.msra.mxu0 %v299
    %345 = vmatprep.subr.bf16.mxu0 %v303
    %346 = vmatpush1.bf16.msra.mxu0 %v302
    %347 = vmatprep.subr.bf16.mxu0 %v306
    %348 = vmatpush1.bf16.msra.mxu0 %v305
    %349 = vmatprep.subr.bf16.mxu0 %v309
    %350 = vmatpush1.bf16.msra.mxu0 %v308
    %351 = vmatprep.subr.bf16.mxu0 0
    %352 = vmatpush1.bf16.msra.mxu0 0
    %353 = vmatprep.subr.bf16.mxu0 0
    %354 = vmatpush1.bf16.msra.mxu0 0
    %355 = vmatprep.subr.bf16.mxu0 0
    %356 = vmatpush1.bf16.msra.mxu0 0
    %357 = vmatprep.subr.bf16.mxu0 0
    %358 = vmatpush1.bf16.msra.mxu0 0
    %359 = vmatprep.subr.bf16.mxu0 0
    %360 = vmatpush1.bf16.msra.mxu0 0
    %361 = vmatprep.subr.bf16.mxu0 0
    %362 = vmatpush1.bf16.msra.mxu0 0
    %363 = vmatprep.subr.bf16.mxu0 0
    %364 = vmatpush1.bf16.msra.mxu0 0
    %365 = vmatprep.subr.bf16.mxu0 0
    %366 = vmatpush1.bf16.msra.mxu0 0
    %367 = vmatprep.mubr.bf16.mxu0 0
    %368 = vmatmul.mubr.bf16.gmra.mrb[0].mxu0 %v173
    %v369 = vpop.f32.mrb[0].mxu0
    %v370 = vadd.f32 0.0, %v369
    %v371 = vpop.f32.mrb[0].mxu0
    %v372 = vadd.f32 0.0, %v371
    %v373 = vpop.f32.mrb[0].mxu0
    %v374 = vadd.f32 0.0, %v373
    %v375 = vpop.f32.mrb[0].mxu0
    %v376 = vadd.f32 0.0, %v375
    %377 = vmatprep.mubr.bf16.mxu0 0
    %378 = vmatmul.mubr.bf16.gmra.mrb[0].mxu0 %v174
    %v379 = vpop.f32.mrb[0].mxu0
    %v380 = vadd.f32 0.0, %v379
    %v381 = vpop.f32.mrb[0].mxu0
    %v382 = vadd.f32 0.0, %v381
    %v383 = vpop.f32.mrb[0].mxu0
    %v384 = vadd.f32 0.0, %v383
    %v385 = vpop.f32.mrb[0].mxu0
    %v386 = vadd.f32 0.0, %v385
    %387 = vdwg.mxu0
    %388 = vmatprep.subr.bf16.mxu0 0
    %389 = vmatpush1.bf16.msra.mxu0 %v289
    %390 = vmatprep.subr.bf16.mxu0 0
    %391 = vmatpush1.bf16.msra.mxu0 %v292
    %392 = vmatprep.subr.bf16.mxu0 0
    %393 = vmatpush1.bf16.msra.mxu0 %v295
    %394 = vmatprep.subr.bf16.mxu0 0
    %395 = vmatpush1.bf16.msra.mxu0 %v298
    %396 = vmatprep.subr.bf16.mxu0 0
    %397 = vmatpush1.bf16.msra.mxu0 %v301
    %398 = vmatprep.subr.bf16.mxu0 0
    %399 = vmatpush1.bf16.msra.mxu0 %v304
    %400 = vmatprep.subr.bf16.mxu0 0
    %401 = vmatpush1.bf16.msra.mxu0 %v307
    %402 = vmatprep.subr.bf16.mxu0 0
    %403 = vmatpush1.bf16.msra.mxu0 %v310
    %404 = vmatprep.subr.bf16.mxu0 0
    %405 = vmatpush1.bf16.msra.mxu0 0
    %406 = vmatprep.subr.bf16.mxu0 0
    %407 = vmatpush1.bf16.msra.mxu0 0
    %408 = vmatprep.subr.bf16.mxu0 0
    %409 = vmatpush1.bf16.msra.mxu0 0
    %410 = vmatprep.subr.bf16.mxu0 0
    %411 = vmatpush1.bf16.msra.mxu0 0
    %412 = vmatprep.subr.bf16.mxu0 0
    %413 = vmatpush1.bf16.msra.mxu0 0
    %414 = vmatprep.subr.bf16.mxu0 0
    %415 = vmatpush1.bf16.msra.mxu0 0
    %416 = vmatprep.subr.bf16.mxu0 0
    %417 = vmatpush1.bf16.msra.mxu0 0
    %418 = vmatprep.subr.bf16.mxu0 0
    %419 = vmatpush1.bf16.msra.mxu0 0
    %420 = vmatprep.mubr.bf16.mxu0 0
    %421 = vmatmul.mubr.bf16.gmra.mrb[0].mxu0 %v173
    %v422 = vpop.f32.mrb[0].mxu0
    %v423 = vadd.f32 0.0, %v422
    %v424 = vpop.f32.mrb[0].mxu0
    %v425 = vpop.f32.mrb[0].mxu0
    %v426 = vadd.f32 0.0, %v425
    %v427 = vpop.f32.mrb[0].mxu0
    %428 = vmatprep.mubr.bf16.mxu0 0
    %429 = vmatmul.mubr.bf16.gmra.mrb[0].mxu0 %v174
    %v430 = vpop.f32.mrb[0].mxu0
    %v431 = vadd.f32 0.0, %v430
    %v432 = vpop.f32.mrb[0].mxu0
    %v433 = vpop.f32.mrb[0].mxu0
    %v434 = vadd.f32 0.0, %v433
    %v435 = vpop.f32.mrb[0].mxu0
    %436 = vdwg.mxu0
    %v437 = vld [vmem:[#allocation5] sm:$0xff]
    %v438 = vld [vmem:[#allocation5 + $0x8] sm:$0xff]
    %441 = vrot.lane.b32.xlu0 %v437, 16
    %v442 = vpop.permute.xlu0 %441
    %443 = vrot.lane.b32.xlu0 %v438, 16
    %v444 = vpop.permute.xlu0 %443
    %447 = vrot.lane.b32.xlu0 %v437, 32
    %v448 = vpop.permute.xlu0 %447
    %449 = vrot.lane.b32.xlu0 %v438, 32
    %v450 = vpop.permute.xlu0 %449
    %453 = vrot.lane.b32.xlu0 %v437, 48
    %v454 = vpop.permute.xlu0 %453
    %455 = vrot.lane.b32.xlu0 %v438, 48
    %v456 = vpop.permute.xlu0 %455
    %459 = vrot.lane.b32.xlu0 %v437, 64
    %v460 = vpop.permute.xlu0 %459
    %461 = vrot.lane.b32.xlu0 %v438, 64
    %v462 = vpop.permute.xlu0 %461
    %465 = vrot.lane.b32.xlu0 %v437, 80
    %v466 = vpop.permute.xlu0 %465
    %467 = vrot.lane.b32.xlu0 %v438, 80
    %v468 = vpop.permute.xlu0 %467
    %471 = vrot.lane.b32.xlu0 %v437, 96
    %v472 = vpop.permute.xlu0 %471
    %473 = vrot.lane.b32.xlu0 %v438, 96
    %v474 = vpop.permute.xlu0 %473
    %477 = vrot.lane.b32.xlu0 %v437, 112
    %v478 = vpop.permute.xlu0 %477
    %479 = vrot.lane.b32.xlu0 %v438, 112
    %v480 = vpop.permute.xlu0 %479
    %vm483 = vcmask 130048
    %v484 = vsel %vm483, %v437, %v442
    %v485 = vsel %vm483, %v438, %v444
    %vm486 = vcmask 261120
    %v487 = vsel %vm486, %v484, %v448
    %v488 = vsel %vm486, %v485, %v450
    %vm489 = vcmask 392192
    %v490 = vsel %vm489, %v487, %v454
    %v491 = vsel %vm489, %v488, %v456
    %vm492 = vcmask 523264
    %v493 = vsel %vm492, %v490, %v460
    %v494 = vsel %vm492, %v491, %v462
    %vm495 = vcmask 654336
    %v496 = vsel %vm495, %v493, %v466
    %v497 = vsel %vm495, %v494, %v468
    %vm498 = vcmask 785408
    %v499 = vsel %vm498, %v496, %v472
    %v500 = vsel %vm498, %v497, %v474
    %vm501 = vcmask 916480
    %v502 = vsel %vm501, %v499, %v478
    %v503 = vsel %vm501, %v500, %v480
    %v504 = vld [vmem:[#allocation7] sm:$0xff]
    %v505 = vld [vmem:[#allocation7 + $0x8] sm:$0xff]
    %508 = vrot.lane.b32.xlu0 %v504, 16
    %v509 = vpop.permute.xlu0 %508
    %510 = vrot.lane.b32.xlu0 %v505, 16
    %v511 = vpop.permute.xlu0 %510
    %514 = vrot.lane.b32.xlu0 %v504, 32
    %v515 = vpop.permute.xlu0 %514
    %516 = vrot.lane.b32.xlu0 %v505, 32
    %v517 = vpop.permute.xlu0 %516
    %520 = vrot.lane.b32.xlu0 %v504, 48
    %v521 = vpop.permute.xlu0 %520
    %522 = vrot.lane.b32.xlu0 %v505, 48
    %v523 = vpop.permute.xlu0 %522
    %526 = vrot.lane.b32.xlu0 %v504, 64
    %v527 = vpop.permute.xlu0 %526
    %528 = vrot.lane.b32.xlu0 %v505, 64
    %v529 = vpop.permute.xlu0 %528
    %532 = vrot.lane.b32.xlu0 %v504, 80
    %v533 = vpop.permute.xlu0 %532
    %534 = vrot.lane.b32.xlu0 %v505, 80
    %v535 = vpop.permute.xlu0 %534
    %538 = vrot.lane.b32.xlu0 %v504, 96
    %v539 = vpop.permute.xlu0 %538
    %540 = vrot.lane.b32.xlu0 %v505, 96
    %v541 = vpop.permute.xlu0 %540
    %544 = vrot.lane.b32.xlu0 %v504, 112
    %v545 = vpop.permute.xlu0 %544
    %546 = vrot.lane.b32.xlu0 %v505, 112
    %v547 = vpop.permute.xlu0 %546
    %v550 = vsel %vm483, %v504, %v509
    %v551 = vsel %vm483, %v505, %v511
    %v552 = vsel %vm486, %v550, %v515
    %v553 = vsel %vm486, %v551, %v517
    %v554 = vsel %vm489, %v552, %v521
    %v555 = vsel %vm489, %v553, %v523
    %v556 = vsel %vm492, %v554, %v527
    %v557 = vsel %vm492, %v555, %v529
    %v558 = vsel %vm495, %v556, %v533
    %v559 = vsel %vm495, %v557, %v535
    %v560 = vsel %vm498, %v558, %v539
    %v561 = vsel %vm498, %v559, %v541
    %v562 = vsel %vm501, %v560, %v545
    %v563 = vsel %vm501, %v561, %v547
    %v564 = vlaneseq
    %v565 = vand.u32 %v564, 127
    %vm566 = vcmp.lt.s32.totalorder %v565, 0
    %v567 = vsub.s32 0, %v565
    %v568 = vsel %vm566, %v567, %v565
    %v569 = vshrl.u32 %v568, 1
    %v570 = vand.u32 %v568, 1
    %v571 = vsub.s32 0, %v570
    %v572 = vsel %vm566, %v571, %v570
    %vm573 = vcmp.ne.s32.totalorder %v572, 0
    %vm574 = vcmp.lt.s32.totalorder %v572, 0
    %vm575 = vmand %vm574, %vm573
    %v576 = vadd.s32 %v572, 2
    %v577 = vsel %vm575, %v576, %v572
    %vm578 = vcmp.eq.s32.totalorder %v577, 0
    %579 = vrot.lane.b32.xlu0 %v370, 127
    %v580 = vpop.permute.xlu0 %579
    %581 = vrot.lane.b32.xlu0 %v374, 127
    %v582 = vpop.permute.xlu0 %581
    %583 = vrot.lane.b32.xlu0 %v380, 127
    %v584 = vpop.permute.xlu0 %583
    %585 = vrot.lane.b32.xlu0 %v384, 127
    %v586 = vpop.permute.xlu0 %585
    %587 = vrot.lane.b32.xlu0 %v370, 1
    %v588 = vpop.permute.xlu0 %587
    %589 = vrot.lane.b32.xlu0 %v374, 1
    %v590 = vpop.permute.xlu0 %589
    %591 = vrot.lane.b32.xlu0 %v380, 1
    %v592 = vpop.permute.xlu0 %591
    %593 = vrot.lane.b32.xlu0 %v384, 1
    %v594 = vpop.permute.xlu0 %593
    %v595 = vmul.f32 %v370, %v502
    %v596 = vmul.f32 %v374, %v503
    %v597 = vmul.f32 %v380, %v502
    %v598 = vmul.f32 %v384, %v503
    %v599 = vsel %vm578, %v580, %v588
    %v600 = vsel %vm578, %v582, %v590
    %v601 = vsel %vm578, %v584, %v592
    %v602 = vsel %vm578, %v586, %v594
    %v603 = vmul.f32 %v599, %v562
    %v604 = vmul.f32 %v600, %v563
    %v605 = vmul.f32 %v601, %v562
    %v606 = vmul.f32 %v602, %v563
    %v607 = vadd.f32 %v595, %v603
    %v608 = vadd.f32 %v596, %v604
    %v609 = vadd.f32 %v597, %v605
    %v610 = vadd.f32 %v598, %v606
    %611 = vrot.lane.b32.xlu0 %v372, 127
    %v612 = vpop.permute.xlu0 %611
    %613 = vrot.lane.b32.xlu0 %v376, 127
    %v614 = vpop.permute.xlu0 %613
    %615 = vrot.lane.b32.xlu0 %v382, 127
    %v616 = vpop.permute.xlu0 %615
    %617 = vrot.lane.b32.xlu0 %v386, 127
    %v618 = vpop.permute.xlu0 %617
    %619 = vrot.lane.b32.xlu0 %v372, 1
    %v620 = vpop.permute.xlu0 %619
    %621 = vrot.lane.b32.xlu0 %v376, 1
    %v622 = vpop.permute.xlu0 %621
    %623 = vrot.lane.b32.xlu0 %v382, 1
    %v624 = vpop.permute.xlu0 %623
    %625 = vrot.lane.b32.xlu0 %v386, 1
    %v626 = vpop.permute.xlu0 %625
    %v627 = vmul.f32 %v372, %v502
    %v628 = vmul.f32 %v376, %v503
    %v629 = vmul.f32 %v382, %v502
    %v630 = vmul.f32 %v386, %v503
    %v631 = vsel %vm578, %v612, %v620
    %v632 = vsel %vm578, %v614, %v622
    %v633 = vsel %vm578, %v616, %v624
    %v634 = vsel %vm578, %v618, %v626
    %v635 = vmul.f32 %v631, %v562
    %v636 = vmul.f32 %v632, %v563
    %v637 = vmul.f32 %v633, %v562
    %v638 = vmul.f32 %v634, %v563
    %v639 = vadd.f32 %v627, %v635
    %v640 = vadd.f32 %v628, %v636
    %v641 = vadd.f32 %v629, %v637
    %v642 = vadd.f32 %v630, %v638
    %v643 = vpack.c.bf16 %v608, %v607
    %v644 = vpack.c.bf16 %v610, %v609
    %647 = vrot.lane.b32.xlu0 %v643, 112
    %v648 = vpop.permute.xlu0 %647
    %649 = vrot.lane.b32.xlu0 %v644, 112
    %v650 = vpop.permute.xlu0 %649
    %651 = vrot.lane.b32.xlu0 %v643, 96
    %v652 = vpop.permute.xlu0 %651
    %653 = vrot.lane.b32.xlu0 %v644, 96
    %v654 = vpop.permute.xlu0 %653
    %655 = vrot.lane.b32.xlu0 %v643, 80
    %v656 = vpop.permute.xlu0 %655
    %657 = vrot.lane.b32.xlu0 %v644, 80
    %v658 = vpop.permute.xlu0 %657
    %659 = vrot.lane.b32.xlu0 %v643, 64
    %v660 = vpop.permute.xlu0 %659
    %661 = vrot.lane.b32.xlu0 %v644, 64
    %v662 = vpop.permute.xlu0 %661
    %663 = vrot.lane.b32.xlu0 %v643, 48
    %v664 = vpop.permute.xlu0 %663
    %665 = vrot.lane.b32.xlu0 %v644, 48
    %v666 = vpop.permute.xlu0 %665
    %667 = vrot.lane.b32.xlu0 %v643, 32
    %v668 = vpop.permute.xlu0 %667
    %669 = vrot.lane.b32.xlu0 %v644, 32
    %v670 = vpop.permute.xlu0 %669
    %671 = vrot.lane.b32.xlu0 %v643, 16
    %v672 = vpop.permute.xlu0 %671
    %673 = vrot.lane.b32.xlu0 %v644, 16
    %v674 = vpop.permute.xlu0 %673
    %v675 = vpack.c.bf16 %v640, %v639
    %v676 = vpack.c.bf16 %v642, %v641
    %679 = vrot.lane.b32.xlu0 %v675, 112
    %v680 = vpop.permute.xlu0 %679
    %681 = vrot.lane.b32.xlu0 %v676, 112
    %v682 = vpop.permute.xlu0 %681
    %683 = vrot.lane.b32.xlu0 %v675, 96
    %v684 = vpop.permute.xlu0 %683
    %685 = vrot.lane.b32.xlu0 %v676, 96
    %v686 = vpop.permute.xlu0 %685
    %687 = vrot.lane.b32.xlu0 %v675, 80
    %v688 = vpop.permute.xlu0 %687
    %689 = vrot.lane.b32.xlu0 %v676, 80
    %v690 = vpop.permute.xlu0 %689
    %691 = vrot.lane.b32.xlu0 %v675, 64
    %v692 = vpop.permute.xlu0 %691
    %693 = vrot.lane.b32.xlu0 %v676, 64
    %v694 = vpop.permute.xlu0 %693
    %695 = vrot.lane.b32.xlu0 %v675, 48
    %v696 = vpop.permute.xlu0 %695
    %697 = vrot.lane.b32.xlu0 %v676, 48
    %v698 = vpop.permute.xlu0 %697
    %699 = vrot.lane.b32.xlu0 %v675, 32
    %v700 = vpop.permute.xlu0 %699
    %701 = vrot.lane.b32.xlu0 %v676, 32
    %v702 = vpop.permute.xlu0 %701
    %703 = vrot.lane.b32.xlu0 %v675, 16
    %v704 = vpop.permute.xlu0 %703
    %705 = vrot.lane.b32.xlu0 %v676, 16
    %v706 = vpop.permute.xlu0 %705
    %v707 = vpack.c.bf16 %v426, %v423
    %v708 = vpack.c.bf16 %v434, %v431
    %711 = vrot.lane.b32.xlu0 %v707, 112
    %v712 = vpop.permute.xlu0 %711
    %713 = vrot.lane.b32.xlu0 %v708, 112
    %v714 = vpop.permute.xlu0 %713
    %717 = vrot.lane.b32.xlu0 %v707, 96
    %v718 = vpop.permute.xlu0 %717
    %719 = vrot.lane.b32.xlu0 %v708, 96
    %v720 = vpop.permute.xlu0 %719
    %723 = vrot.lane.b32.xlu0 %v707, 80
    %v724 = vpop.permute.xlu0 %723
    %725 = vrot.lane.b32.xlu0 %v708, 80
    %v726 = vpop.permute.xlu0 %725
    %729 = vrot.lane.b32.xlu0 %v707, 64
    %v730 = vpop.permute.xlu0 %729
    %731 = vrot.lane.b32.xlu0 %v708, 64
    %v732 = vpop.permute.xlu0 %731
    %735 = vrot.lane.b32.xlu0 %v707, 48
    %v736 = vpop.permute.xlu0 %735
    %737 = vrot.lane.b32.xlu0 %v708, 48
    %v738 = vpop.permute.xlu0 %737
    %741 = vrot.lane.b32.xlu0 %v707, 32
    %v742 = vpop.permute.xlu0 %741
    %743 = vrot.lane.b32.xlu0 %v708, 32
    %v744 = vpop.permute.xlu0 %743
    %747 = vrot.lane.b32.xlu0 %v707, 16
    %v748 = vpop.permute.xlu0 %747
    %749 = vrot.lane.b32.xlu0 %v708, 16
    %v750 = vpop.permute.xlu0 %749
    %v754 = vsel %vm483, %v643, 0
    %v757 = vsel %vm483, %v675, 0
    %759 = vmatprep.subr.bf16.mxu0 0
    %760 = vmatpush1.bf16.xpose.msra.mxu0 %v757
    %761 = vmatprep.subr.bf16.mxu0 0
    %762 = vmatpush1.bf16.xpose.msra.mxu0 0
    %763 = vmatprep.subr.bf16.mxu0 0
    %764 = vmatpush1.bf16.xpose.msra.mxu0 0
    %765 = vmatprep.subr.bf16.mxu0 0
    %766 = vmatpush1.bf16.xpose.msra.mxu0 0
    %767 = vmatprep.subr.bf16.mxu0 0
    %768 = vmatpush1.bf16.xpose.msra.mxu0 0
    %769 = vmatprep.subr.bf16.mxu0 0
    %770 = vmatpush1.bf16.xpose.msra.mxu0 0
    %771 = vmatprep.subr.bf16.mxu0 0
    %772 = vmatpush1.bf16.xpose.msra.mxu0 0
    %773 = vmatprep.subr.bf16.mxu0 0
    %774 = vmatpush1.bf16.xpose.msra.mxu0 0
    %775 = vmatprep.subr.bf16.mxu0 0
    %776 = vmatpush1.bf16.xpose.msra.mxu0 0
    %777 = vmatprep.subr.bf16.mxu0 0
    %778 = vmatpush1.bf16.xpose.msra.mxu0 0
    %779 = vmatprep.subr.bf16.mxu0 0
    %780 = vmatpush1.bf16.xpose.msra.mxu0 0
    %781 = vmatprep.subr.bf16.mxu0 0
    %782 = vmatpush1.bf16.xpose.msra.mxu0 0
    %783 = vmatprep.subr.bf16.mxu0 0
    %784 = vmatpush1.bf16.xpose.msra.mxu0 0
    %785 = vmatprep.subr.bf16.mxu0 0
    %786 = vmatpush1.bf16.xpose.msra.mxu0 0
    %787 = vmatprep.subr.bf16.mxu0 0
    %788 = vmatpush1.bf16.xpose.msra.mxu0 0
    %789 = vmatprep.subr.bf16.mxu0 0
    %790 = vmatpush1.bf16.xpose.msra.mxu0 0
    %791 = vmatprep.mubr.bf16.mxu0 0
    %792 = vmatmul.mubr.bf16.gmra.mrb[0].mxu0 %v754
    %v793 = vpop.f32.mrb[0].mxu0
    %v794 = vadd.f32 0.0, %v793
    %v795 = vpop.f32.mrb[0].mxu0
    %v796 = vpop.f32.mrb[0].mxu0
    %v797 = vadd.f32 0.0, %v796
    %v798 = vpop.f32.mrb[0].mxu0
    %799 = vdwg.mxu0
    %v801 = vsel %vm483, %v644, 0
    %v804 = vsel %vm483, %v676, 0
    %806 = vmatprep.subr.bf16.mxu0 0
    %807 = vmatpush1.bf16.xpose.msra.mxu0 %v804
    %808 = vmatprep.subr.bf16.mxu0 0
    %809 = vmatpush1.bf16.xpose.msra.mxu0 0
    %810 = vmatprep.subr.bf16.mxu0 0
    %811 = vmatpush1.bf16.xpose.msra.mxu0 0
    %812 = vmatprep.subr.bf16.mxu0 0
    %813 = vmatpush1.bf16.xpose.msra.mxu0 0
    %814 = vmatprep.subr.bf16.mxu0 0
    %815 = vmatpush1.bf16.xpose.msra.mxu0 0
    %816 = vmatprep.subr.bf16.mxu0 0
    %817 = vmatpush1.bf16.xpose.msra.mxu0 0
    %818 = vmatprep.subr.bf16.mxu0 0
    %819 = vmatpush1.bf16.xpose.msra.mxu0 0
    %820 = vmatprep.subr.bf16.mxu0 0
    %821 = vmatpush1.bf16.xpose.msra.mxu0 0
    %822 = vmatprep.subr.bf16.mxu0 0
    %823 = vmatpush1.bf16.xpose.msra.mxu0 0
    %824 = vmatprep.subr.bf16.mxu0 0
    %825 = vmatpush1.bf16.xpose.msra.mxu0 0
    %826 = vmatprep.subr.bf16.mxu0 0
    %827 = vmatpush1.bf16.xpose.msra.mxu0 0
    %828 = vmatprep.subr.bf16.mxu0 0
    %829 = vmatpush1.bf16.xpose.msra.mxu0 0
    %830 = vmatprep.subr.bf16.mxu0 0
    %831 = vmatpush1.bf16.xpose.msra.mxu0 0
    %832 = vmatprep.subr.bf16.mxu0 0
    %833 = vmatpush1.bf16.xpose.msra.mxu0 0
    %834 = vmatprep.subr.bf16.mxu0 0
    %835 = vmatpush1.bf16.xpose.msra.mxu0 0
    %836 = vmatprep.subr.bf16.mxu0 0
    %837 = vmatpush1.bf16.xpose.msra.mxu0 0
    %838 = vmatprep.mubr.bf16.mxu0 0
    %839 = vmatmul.mubr.bf16.gmra.mrb[0].mxu0 %v801
    %v840 = vpop.f32.mrb[0].mxu0
    %v841 = vadd.f32 0.0, %v840
    %v842 = vpop.f32.mrb[0].mxu0
    %v843 = vpop.f32.mrb[0].mxu0
    %v844 = vadd.f32 0.0, %v843
    %v845 = vpop.f32.mrb[0].mxu0
    %846 = vdwg.mxu0
    %v848 = vsel %vm483, %v648, 0
    %v851 = vsel %vm483, %v680, 0
    %853 = vmatprep.subr.bf16.mxu0 0
    %854 = vmatpush1.bf16.xpose.msra.mxu0 %v851
    %855 = vmatprep.subr.bf16.mxu0 0
    %856 = vmatpush1.bf16.xpose.msra.mxu0 0
    %857 = vmatprep.subr.bf16.mxu0 0
    %858 = vmatpush1.bf16.xpose.msra.mxu0 0
    %859 = vmatprep.subr.bf16.mxu0 0
    %860 = vmatpush1.bf16.xpose.msra.mxu0 0
    %861 = vmatprep.subr.bf16.mxu0 0
    %862 = vmatpush1.bf16.xpose.msra.mxu0 0
    %863 = vmatprep.subr.bf16.mxu0 0
    %864 = vmatpush1.bf16.xpose.msra.mxu0 0
    %865 = vmatprep.subr.bf16.mxu0 0
    %866 = vmatpush1.bf16.xpose.msra.mxu0 0
    %867 = vmatprep.subr.bf16.mxu0 0
    %868 = vmatpush1.bf16.xpose.msra.mxu0 0
    %869 = vmatprep.subr.bf16.mxu0 0
    %870 = vmatpush1.bf16.xpose.msra.mxu0 0
    %871 = vmatprep.subr.bf16.mxu0 0
    %872 = vmatpush1.bf16.xpose.msra.mxu0 0
    %873 = vmatprep.subr.bf16.mxu0 0
    %874 = vmatpush1.bf16.xpose.msra.mxu0 0
    %875 = vmatprep.subr.bf16.mxu0 0
    %876 = vmatpush1.bf16.xpose.msra.mxu0 0
    %877 = vmatprep.subr.bf16.mxu0 0
    %878 = vmatpush1.bf16.xpose.msra.mxu0 0
    %879 = vmatprep.subr.bf16.mxu0 0
    %880 = vmatpush1.bf16.xpose.msra.mxu0 0
    %881 = vmatprep.subr.bf16.mxu0 0
    %882 = vmatpush1.bf16.xpose.msra.mxu0 0
    %883 = vmatprep.subr.bf16.mxu0 0
    %884 = vmatpush1.bf16.xpose.msra.mxu0 0
    %885 = vmatprep.mubr.bf16.mxu0 0
    %886 = vmatmul.mubr.bf16.gmra.mrb[0].mxu0 %v848
    %v887 = vpop.f32.mrb[0].mxu0
    %v888 = vadd.f32 0.0, %v887
    %v889 = vpop.f32.mrb[0].mxu0
    %v890 = vpop.f32.mrb[0].mxu0
    %v891 = vadd.f32 0.0, %v890
    %v892 = vpop.f32.mrb[0].mxu0
    %893 = vdwg.mxu0
    %v895 = vsel %vm483, %v650, 0
    %v898 = vsel %vm483, %v682, 0
    %900 = vmatprep.subr.bf16.mxu0 0
    %901 = vmatpush1.bf16.xpose.msra.mxu0 %v898
    %902 = vmatprep.subr.bf16.mxu0 0
    %903 = vmatpush1.bf16.xpose.msra.mxu0 0
    %904 = vmatprep.subr.bf16.mxu0 0
    %905 = vmatpush1.bf16.xpose.msra.mxu0 0
    %906 = vmatprep.subr.bf16.mxu0 0
    %907 = vmatpush1.bf16.xpose.msra.mxu0 0
    %908 = vmatprep.subr.bf16.mxu0 0
    %909 = vmatpush1.bf16.xpose.msra.mxu0 0
    %910 = vmatprep.subr.bf16.mxu0 0
    %911 = vmatpush1.bf16.xpose.msra.mxu0 0
    %912 = vmatprep.subr.bf16.mxu0 0
    %913 = vmatpush1.bf16.xpose.msra.mxu0 0
    %914 = vmatprep.subr.bf16.mxu0 0
    %915 = vmatpush1.bf16.xpose.msra.mxu0 0
    %916 = vmatprep.subr.bf16.mxu0 0
    %917 = vmatpush1.bf16.xpose.msra.mxu0 0
    %918 = vmatprep.subr.bf16.mxu0 0
    %919 = vmatpush1.bf16.xpose.msra.mxu0 0
    %920 = vmatprep.subr.bf16.mxu0 0
    %921 = vmatpush1.bf16.xpose.msra.mxu0 0
    %922 = vmatprep.subr.bf16.mxu0 0
    %923 = vmatpush1.bf16.xpose.msra.mxu0 0
    %924 = vmatprep.subr.bf16.mxu0 0
    %925 = vmatpush1.bf16.xpose.msra.mxu0 0
    %926 = vmatprep.subr.bf16.mxu0 0
    %927 = vmatpush1.bf16.xpose.msra.mxu0 0
    %928 = vmatprep.subr.bf16.mxu0 0
    %929 = vmatpush1.bf16.xpose.msra.mxu0 0
    %930 = vmatprep.subr.bf16.mxu0 0
    %931 = vmatpush1.bf16.xpose.msra.mxu0 0
    %932 = vmatprep.mubr.bf16.mxu0 0
    %933 = vmatmul.mubr.bf16.gmra.mrb[0].mxu0 %v895
    %v934 = vpop.f32.mrb[0].mxu0
    %v935 = vadd.f32 0.0, %v934
    %v936 = vpop.f32.mrb[0].mxu0
    %v937 = vpop.f32.mrb[0].mxu0
    %v938 = vadd.f32 0.0, %v937
    %v939 = vpop.f32.mrb[0].mxu0
    %940 = vdwg.mxu0
    %v942 = vsel %vm483, %v652, 0
    %v945 = vsel %vm483, %v684, 0
    %947 = vmatprep.subr.bf16.mxu0 0
    %948 = vmatpush1.bf16.xpose.msra.mxu0 %v945
    %949 = vmatprep.subr.bf16.mxu0 0
    %950 = vmatpush1.bf16.xpose.msra.mxu0 0
    %951 = vmatprep.subr.bf16.mxu0 0
    %952 = vmatpush1.bf16.xpose.msra.mxu0 0
    %953 = vmatprep.subr.bf16.mxu0 0
    %954 = vmatpush1.bf16.xpose.msra.mxu0 0
    %955 = vmatprep.subr.bf16.mxu0 0
    %956 = vmatpush1.bf16.xpose.msra.mxu0 0
    %957 = vmatprep.subr.bf16.mxu0 0
    %958 = vmatpush1.bf16.xpose.msra.mxu0 0
    %959 = vmatprep.subr.bf16.mxu0 0
    %960 = vmatpush1.bf16.xpose.msra.mxu0 0
    %961 = vmatprep.subr.bf16.mxu0 0
    %962 = vmatpush1.bf16.xpose.msra.mxu0 0
    %963 = vmatprep.subr.bf16.mxu0 0
    %964 = vmatpush1.bf16.xpose.msra.mxu0 0
    %965 = vmatprep.subr.bf16.mxu0 0
    %966 = vmatpush1.bf16.xpose.msra.mxu0 0
    %967 = vmatprep.subr.bf16.mxu0 0
    %968 = vmatpush1.bf16.xpose.msra.mxu0 0
    %969 = vmatprep.subr.bf16.mxu0 0
    %970 = vmatpush1.bf16.xpose.msra.mxu0 0
    %971 = vmatprep.subr.bf16.mxu0 0
    %972 = vmatpush1.bf16.xpose.msra.mxu0 0
    %973 = vmatprep.subr.bf16.mxu0 0
    %974 = vmatpush1.bf16.xpose.msra.mxu0 0
    %975 = vmatprep.subr.bf16.mxu0 0
    %976 = vmatpush1.bf16.xpose.msra.mxu0 0
    %977 = vmatprep.subr.bf16.mxu0 0
    %978 = vmatpush1.bf16.xpose.msra.mxu0 0
    %979 = vmatprep.mubr.bf16.mxu0 0
    %980 = vmatmul.mubr.bf16.gmra.mrb[0].mxu0 %v942
    %v981 = vpop.f32.mrb[0].mxu0
    %v982 = vadd.f32 0.0, %v981
    %v983 = vpop.f32.mrb[0].mxu0
    %v984 = vpop.f32.mrb[0].mxu0
    %v985 = vadd.f32 0.0, %v984
    %v986 = vpop.f32.mrb[0].mxu0
    %987 = vdwg.mxu0
    %v989 = vsel %vm483, %v654, 0
    %v992 = vsel %vm483, %v686, 0
    %994 = vmatprep.subr.bf16.mxu0 0
    %995 = vmatpush1.bf16.xpose.msra.mxu0 %v992
    %996 = vmatprep.subr.bf16.mxu0 0
    %997 = vmatpush1.bf16.xpose.msra.mxu0 0
    %998 = vmatprep.subr.bf16.mxu0 0
    %999 = vmatpush1.bf16.xpose.msra.mxu0 0
    %1000 = vmatprep.subr.bf16.mxu0 0
    %1001 = vmatpush1.bf16.xpose.msra.mxu0 0
    %1002 = vmatprep.subr.bf16.mxu0 0
    %1003 = vmatpush1.bf16.xpose.msra.mxu0 0
    %1004 = vmatprep.subr.bf16.mxu0 0
    %1005 = vmatpush1.bf16.xpose.msra.mxu0 0
    %1006 = vmatprep.subr.bf16.mxu0 0
    %1007 = vmatpush1.bf16.xpose.msra.mxu0 0
    %1008 = vmatprep.subr.bf16.mxu0 0
    %1009 = vmatpush1.bf16.xpose.msra.mxu0 0
    %1010 = vmatprep.subr.bf16.mxu0 0
    %1011 = vmatpush1.bf16.xpose.msra.mxu0 0
    %1012 = vmatprep.subr.bf16.mxu0 0
    %1013 = vmatpush1.bf16.xpose.msra.mxu0 0
    %1014 = vmatprep.subr.bf16.mxu0 0
    %1015 = vmatpush1.bf16.xpose.msra.mxu0 0
    %1016 = vmatprep.subr.bf16.mxu0 0
    %1017 = vmatpush1.bf16.xpose.msra.mxu0 0
    %1018 = vmatprep.subr.bf16.mxu0 0
    %1019 = vmatpush1.bf16.xpose.msra.mxu0 0
    %1020 = vmatprep.subr.bf16.mxu0 0
    %1021 = vmatpush1.bf16.xpose.msra.mxu0 0
    %1022 = vmatprep.subr.bf16.mxu0 0
    %1023 = vmatpush1.bf16.xpose.msra.mxu0 0
    %1024 = vmatprep.subr.bf16.mxu0 0
    %1025 = vmatpush1.bf16.xpose.msra.mxu0 0
    %1026 = vmatprep.mubr.bf16.mxu0 0
    %1027 = vmatmul.mubr.bf16.gmra.mrb[0].mxu0 %v989
    %v1028 = vpop.f32.mrb[0].mxu0
    %v1029 = vadd.f32 0.0, %v1028
    %v1030 = vpop.f32.mrb[0].mxu0
    %v1031 = vpop.f32.mrb[0].mxu0
    %v1032 = vadd.f32 0.0, %v1031
    %v1033 = vpop.f32.mrb[0].mxu0
    %1034 = vdwg.mxu0
    %v1036 = vsel %vm483, %v656, 0
    %v1039 = vsel %vm483, %v688, 0
    %1041 = vmatprep.subr.bf16.mxu0 0
    %1042 = vmatpush1.bf16.xpose.msra.mxu0 %v1039
    %1043 = vmatprep.subr.bf16.mxu0 0
    %1044 = vmatpush1.bf16.xpose.msra.mxu0 0
    %1045 = vmatprep.subr.bf16.mxu0 0
    %1046 = vmatpush1.bf16.xpose.msra.mxu0 0
    %1047 = vmatprep.subr.bf16.mxu0 0
    %1048 = vmatpush1.bf16.xpose.msra.mxu0 0
    %1049 = vmatprep.subr.bf16.mxu0 0
    %1050 = vmatpush1.bf16.xpose.msra.mxu0 0
    %1051 = vmatprep.subr.bf16.mxu0 0
    %1052 = vmatpush1.bf16.xpose.msra.mxu0 0
    %1053 = vmatprep.subr.bf16.mxu0 0
    %1054 = vmatpush1.bf16.xpose.msra.mxu0 0
    %1055 = vmatprep.subr.bf16.mxu0 0
    %1056 = vmatpush1.bf16.xpose.msra.mxu0 0
    %1057 = vmatprep.subr.bf16.mxu0 0
    %1058 = vmatpush1.bf16.xpose.msra.mxu0 0
    %1059 = vmatprep.subr.bf16.mxu0 0
    %1060 = vmatpush1.bf16.xpose.msra.mxu0 0
    %1061 = vmatprep.subr.bf16.mxu0 0
    %1062 = vmatpush1.bf16.xpose.msra.mxu0 0
    %1063 = vmatprep.subr.bf16.mxu0 0
    %1064 = vmatpush1.bf16.xpose.msra.mxu0 0
    %1065 = vmatprep.subr.bf16.mxu0 0
    %1066 = vmatpush1.bf16.xpose.msra.mxu0 0
    %1067 = vmatprep.subr.bf16.mxu0 0
    %1068 = vmatpush1.bf16.xpose.msra.mxu0 0
    %1069 = vmatprep.subr.bf16.mxu0 0
    %1070 = vmatpush1.bf16.xpose.msra.mxu0 0
    %1071 = vmatprep.subr.bf16.mxu0 0
    %1072 = vmatpush1.bf16.xpose.msra.mxu0 0
    %1073 = vmatprep.mubr.bf16.mxu0 0
    %1074 = vmatmul.mubr.bf16.gmra.mrb[0].mxu0 %v1036
    %v1075 = vpop.f32.mrb[0].mxu0
    %v1076 = vadd.f32 0.0, %v1075
    %v1077 = vpop.f32.mrb[0].mxu0
    %v1078 = vpop.f32.mrb[0].mxu0
    %v1079 = vadd.f32 0.0, %v1078
    %v1080 = vpop.f32.mrb[0].mxu0
    %1081 = vdwg.mxu0
    %v1083 = vsel %vm483, %v658, 0
    %v1086 = vsel %vm483, %v690, 0
    %1088 = vmatprep.subr.bf16.mxu0 0
    %1089 = vmatpush1.bf16.xpose.msra.mxu0 %v1086
    %1090 = vmatprep.subr.bf16.mxu0 0
    %1091 = vmatpush1.bf16.xpose.msra.mxu0 0
    %1092 = vmatprep.subr.bf16.mxu0 0
    %1093 = vmatpush1.bf16.xpose.msra.mxu0 0
    %1094 = vmatprep.subr.bf16.mxu0 0
    %1095 = vmatpush1.bf16.xpose.msra.mxu0 0
    %1096 = vmatprep.subr.bf16.mxu0 0
    %1097 = vmatpush1.bf16.xpose.msra.mxu0 0
    %1098 = vmatprep.subr.bf16.mxu0 0
    %1099 = vmatpush1.bf16.xpose.msra.mxu0 0
    %1100 = vmatprep.subr.bf16.mxu0 0
    %1101 = vmatpush1.bf16.xpose.msra.mxu0 0
    %1102 = vmatprep.subr.bf16.mxu0 0
    %1103 = vmatpush1.bf16.xpose.msra.mxu0 0
    %1104 = vmatprep.subr.bf16.mxu0 0
    %1105 = vmatpush1.bf16.xpose.msra.mxu0 0
    %1106 = vmatprep.subr.bf16.mxu0 0
    %1107 = vmatpush1.bf16.xpose.msra.mxu0 0
    %1108 = vmatprep.subr.bf16.mxu0 0
    %1109 = vmatpush1.bf16.xpose.msra.mxu0 0
    %1110 = vmatprep.subr.bf16.mxu0 0
    %1111 = vmatpush1.bf16.xpose.msra.mxu0 0
    %1112 = vmatprep.subr.bf16.mxu0 0
    %1113 = vmatpush1.bf16.xpose.msra.mxu0 0
    %1114 = vmatprep.subr.bf16.mxu0 0
    %1115 = vmatpush1.bf16.xpose.msra.mxu0 0
    %1116 = vmatprep.subr.bf16.mxu0 0
    %1117 = vmatpush1.bf16.xpose.msra.mxu0 0
    %1118 = vmatprep.subr.bf16.mxu0 0
    %1119 = vmatpush1.bf16.xpose.msra.mxu0 0
    %1120 = vmatprep.mubr.bf16.mxu0 0
    %1121 = vmatmul.mubr.bf16.gmra.mrb[0].mxu0 %v1083
    %v1122 = vpop.f32.mrb[0].mxu0
    %v1123 = vadd.f32 0.0, %v1122
    %v1124 = vpop.f32.mrb[0].mxu0
    %v1125 = vpop.f32.mrb[0].mxu0
    %v1126 = vadd.f32 0.0, %v1125
    %v1127 = vpop.f32.mrb[0].mxu0
    %1128 = vdwg.mxu0
    %v1130 = vsel %vm483, %v660, 0
    %v1133 = vsel %vm483, %v692, 0
    %1135 = vmatprep.subr.bf16.mxu0 0
    %1136 = vmatpush1.bf16.xpose.msra.mxu0 %v1133
    %1137 = vmatprep.subr.bf16.mxu0 0
    %1138 = vmatpush1.bf16.xpose.msra.mxu0 0
    %1139 = vmatprep.subr.bf16.mxu0 0
    %1140 = vmatpush1.bf16.xpose.msra.mxu0 0
    %1141 = vmatprep.subr.bf16.mxu0 0
    %1142 = vmatpush1.bf16.xpose.msra.mxu0 0
    %1143 = vmatprep.subr.bf16.mxu0 0
    %1144 = vmatpush1.bf16.xpose.msra.mxu0 0
    %1145 = vmatprep.subr.bf16.mxu0 0
    %1146 = vmatpush1.bf16.xpose.msra.mxu0 0
    %1147 = vmatprep.subr.bf16.mxu0 0
    %1148 = vmatpush1.bf16.xpose.msra.mxu0 0
    %1149 = vmatprep.subr.bf16.mxu0 0
    %1150 = vmatpush1.bf16.xpose.msra.mxu0 0
    %1151 = vmatprep.subr.bf16.mxu0 0
    %1152 = vmatpush1.bf16.xpose.msra.mxu0 0
    %1153 = vmatprep.subr.bf16.mxu0 0
    %1154 = vmatpush1.bf16.xpose.msra.mxu0 0
    %1155 = vmatprep.subr.bf16.mxu0 0
    %1156 = vmatpush1.bf16.xpose.msra.mxu0 0
    %1157 = vmatprep.subr.bf16.mxu0 0
    %1158 = vmatpush1.bf16.xpose.msra.mxu0 0
    %1159 = vmatprep.subr.bf16.mxu0 0
    %1160 = vmatpush1.bf16.xpose.msra.mxu0 0
    %1161 = vmatprep.subr.bf16.mxu0 0
    %1162 = vmatpush1.bf16.xpose.msra.mxu0 0
    %1163 = vmatprep.subr.bf16.mxu0 0
    %1164 = vmatpush1.bf16.xpose.msra.mxu0 0
    %1165 = vmatprep.subr.bf16.mxu0 0
    %1166 = vmatpush1.bf16.xpose.msra.mxu0 0
    %1167 = vmatprep.mubr.bf16.mxu0 0
    %1168 = vmatmul.mubr.bf16.gmra.mrb[0].mxu0 %v1130
    %v1169 = vpop.f32.mrb[0].mxu0
    %v1170 = vadd.f32 0.0, %v1169
    %v1171 = vpop.f32.mrb[0].mxu0
    %v1172 = vpop.f32.mrb[0].mxu0
    %v1173 = vadd.f32 0.0, %v1172
    %v1174 = vpop.f32.mrb[0].mxu0
    %1175 = vdwg.mxu0
    %v1177 = vsel %vm483, %v662, 0
    %v1180 = vsel %vm483, %v694, 0
    %1182 = vmatprep.subr.bf16.mxu0 0
    %1183 = vmatpush1.bf16.xpose.msra.mxu0 %v1180
    %1184 = vmatprep.subr.bf16.mxu0 0
    %1185 = vmatpush1.bf16.xpose.msra.mxu0 0
    %1186 = vmatprep.subr.bf16.mxu0 0
    %1187 = vmatpush1.bf16.xpose.msra.mxu0 0
    %1188 = vmatprep.subr.bf16.mxu0 0
    %1189 = vmatpush1.bf16.xpose.msra.mxu0 0
    %1190 = vmatprep.subr.bf16.mxu0 0
    %1191 = vmatpush1.bf16.xpose.msra.mxu0 0
    %1192 = vmatprep.subr.bf16.mxu0 0
    %1193 = vmatpush1.bf16.xpose.msra.mxu0 0
    %1194 = vmatprep.subr.bf16.mxu0 0
    %1195 = vmatpush1.bf16.xpose.msra.mxu0 0
    %1196 = vmatprep.subr.bf16.mxu0 0
    %1197 = vmatpush1.bf16.xpose.msra.mxu0 0
    %1198 = vmatprep.subr.bf16.mxu0 0
    %1199 = vmatpush1.bf16.xpose.msra.mxu0 0
    %1200 = vmatprep.subr.bf16.mxu0 0
    %1201 = vmatpush1.bf16.xpose.msra.mxu0 0
    %1202 = vmatprep.subr.bf16.mxu0 0
    %1203 = vmatpush1.bf16.xpose.msra.mxu0 0
    %1204 = vmatprep.subr.bf16.mxu0 0
    %1205 = vmatpush1.bf16.xpose.msra.mxu0 0
    %1206 = vmatprep.subr.bf16.mxu0 0
    %1207 = vmatpush1.bf16.xpose.msra.mxu0 0
    %1208 = vmatprep.subr.bf16.mxu0 0
    %1209 = vmatpush1.bf16.xpose.msra.mxu0 0
    %1210 = vmatprep.subr.bf16.mxu0 0
    %1211 = vmatpush1.bf16.xpose.msra.mxu0 0
    %1212 = vmatprep.subr.bf16.mxu0 0
    %1213 = vmatpush1.bf16.xpose.msra.mxu0 0
    %1214 = vmatprep.mubr.bf16.mxu0 0
    %1215 = vmatmul.mubr.bf16.gmra.mrb[0].mxu0 %v1177
    %v1216 = vpop.f32.mrb[0].mxu0
    %v1217 = vadd.f32 0.0, %v1216
    %v1218 = vpop.f32.mrb[0].mxu0
    %v1219 = vpop.f32.mrb[0].mxu0
    %v1220 = vadd.f32 0.0, %v1219
    %v1221 = vpop.f32.mrb[0].mxu0
    %1222 = vdwg.mxu0
    %v1224 = vsel %vm483, %v664, 0
    %v1227 = vsel %vm483, %v696, 0
    %1229 = vmatprep.subr.bf16.mxu0 0
    %1230 = vmatpush1.bf16.xpose.msra.mxu0 %v1227
    %1231 = vmatprep.subr.bf16.mxu0 0
    %1232 = vmatpush1.bf16.xpose.msra.mxu0 0
    %1233 = vmatprep.subr.bf16.mxu0 0
    %1234 = vmatpush1.bf16.xpose.msra.mxu0 0
    %1235 = vmatprep.subr.bf16.mxu0 0
    %1236 = vmatpush1.bf16.xpose.msra.mxu0 0
    %1237 = vmatprep.subr.bf16.mxu0 0
    %1238 = vmatpush1.bf16.xpose.msra.mxu0 0
    %1239 = vmatprep.subr.bf16.mxu0 0
    %1240 = vmatpush1.bf16.xpose.msra.mxu0 0
    %1241 = vmatprep.subr.bf16.mxu0 0
    %1242 = vmatpush1.bf16.xpose.msra.mxu0 0
    %1243 = vmatprep.subr.bf16.mxu0 0
    %1244 = vmatpush1.bf16.xpose.msra.mxu0 0
    %1245 = vmatprep.subr.bf16.mxu0 0
    %1246 = vmatpush1.bf16.xpose.msra.mxu0 0
    %1247 = vmatprep.subr.bf16.mxu0 0
    %1248 = vmatpush1.bf16.xpose.msra.mxu0 0
    %1249 = vmatprep.subr.bf16.mxu0 0
    %1250 = vmatpush1.bf16.xpose.msra.mxu0 0
    %1251 = vmatprep.subr.bf16.mxu0 0
    %1252 = vmatpush1.bf16.xpose.msra.mxu0 0
    %1253 = vmatprep.subr.bf16.mxu0 0
    %1254 = vmatpush1.bf16.xpose.msra.mxu0 0
    %1255 = vmatprep.subr.bf16.mxu0 0
    %1256 = vmatpush1.bf16.xpose.msra.mxu0 0
    %1257 = vmatprep.subr.bf16.mxu0 0
    %1258 = vmatpush1.bf16.xpose.msra.mxu0 0
    %1259 = vmatprep.subr.bf16.mxu0 0
    %1260 = vmatpush1.bf16.xpose.msra.mxu0 0
    %1261 = vmatprep.mubr.bf16.mxu0 0
    %1262 = vmatmul.mubr.bf16.gmra.mrb[0].mxu0 %v1224
    %v1263 = vpop.f32.mrb[0].mxu0
    %v1264 = vadd.f32 0.0, %v1263
    %v1265 = vpop.f32.mrb[0].mxu0
    %v1266 = vpop.f32.mrb[0].mxu0
    %v1267 = vadd.f32 0.0, %v1266
    %v1268 = vpop.f32.mrb[0].mxu0
    %1269 = vdwg.mxu0
    %v1271 = vsel %vm483, %v666, 0
    %v1274 = vsel %vm483, %v698, 0
    %1276 = vmatprep.subr.bf16.mxu0 0
    %1277 = vmatpush1.bf16.xpose.msra.mxu0 %v1274
    %1278 = vmatprep.subr.bf16.mxu0 0
    %1279 = vmatpush1.bf16.xpose.msra.mxu0 0
    %1280 = vmatprep.subr.bf16.mxu0 0
    %1281 = vmatpush1.bf16.xpose.msra.mxu0 0
    %1282 = vmatprep.subr.bf16.mxu0 0
    %1283 = vmatpush1.bf16.xpose.msra.mxu0 0
    %1284 = vmatprep.subr.bf16.mxu0 0
    %1285 = vmatpush1.bf16.xpose.msra.mxu0 0
    %1286 = vmatprep.subr.bf16.mxu0 0
    %1287 = vmatpush1.bf16.xpose.msra.mxu0 0
    %1288 = vmatprep.subr.bf16.mxu0 0
    %1289 = vmatpush1.bf16.xpose.msra.mxu0 0
    %1290 = vmatprep.subr.bf16.mxu0 0
    %1291 = vmatpush1.bf16.xpose.msra.mxu0 0
    %1292 = vmatprep.subr.bf16.mxu0 0
    %1293 = vmatpush1.bf16.xpose.msra.mxu0 0
    %1294 = vmatprep.subr.bf16.mxu0 0
    %1295 = vmatpush1.bf16.xpose.msra.mxu0 0
    %1296 = vmatprep.subr.bf16.mxu0 0
    %1297 = vmatpush1.bf16.xpose.msra.mxu0 0
    %1298 = vmatprep.subr.bf16.mxu0 0
    %1299 = vmatpush1.bf16.xpose.msra.mxu0 0
    %1300 = vmatprep.subr.bf16.mxu0 0
    %1301 = vmatpush1.bf16.xpose.msra.mxu0 0
    %1302 = vmatprep.subr.bf16.mxu0 0
    %1303 = vmatpush1.bf16.xpose.msra.mxu0 0
    %1304 = vmatprep.subr.bf16.mxu0 0
    %1305 = vmatpush1.bf16.xpose.msra.mxu0 0
    %1306 = vmatprep.subr.bf16.mxu0 0
    %1307 = vmatpush1.bf16.xpose.msra.mxu0 0
    %1308 = vmatprep.mubr.bf16.mxu0 0
    %1309 = vmatmul.mubr.bf16.gmra.mrb[0].mxu0 %v1271
    %v1310 = vpop.f32.mrb[0].mxu0
    %v1311 = vadd.f32 0.0, %v1310
    %v1312 = vpop.f32.mrb[0].mxu0
    %v1313 = vpop.f32.mrb[0].mxu0
    %v1314 = vadd.f32 0.0, %v1313
    %v1315 = vpop.f32.mrb[0].mxu0
    %1316 = vdwg.mxu0
    %v1318 = vsel %vm483, %v668, 0
    %v1321 = vsel %vm483, %v700, 0
    %1323 = vmatprep.subr.bf16.mxu0 0
    %1324 = vmatpush1.bf16.xpose.msra.mxu0 %v1321
    %1325 = vmatprep.subr.bf16.mxu0 0
    %1326 = vmatpush1.bf16.xpose.msra.mxu0 0
    %1327 = vmatprep.subr.bf16.mxu0 0
    %1328 = vmatpush1.bf16.xpose.msra.mxu0 0
    %1329 = vmatprep.subr.bf16.mxu0 0
    %1330 = vmatpush1.bf16.xpose.msra.mxu0 0
    %1331 = vmatprep.subr.bf16.mxu0 0
    %1332 = vmatpush1.bf16.xpose.msra.mxu0 0
    %1333 = vmatprep.subr.bf16.mxu0 0
    %1334 = vmatpush1.bf16.xpose.msra.mxu0 0
    %1335 = vmatprep.subr.bf16.mxu0 0
    %1336 = vmatpush1.bf16.xpose.msra.mxu0 0
    %1337 = vmatprep.subr.bf16.mxu0 0
    %1338 = vmatpush1.bf16.xpose.msra.mxu0 0
    %1339 = vmatprep.subr.bf16.mxu0 0
    %1340 = vmatpush1.bf16.xpose.msra.mxu0 0
    %1341 = vmatprep.subr.bf16.mxu0 0
    %1342 = vmatpush1.bf16.xpose.msra.mxu0 0
    %1343 = vmatprep.subr.bf16.mxu0 0
    %1344 = vmatpush1.bf16.xpose.msra.mxu0 0
    %1345 = vmatprep.subr.bf16.mxu0 0
    %1346 = vmatpush1.bf16.xpose.msra.mxu0 0
    %1347 = vmatprep.subr.bf16.mxu0 0
    %1348 = vmatpush1.bf16.xpose.msra.mxu0 0
    %1349 = vmatprep.subr.bf16.mxu0 0
    %1350 = vmatpush1.bf16.xpose.msra.mxu0 0
    %1351 = vmatprep.subr.bf16.mxu0 0
    %1352 = vmatpush1.bf16.xpose.msra.mxu0 0
    %1353 = vmatprep.subr.bf16.mxu0 0
    %1354 = vmatpush1.bf16.xpose.msra.mxu0 0
    %1355 = vmatprep.mubr.bf16.mxu0 0
    %1356 = vmatmul.mubr.bf16.gmra.mrb[0].mxu0 %v1318
    %v1357 = vpop.f32.mrb[0].mxu0
    %v1358 = vadd.f32 0.0, %v1357
    %v1359 = vpop.f32.mrb[0].mxu0
    %v1360 = vpop.f32.mrb[0].mxu0
    %v1361 = vadd.f32 0.0, %v1360
    %v1362 = vpop.f32.mrb[0].mxu0
    %1363 = vdwg.mxu0
    %v1365 = vsel %vm483, %v670, 0
    %v1368 = vsel %vm483, %v702, 0
    %1370 = vmatprep.subr.bf16.mxu0 0
    %1371 = vmatpush1.bf16.xpose.msra.mxu0 %v1368
    %1372 = vmatprep.subr.bf16.mxu0 0
    %1373 = vmatpush1.bf16.xpose.msra.mxu0 0
    %1374 = vmatprep.subr.bf16.mxu0 0
    %1375 = vmatpush1.bf16.xpose.msra.mxu0 0
    %1376 = vmatprep.subr.bf16.mxu0 0
    %1377 = vmatpush1.bf16.xpose.msra.mxu0 0
    %1378 = vmatprep.subr.bf16.mxu0 0
    %1379 = vmatpush1.bf16.xpose.msra.mxu0 0
    %1380 = vmatprep.subr.bf16.mxu0 0
    %1381 = vmatpush1.bf16.xpose.msra.mxu0 0
    %1382 = vmatprep.subr.bf16.mxu0 0
    %1383 = vmatpush1.bf16.xpose.msra.mxu0 0
    %1384 = vmatprep.subr.bf16.mxu0 0
    %1385 = vmatpush1.bf16.xpose.msra.mxu0 0
    %1386 = vmatprep.subr.bf16.mxu0 0
    %1387 = vmatpush1.bf16.xpose.msra.mxu0 0
    %1388 = vmatprep.subr.bf16.mxu0 0
    %1389 = vmatpush1.bf16.xpose.msra.mxu0 0
    %1390 = vmatprep.subr.bf16.mxu0 0
    %1391 = vmatpush1.bf16.xpose.msra.mxu0 0
    %1392 = vmatprep.subr.bf16.mxu0 0
    %1393 = vmatpush1.bf16.xpose.msra.mxu0 0
    %1394 = vmatprep.subr.bf16.mxu0 0
    %1395 = vmatpush1.bf16.xpose.msra.mxu0 0
    %1396 = vmatprep.subr.bf16.mxu0 0
    %1397 = vmatpush1.bf16.xpose.msra.mxu0 0
    %1398 = vmatprep.subr.bf16.mxu0 0
    %1399 = vmatpush1.bf16.xpose.msra.mxu0 0
    %1400 = vmatprep.subr.bf16.mxu0 0
    %1401 = vmatpush1.bf16.xpose.msra.mxu0 0
    %1402 = vmatprep.mubr.bf16.mxu0 0
    %1403 = vmatmul.mubr.bf16.gmra.mrb[0].mxu0 %v1365
    %v1404 = vpop.f32.mrb[0].mxu0
    %v1405 = vadd.f32 0.0, %v1404
    %v1406 = vpop.f32.mrb[0].mxu0
    %v1407 = vpop.f32.mrb[0].mxu0
    %v1408 = vadd.f32 0.0, %v1407
    %v1409 = vpop.f32.mrb[0].mxu0
    %1410 = vdwg.mxu0
    %v1412 = vsel %vm483, %v672, 0
    %v1415 = vsel %vm483, %v704, 0
    %1417 = vmatprep.subr.bf16.mxu0 0
    %1418 = vmatpush1.bf16.xpose.msra.mxu0 %v1415
    %1419 = vmatprep.subr.bf16.mxu0 0
    %1420 = vmatpush1.bf16.xpose.msra.mxu0 0
    %1421 = vmatprep.subr.bf16.mxu0 0
    %1422 = vmatpush1.bf16.xpose.msra.mxu0 0
    %1423 = vmatprep.subr.bf16.mxu0 0
    %1424 = vmatpush1.bf16.xpose.msra.mxu0 0
    %1425 = vmatprep.subr.bf16.mxu0 0
    %1426 = vmatpush1.bf16.xpose.msra.mxu0 0
    %1427 = vmatprep.subr.bf16.mxu0 0
    %1428 = vmatpush1.bf16.xpose.msra.mxu0 0
    %1429 = vmatprep.subr.bf16.mxu0 0
    %1430 = vmatpush1.bf16.xpose.msra.mxu0 0
    %1431 = vmatprep.subr.bf16.mxu0 0
    %1432 = vmatpush1.bf16.xpose.msra.mxu0 0
    %1433 = vmatprep.subr.bf16.mxu0 0
    %1434 = vmatpush1.bf16.xpose.msra.mxu0 0
    %1435 = vmatprep.subr.bf16.mxu0 0
    %1436 = vmatpush1.bf16.xpose.msra.mxu0 0
    %1437 = vmatprep.subr.bf16.mxu0 0
    %1438 = vmatpush1.bf16.xpose.msra.mxu0 0
    %1439 = vmatprep.subr.bf16.mxu0 0
    %1440 = vmatpush1.bf16.xpose.msra.mxu0 0
    %1441 = vmatprep.subr.bf16.mxu0 0
    %1442 = vmatpush1.bf16.xpose.msra.mxu0 0
    %1443 = vmatprep.subr.bf16.mxu0 0
    %1444 = vmatpush1.bf16.xpose.msra.mxu0 0
    %1445 = vmatprep.subr.bf16.mxu0 0
    %1446 = vmatpush1.bf16.xpose.msra.mxu0 0
    %1447 = vmatprep.subr.bf16.mxu0 0
    %1448 = vmatpush1.bf16.xpose.msra.mxu0 0
    %1449 = vmatprep.mubr.bf16.mxu0 0
    %1450 = vmatmul.mubr.bf16.gmra.mrb[0].mxu0 %v1412
    %v1451 = vpop.f32.mrb[0].mxu0
    %v1452 = vadd.f32 0.0, %v1451
    %v1453 = vpop.f32.mrb[0].mxu0
    %v1454 = vpop.f32.mrb[0].mxu0
    %v1455 = vadd.f32 0.0, %v1454
    %v1456 = vpop.f32.mrb[0].mxu0
    %1457 = vdwg.mxu0
    %v1459 = vsel %vm483, %v674, 0
    %v1462 = vsel %vm483, %v706, 0
    %1464 = vmatprep.subr.bf16.mxu0 0
    %1465 = vmatpush1.bf16.xpose.msra.mxu0 %v1462
    %1466 = vmatprep.subr.bf16.mxu0 0
    %1467 = vmatpush1.bf16.xpose.msra.mxu0 0
    %1468 = vmatprep.subr.bf16.mxu0 0
    %1469 = vmatpush1.bf16.xpose.msra.mxu0 0
    %1470 = vmatprep.subr.bf16.mxu0 0
    %1471 = vmatpush1.bf16.xpose.msra.mxu0 0
    %1472 = vmatprep.subr.bf16.mxu0 0
    %1473 = vmatpush1.bf16.xpose.msra.mxu0 0
    %1474 = vmatprep.subr.bf16.mxu0 0
    %1475 = vmatpush1.bf16.xpose.msra.mxu0 0
    %1476 = vmatprep.subr.bf16.mxu0 0
    %1477 = vmatpush1.bf16.xpose.msra.mxu0 0
    %1478 = vmatprep.subr.bf16.mxu0 0
    %1479 = vmatpush1.bf16.xpose.msra.mxu0 0
    %1480 = vmatprep.subr.bf16.mxu0 0
    %1481 = vmatpush1.bf16.xpose.msra.mxu0 0
    %1482 = vmatprep.subr.bf16.mxu0 0
    %1483 = vmatpush1.bf16.xpose.msra.mxu0 0
    %1484 = vmatprep.subr.bf16.mxu0 0
    %1485 = vmatpush1.bf16.xpose.msra.mxu0 0
    %1486 = vmatprep.subr.bf16.mxu0 0
    %1487 = vmatpush1.bf16.xpose.msra.mxu0 0
    %1488 = vmatprep.subr.bf16.mxu0 0
    %1489 = vmatpush1.bf16.xpose.msra.mxu0 0
    %1490 = vmatprep.subr.bf16.mxu0 0
    %1491 = vmatpush1.bf16.xpose.msra.mxu0 0
    %1492 = vmatprep.subr.bf16.mxu0 0
    %1493 = vmatpush1.bf16.xpose.msra.mxu0 0
    %1494 = vmatprep.subr.bf16.mxu0 0
    %1495 = vmatpush1.bf16.xpose.msra.mxu0 0
    %1496 = vmatprep.mubr.bf16.mxu0 0
    %1497 = vmatmul.mubr.bf16.gmra.mrb[0].mxu0 %v1459
    %v1498 = vpop.f32.mrb[0].mxu0
    %v1499 = vadd.f32 0.0, %v1498
    %v1500 = vpop.f32.mrb[0].mxu0
    %v1501 = vpop.f32.mrb[0].mxu0
    %v1502 = vadd.f32 0.0, %v1501
    %v1503 = vpop.f32.mrb[0].mxu0
    %1504 = vdwg.mxu0
    %v1505 = vmul.f32 %v794, 0.25
    %v1506 = vmul.f32 %v797, 0.25
    %v1507 = vmul.f32 %v841, 0.25
    %v1508 = vmul.f32 %v844, 0.25
    %v1509 = vmul.f32 %v888, 0.25
    %v1510 = vmul.f32 %v891, 0.25
    %v1511 = vmul.f32 %v935, 0.25
    %v1512 = vmul.f32 %v938, 0.25
    %v1513 = vmul.f32 %v982, 0.25
    %v1514 = vmul.f32 %v985, 0.25
    %v1515 = vmul.f32 %v1029, 0.25
    %v1516 = vmul.f32 %v1032, 0.25
    %v1517 = vmul.f32 %v1076, 0.25
    %v1518 = vmul.f32 %v1079, 0.25
    %v1519 = vmul.f32 %v1123, 0.25
    %v1520 = vmul.f32 %v1126, 0.25
    %v1521 = vmul.f32 %v1170, 0.25
    %v1522 = vmul.f32 %v1173, 0.25
    %v1523 = vmul.f32 %v1217, 0.25
    %v1524 = vmul.f32 %v1220, 0.25
    %v1525 = vmul.f32 %v1264, 0.25
    %v1526 = vmul.f32 %v1267, 0.25
    %v1527 = vmul.f32 %v1311, 0.25
    %v1528 = vmul.f32 %v1314, 0.25
    %v1529 = vmul.f32 %v1358, 0.25
    %v1530 = vmul.f32 %v1361, 0.25
    %v1531 = vmul.f32 %v1405, 0.25
    %v1532 = vmul.f32 %v1408, 0.25
    %v1533 = vmul.f32 %v1452, 0.25
    %v1534 = vmul.f32 %v1455, 0.25
    %v1535 = vmul.f32 %v1499, 0.25
    %v1536 = vmul.f32 %v1502, 0.25
    %v1537 = vlaneseq
    %v1538 = vshrl.u32 %v1537, 7
    %v1539 = vadd.s32 %v1538, 8
    %vm1540 = vcmp.gt.s32.totalorder %v565, %v1538
    %vm1541 = vcmp.gt.s32.totalorder %v565, %v1539
    %v1542 = vsel %vm1540, -inf, 0.0
    %v1543 = vsel %vm1541, -inf, 0.0
    %v1544 = vadd.f32 %v1505, %v1542
    %v1545 = vadd.f32 %v1506, %v1543
    %v1546 = vadd.f32 %v1507, %v1542
    %v1547 = vadd.f32 %v1508, %v1543
    %v1548 = vadd.f32 %v1509, %v1542
    %v1549 = vadd.f32 %v1510, %v1543
    %v1550 = vadd.f32 %v1511, %v1542
    %v1551 = vadd.f32 %v1512, %v1543
    %v1552 = vadd.f32 %v1513, %v1542
    %v1553 = vadd.f32 %v1514, %v1543
    %v1554 = vadd.f32 %v1515, %v1542
    %v1555 = vadd.f32 %v1516, %v1543
    %v1556 = vadd.f32 %v1517, %v1542
    %v1557 = vadd.f32 %v1518, %v1543
    %v1558 = vadd.f32 %v1519, %v1542
    %v1559 = vadd.f32 %v1520, %v1543
    %v1560 = vadd.f32 %v1521, %v1542
    %v1561 = vadd.f32 %v1522, %v1543
    %v1562 = vadd.f32 %v1523, %v1542
    %v1563 = vadd.f32 %v1524, %v1543
    %v1564 = vadd.f32 %v1525, %v1542
    %v1565 = vadd.f32 %v1526, %v1543
    %v1566 = vadd.f32 %v1527, %v1542
    %v1567 = vadd.f32 %v1528, %v1543
    %v1568 = vadd.f32 %v1529, %v1542
    %v1569 = vadd.f32 %v1530, %v1543
    %v1570 = vadd.f32 %v1531, %v1542
    %v1571 = vadd.f32 %v1532, %v1543
    %v1572 = vadd.f32 %v1533, %v1542
    %v1573 = vadd.f32 %v1534, %v1543
    %v1574 = vadd.f32 %v1535, %v1542
    %v1575 = vadd.f32 %v1536, %v1543
    %v1576 = vsel %vm483, %v1544, -inf
    %1577 = vmax.xlane.f32.xlu0 %v1576
    %v1578 = vpop.xlane.xlu0 %1577
    %v1579 = vsel %vm483, %v1545, -inf
    %1580 = vmax.xlane.f32.xlu0 %v1579
    %v1581 = vpop.xlane.xlu0 %1580
    %v1582 = vsel %vm483, %v1546, -inf
    %1583 = vmax.xlane.f32.xlu0 %v1582
    %v1584 = vpop.xlane.xlu0 %1583
    %v1585 = vsel %vm483, %v1547, -inf
    %1586 = vmax.xlane.f32.xlu0 %v1585
    %v1587 = vpop.xlane.xlu0 %1586
    %v1588 = vsel %vm483, %v1548, -inf
    %1589 = vmax.xlane.f32.xlu0 %v1588
    %v1590 = vpop.xlane.xlu0 %1589
    %v1591 = vsel %vm483, %v1549, -inf
    %1592 = vmax.xlane.f32.xlu0 %v1591
    %v1593 = vpop.xlane.xlu0 %1592
    %v1594 = vsel %vm483, %v1550, -inf
    %1595 = vmax.xlane.f32.xlu0 %v1594
    %v1596 = vpop.xlane.xlu0 %1595
    %v1597 = vsel %vm483, %v1551, -inf
    %1598 = vmax.xlane.f32.xlu0 %v1597
    %v1599 = vpop.xlane.xlu0 %1598
    %v1600 = vsel %vm483, %v1552, -inf
    %1601 = vmax.xlane.f32.xlu0 %v1600
    %v1602 = vpop.xlane.xlu0 %1601
    %v1603 = vsel %vm483, %v1553, -inf
    %1604 = vmax.xlane.f32.xlu0 %v1603
    %v1605 = vpop.xlane.xlu0 %1604
    %v1606 = vsel %vm483, %v1554, -inf
    %1607 = vmax.xlane.f32.xlu0 %v1606
    %v1608 = vpop.xlane.xlu0 %1607
    %v1609 = vsel %vm483, %v1555, -inf
    %1610 = vmax.xlane.f32.xlu0 %v1609
    %v1611 = vpop.xlane.xlu0 %1610
    %v1612 = vsel %vm483, %v1556, -inf
    %1613 = vmax.xlane.f32.xlu0 %v1612
    %v1614 = vpop.xlane.xlu0 %1613
    %v1615 = vsel %vm483, %v1557, -inf
    %1616 = vmax.xlane.f32.xlu0 %v1615
    %v1617 = vpop.xlane.xlu0 %1616
    %v1618 = vsel %vm483, %v1558, -inf
    %1619 = vmax.xlane.f32.xlu0 %v1618
    %v1620 = vpop.xlane.xlu0 %1619
    %v1621 = vsel %vm483, %v1559, -inf
    %1622 = vmax.xlane.f32.xlu0 %v1621
    %v1623 = vpop.xlane.xlu0 %1622
    %v1624 = vsel %vm483, %v1560, -inf
    %1625 = vmax.xlane.f32.xlu0 %v1624
    %v1626 = vpop.xlane.xlu0 %1625
    %v1627 = vsel %vm483, %v1561, -inf
    %1628 = vmax.xlane.f32.xlu0 %v1627
    %v1629 = vpop.xlane.xlu0 %1628
    %v1630 = vsel %vm483, %v1562, -inf
    %1631 = vmax.xlane.f32.xlu0 %v1630
    %v1632 = vpop.xlane.xlu0 %1631
    %v1633 = vsel %vm483, %v1563, -inf
    %1634 = vmax.xlane.f32.xlu0 %v1633
    %v1635 = vpop.xlane.xlu0 %1634
    %v1636 = vsel %vm483, %v1564, -inf
    %1637 = vmax.xlane.f32.xlu0 %v1636
    %v1638 = vpop.xlane.xlu0 %1637
    %v1639 = vsel %vm483, %v1565, -inf
    %1640 = vmax.xlane.f32.xlu0 %v1639
    %v1641 = vpop.xlane.xlu0 %1640
    %v1642 = vsel %vm483, %v1566, -inf
    %1643 = vmax.xlane.f32.xlu0 %v1642
    %v1644 = vpop.xlane.xlu0 %1643
    %v1645 = vsel %vm483, %v1567, -inf
    %1646 = vmax.xlane.f32.xlu0 %v1645
    %v1647 = vpop.xlane.xlu0 %1646
    %v1648 = vsel %vm483, %v1568, -inf
    %1649 = vmax.xlane.f32.xlu0 %v1648
    %v1650 = vpop.xlane.xlu0 %1649
    %v1651 = vsel %vm483, %v1569, -inf
    %1652 = vmax.xlane.f32.xlu0 %v1651
    %v1653 = vpop.xlane.xlu0 %1652
    %v1654 = vsel %vm483, %v1570, -inf
    %1655 = vmax.xlane.f32.xlu0 %v1654
    %v1656 = vpop.xlane.xlu0 %1655
    %v1657 = vsel %vm483, %v1571, -inf
    %1658 = vmax.xlane.f32.xlu0 %v1657
    %v1659 = vpop.xlane.xlu0 %1658
    %v1660 = vsel %vm483, %v1572, -inf
    %1661 = vmax.xlane.f32.xlu0 %v1660
    %v1662 = vpop.xlane.xlu0 %1661
    %v1663 = vsel %vm483, %v1573, -inf
    %1664 = vmax.xlane.f32.xlu0 %v1663
    %v1665 = vpop.xlane.xlu0 %1664
    %v1666 = vsel %vm483, %v1574, -inf
    %1667 = vmax.xlane.f32.xlu0 %v1666
    %v1668 = vpop.xlane.xlu0 %1667
    %v1669 = vsel %vm483, %v1575, -inf
    %1670 = vmax.xlane.f32.xlu0 %v1669
    %v1671 = vpop.xlane.xlu0 %1670
    %v1672 = vsub.f32 %v1544, %v1578
    %v1673 = vsub.f32 %v1545, %v1581
    %v1674 = vsub.f32 %v1546, %v1584
    %v1675 = vsub.f32 %v1547, %v1587
    %v1676 = vsub.f32 %v1548, %v1590
    %v1677 = vsub.f32 %v1549, %v1593
    %v1678 = vsub.f32 %v1550, %v1596
    %v1679 = vsub.f32 %v1551, %v1599
    %v1680 = vsub.f32 %v1552, %v1602
    %v1681 = vsub.f32 %v1553, %v1605
    %v1682 = vsub.f32 %v1554, %v1608
    %v1683 = vsub.f32 %v1555, %v1611
    %v1684 = vsub.f32 %v1556, %v1614
    %v1685 = vsub.f32 %v1557, %v1617
    %v1686 = vsub.f32 %v1558, %v1620
    %v1687 = vsub.f32 %v1559, %v1623
    %v1688 = vsub.f32 %v1560, %v1626
    %v1689 = vsub.f32 %v1561, %v1629
    %v1690 = vsub.f32 %v1562, %v1632
    %v1691 = vsub.f32 %v1563, %v1635
    %v1692 = vsub.f32 %v1564, %v1638
    %v1693 = vsub.f32 %v1565, %v1641
    %v1694 = vsub.f32 %v1566, %v1644
    %v1695 = vsub.f32 %v1567, %v1647
    %v1696 = vsub.f32 %v1568, %v1650
    %v1697 = vsub.f32 %v1569, %v1653
    %v1698 = vsub.f32 %v1570, %v1656
    %v1699 = vsub.f32 %v1571, %v1659
    %v1700 = vsub.f32 %v1572, %v1662
    %v1701 = vsub.f32 %v1573, %v1665
    %v1702 = vsub.f32 %v1574, %v1668
    %v1703 = vsub.f32 %v1575, %v1671
    %v1704 = vmul.f32 %v1672, 1.442695
    %v1705 = vpow.pop %v1704
    %v1706 = vmul.f32 %v1673, 1.442695
    %v1707 = vpow.pop %v1706
    %v1708 = vmul.f32 %v1674, 1.442695
    %v1709 = vpow.pop %v1708
    %v1710 = vmul.f32 %v1675, 1.442695
    %v1711 = vpow.pop %v1710
    %v1712 = vmul.f32 %v1676, 1.442695
    %v1713 = vpow.pop %v1712
    %v1714 = vmul.f32 %v1677, 1.442695
    %v1715 = vpow.pop %v1714
    %v1716 = vmul.f32 %v1678, 1.442695
    %v1717 = vpow.pop %v1716
    %v1718 = vmul.f32 %v1679, 1.442695
    %v1719 = vpow.pop %v1718
    %v1720 = vmul.f32 %v1680, 1.442695
    %v1721 = vpow.pop %v1720
    %v1722 = vmul.f32 %v1681, 1.442695
    %v1723 = vpow.pop %v1722
    %v1724 = vmul.f32 %v1682, 1.442695
    %v1725 = vpow.pop %v1724
    %v1726 = vmul.f32 %v1683, 1.442695
    %v1727 = vpow.pop %v1726
    %v1728 = vmul.f32 %v1684, 1.442695
    %v1729 = vpow.pop %v1728
    %v1730 = vmul.f32 %v1685, 1.442695
    %v1731 = vpow.pop %v1730
    %v1732 = vmul.f32 %v1686, 1.442695
    %v1733 = vpow.pop %v1732
    %v1734 = vmul.f32 %v1687, 1.442695
    %v1735 = vpow.pop %v1734
    %v1736 = vmul.f32 %v1688, 1.442695
    %v1737 = vpow.pop %v1736
    %v1738 = vmul.f32 %v1689, 1.442695
    %v1739 = vpow.pop %v1738
    %v1740 = vmul.f32 %v1690, 1.442695
    %v1741 = vpow.pop %v1740
    %v1742 = vmul.f32 %v1691, 1.442695
    %v1743 = vpow.pop %v1742
    %v1744 = vmul.f32 %v1692, 1.442695
    %v1745 = vpow.pop %v1744
    %v1746 = vmul.f32 %v1693, 1.442695
    %v1747 = vpow.pop %v1746
    %v1748 = vmul.f32 %v1694, 1.442695
    %v1749 = vpow.pop %v1748
    %v1750 = vmul.f32 %v1695, 1.442695
    %v1751 = vpow.pop %v1750
    %v1752 = vmul.f32 %v1696, 1.442695
    %v1753 = vpow.pop %v1752
    %v1754 = vmul.f32 %v1697, 1.442695
    %v1755 = vpow.pop %v1754
    %v1756 = vmul.f32 %v1698, 1.442695
    %v1757 = vpow.pop %v1756
    %v1758 = vmul.f32 %v1699, 1.442695
    %v1759 = vpow.pop %v1758
    %v1760 = vmul.f32 %v1700, 1.442695
    %v1761 = vpow.pop %v1760
    %v1762 = vmul.f32 %v1701, 1.442695
    %v1763 = vpow.pop %v1762
    %v1764 = vmul.f32 %v1702, 1.442695
    %v1765 = vpow.pop %v1764
    %v1766 = vmul.f32 %v1703, 1.442695
    %v1767 = vpow.pop %v1766
    %v1768 = vsel %vm483, %v1705, 0.0
    %1769 = vadd.xlane.f32.xlu0 %v1768
    %v1770 = vpop.xlane.xlu0 %1769
    %v1771 = vsel %vm483, %v1707, 0.0
    %1772 = vadd.xlane.f32.xlu0 %v1771
    %v1773 = vpop.xlane.xlu0 %1772
    %v1774 = vsel %vm483, %v1709, 0.0
    %1775 = vadd.xlane.f32.xlu0 %v1774
    %v1776 = vpop.xlane.xlu0 %1775
    %v1777 = vsel %vm483, %v1711, 0.0
    %1778 = vadd.xlane.f32.xlu0 %v1777
    %v1779 = vpop.xlane.xlu0 %1778
    %v1780 = vsel %vm483, %v1713, 0.0
    %1781 = vadd.xlane.f32.xlu0 %v1780
    %v1782 = vpop.xlane.xlu0 %1781
    %v1783 = vsel %vm483, %v1715, 0.0
    %1784 = vadd.xlane.f32.xlu0 %v1783
    %v1785 = vpop.xlane.xlu0 %1784
    %v1786 = vsel %vm483, %v1717, 0.0
    %1787 = vadd.xlane.f32.xlu0 %v1786
    %v1788 = vpop.xlane.xlu0 %1787
    %v1789 = vsel %vm483, %v1719, 0.0
    %1790 = vadd.xlane.f32.xlu0 %v1789
    %v1791 = vpop.xlane.xlu0 %1790
    %v1792 = vsel %vm483, %v1721, 0.0
    %1793 = vadd.xlane.f32.xlu0 %v1792
    %v1794 = vpop.xlane.xlu0 %1793
    %v1795 = vsel %vm483, %v1723, 0.0
    %1796 = vadd.xlane.f32.xlu0 %v1795
    %v1797 = vpop.xlane.xlu0 %1796
    %v1798 = vsel %vm483, %v1725, 0.0
    %1799 = vadd.xlane.f32.xlu0 %v1798
    %v1800 = vpop.xlane.xlu0 %1799
    %v1801 = vsel %vm483, %v1727, 0.0
    %1802 = vadd.xlane.f32.xlu0 %v1801
    %v1803 = vpop.xlane.xlu0 %1802
    %v1804 = vsel %vm483, %v1729, 0.0
    %1805 = vadd.xlane.f32.xlu0 %v1804
    %v1806 = vpop.xlane.xlu0 %1805
    %v1807 = vsel %vm483, %v1731, 0.0
    %1808 = vadd.xlane.f32.xlu0 %v1807
    %v1809 = vpop.xlane.xlu0 %1808
    %v1810 = vsel %vm483, %v1733, 0.0
    %1811 = vadd.xlane.f32.xlu0 %v1810
    %v1812 = vpop.xlane.xlu0 %1811
    %v1813 = vsel %vm483, %v1735, 0.0
    %1814 = vadd.xlane.f32.xlu0 %v1813
    %v1815 = vpop.xlane.xlu0 %1814
    %v1816 = vsel %vm483, %v1737, 0.0
    %1817 = vadd.xlane.f32.xlu0 %v1816
    %v1818 = vpop.xlane.xlu0 %1817
    %v1819 = vsel %vm483, %v1739, 0.0
    %1820 = vadd.xlane.f32.xlu0 %v1819
    %v1821 = vpop.xlane.xlu0 %1820
    %v1822 = vsel %vm483, %v1741, 0.0
    %1823 = vadd.xlane.f32.xlu0 %v1822
    %v1824 = vpop.xlane.xlu0 %1823
    %v1825 = vsel %vm483, %v1743, 0.0
    %1826 = vadd.xlane.f32.xlu0 %v1825
    %v1827 = vpop.xlane.xlu0 %1826
    %v1828 = vsel %vm483, %v1745, 0.0
    %1829 = vadd.xlane.f32.xlu0 %v1828
    %v1830 = vpop.xlane.xlu0 %1829
    %v1831 = vsel %vm483, %v1747, 0.0
    %1832 = vadd.xlane.f32.xlu0 %v1831
    %v1833 = vpop.xlane.xlu0 %1832
    %v1834 = vsel %vm483, %v1749, 0.0
    %1835 = vadd.xlane.f32.xlu0 %v1834
    %v1836 = vpop.xlane.xlu0 %1835
    %v1837 = vsel %vm483, %v1751, 0.0
    %1838 = vadd.xlane.f32.xlu0 %v1837
    %v1839 = vpop.xlane.xlu0 %1838
    %v1840 = vsel %vm483, %v1753, 0.0
    %1841 = vadd.xlane.f32.xlu0 %v1840
    %v1842 = vpop.xlane.xlu0 %1841
    %v1843 = vsel %vm483, %v1755, 0.0
    %1844 = vadd.xlane.f32.xlu0 %v1843
    %v1845 = vpop.xlane.xlu0 %1844
    %v1846 = vsel %vm483, %v1757, 0.0
    %1847 = vadd.xlane.f32.xlu0 %v1846
    %v1848 = vpop.xlane.xlu0 %1847
    %v1849 = vsel %vm483, %v1759, 0.0
    %1850 = vadd.xlane.f32.xlu0 %v1849
    %v1851 = vpop.xlane.xlu0 %1850
    %v1852 = vsel %vm483, %v1761, 0.0
    %1853 = vadd.xlane.f32.xlu0 %v1852
    %v1854 = vpop.xlane.xlu0 %1853
    %v1855 = vsel %vm483, %v1763, 0.0
    %1856 = vadd.xlane.f32.xlu0 %v1855
    %v1857 = vpop.xlane.xlu0 %1856
    %v1858 = vsel %vm483, %v1765, 0.0
    %1859 = vadd.xlane.f32.xlu0 %v1858
    %v1860 = vpop.xlane.xlu0 %1859
    %v1861 = vsel %vm483, %v1767, 0.0
    %1862 = vadd.xlane.f32.xlu0 %v1861
    %v1863 = vpop.xlane.xlu0 %1862
    %v1864 = vrcp.pop %v1770
    %v1865 = vrcp.pop %v1773
    %v1866 = vrcp.pop %v1776
    %v1867 = vrcp.pop %v1779
    %v1868 = vrcp.pop %v1782
    %v1869 = vrcp.pop %v1785
    %v1870 = vrcp.pop %v1788
    %v1871 = vrcp.pop %v1791
    %v1872 = vrcp.pop %v1794
    %v1873 = vrcp.pop %v1797
    %v1874 = vrcp.pop %v1800
    %v1875 = vrcp.pop %v1803
    %v1876 = vrcp.pop %v1806
    %v1877 = vrcp.pop %v1809
    %v1878 = vrcp.pop %v1812
    %v1879 = vrcp.pop %v1815
    %v1880 = vrcp.pop %v1818
    %v1881 = vrcp.pop %v1821
    %v1882 = vrcp.pop %v1824
    %v1883 = vrcp.pop %v1827
    %v1884 = vrcp.pop %v1830
    %v1885 = vrcp.pop %v1833
    %v1886 = vrcp.pop %v1836
    %v1887 = vrcp.pop %v1839
    %v1888 = vrcp.pop %v1842
    %v1889 = vrcp.pop %v1845
    %v1890 = vrcp.pop %v1848
    %v1891 = vrcp.pop %v1851
    %v1892 = vrcp.pop %v1854
    %v1893 = vrcp.pop %v1857
    %v1894 = vrcp.pop %v1860
    %v1895 = vrcp.pop %v1863
    %v1896 = vmul.f32 %v1705, %v1864
    %v1897 = vmul.f32 %v1707, %v1865
    %v1898 = vmul.f32 %v1709, %v1866
    %v1899 = vmul.f32 %v1711, %v1867
    %v1900 = vmul.f32 %v1713, %v1868
    %v1901 = vmul.f32 %v1715, %v1869
    %v1902 = vmul.f32 %v1717, %v1870
    %v1903 = vmul.f32 %v1719, %v1871
    %v1904 = vmul.f32 %v1721, %v1872
    %v1905 = vmul.f32 %v1723, %v1873
    %v1906 = vmul.f32 %v1725, %v1874
    %v1907 = vmul.f32 %v1727, %v1875
    %v1908 = vmul.f32 %v1729, %v1876
    %v1909 = vmul.f32 %v1731, %v1877
    %v1910 = vmul.f32 %v1733, %v1878
    %v1911 = vmul.f32 %v1735, %v1879
    %v1912 = vmul.f32 %v1737, %v1880
    %v1913 = vmul.f32 %v1739, %v1881
    %v1914 = vmul.f32 %v1741, %v1882
    %v1915 = vmul.f32 %v1743, %v1883
    %v1916 = vmul.f32 %v1745, %v1884
    %v1917 = vmul.f32 %v1747, %v1885
    %v1918 = vmul.f32 %v1749, %v1886
    %v1919 = vmul.f32 %v1751, %v1887
    %v1920 = vmul.f32 %v1753, %v1888
    %v1921 = vmul.f32 %v1755, %v1889
    %v1922 = vmul.f32 %v1757, %v1890
    %v1923 = vmul.f32 %v1759, %v1891
    %v1924 = vmul.f32 %v1761, %v1892
    %v1925 = vmul.f32 %v1763, %v1893
    %v1926 = vmul.f32 %v1765, %v1894
    %v1927 = vmul.f32 %v1767, %v1895
    %v1928 = vpack.c.bf16 %v1897, %v1896
    %v1929 = vpack.c.bf16 %v1899, %v1898
    %v1930 = vpack.c.bf16 %v1901, %v1900
    %v1931 = vpack.c.bf16 %v1903, %v1902
    %v1932 = vpack.c.bf16 %v1905, %v1904
    %v1933 = vpack.c.bf16 %v1907, %v1906
    %v1934 = vpack.c.bf16 %v1909, %v1908
    %v1935 = vpack.c.bf16 %v1911, %v1910
    %v1936 = vpack.c.bf16 %v1913, %v1912
    %v1937 = vpack.c.bf16 %v1915, %v1914
    %v1938 = vpack.c.bf16 %v1917, %v1916
    %v1939 = vpack.c.bf16 %v1919, %v1918
    %v1940 = vpack.c.bf16 %v1921, %v1920
    %v1941 = vpack.c.bf16 %v1923, %v1922
    %v1942 = vpack.c.bf16 %v1925, %v1924
    %v1943 = vpack.c.bf16 %v1927, %v1926
    %v1945 = vsel %vm483, %v1928, 0
    %1947 = vmatprep.subr.bf16.mxu0 0
    %1948 = vmatpush1.bf16.msra.mxu0 %v707
    %1949 = vmatprep.subr.bf16.mxu0 0
    %1950 = vmatpush1.bf16.msra.mxu0 0
    %1951 = vmatprep.subr.bf16.mxu0 0
    %1952 = vmatpush1.bf16.msra.mxu0 0
    %1953 = vmatprep.subr.bf16.mxu0 0
    %1954 = vmatpush1.bf16.msra.mxu0 0
    %1955 = vmatprep.subr.bf16.mxu0 0
    %1956 = vmatpush1.bf16.msra.mxu0 0
    %1957 = vmatprep.subr.bf16.mxu0 0
    %1958 = vmatpush1.bf16.msra.mxu0 0
    %1959 = vmatprep.subr.bf16.mxu0 0
    %1960 = vmatpush1.bf16.msra.mxu0 0
    %1961 = vmatprep.subr.bf16.mxu0 0
    %1962 = vmatpush1.bf16.msra.mxu0 0
    %1963 = vmatprep.subr.bf16.mxu0 0
    %1964 = vmatpush1.bf16.msra.mxu0 0
    %1965 = vmatprep.subr.bf16.mxu0 0
    %1966 = vmatpush1.bf16.msra.mxu0 0
    %1967 = vmatprep.subr.bf16.mxu0 0
    %1968 = vmatpush1.bf16.msra.mxu0 0
    %1969 = vmatprep.subr.bf16.mxu0 0
    %1970 = vmatpush1.bf16.msra.mxu0 0
    %1971 = vmatprep.subr.bf16.mxu0 0
    %1972 = vmatpush1.bf16.msra.mxu0 0
    %1973 = vmatprep.subr.bf16.mxu0 0
    %1974 = vmatpush1.bf16.msra.mxu0 0
    %1975 = vmatprep.subr.bf16.mxu0 0
    %1976 = vmatpush1.bf16.msra.mxu0 0
    %1977 = vmatprep.subr.bf16.mxu0 0
    %1978 = vmatpush1.bf16.msra.mxu0 0
    %1979 = vmatprep.mubr.bf16.mxu0 0
    %1980 = vmatmul.mubr.bf16.gmra.mrb[0].mxu0 %v1945
    %v1981 = vpop.f32.mrb[0].mxu0
    %v1982 = vadd.f32 0.0, %v1981
    %v1983 = vpop.f32.mrb[0].mxu0
    %v1984 = vpop.f32.mrb[0].mxu0
    %v1985 = vadd.f32 0.0, %v1984
    %v1986 = vpop.f32.mrb[0].mxu0
    %1987 = vdwg.mxu0
    %v1989 = vsel %vm483, %v1929, 0
    %1991 = vmatprep.subr.bf16.mxu0 0
    %1992 = vmatpush1.bf16.msra.mxu0 %v708
    %1993 = vmatprep.subr.bf16.mxu0 0
    %1994 = vmatpush1.bf16.msra.mxu0 0
    %1995 = vmatprep.subr.bf16.mxu0 0
    %1996 = vmatpush1.bf16.msra.mxu0 0
    %1997 = vmatprep.subr.bf16.mxu0 0
    %1998 = vmatpush1.bf16.msra.mxu0 0
    %1999 = vmatprep.subr.bf16.mxu0 0
    %2000 = vmatpush1.bf16.msra.mxu0 0
    %2001 = vmatprep.subr.bf16.mxu0 0
    %2002 = vmatpush1.bf16.msra.mxu0 0
    %2003 = vmatprep.subr.bf16.mxu0 0
    %2004 = vmatpush1.bf16.msra.mxu0 0
    %2005 = vmatprep.subr.bf16.mxu0 0
    %2006 = vmatpush1.bf16.msra.mxu0 0
    %2007 = vmatprep.subr.bf16.mxu0 0
    %2008 = vmatpush1.bf16.msra.mxu0 0
    %2009 = vmatprep.subr.bf16.mxu0 0
    %2010 = vmatpush1.bf16.msra.mxu0 0
    %2011 = vmatprep.subr.bf16.mxu0 0
    %2012 = vmatpush1.bf16.msra.mxu0 0
    %2013 = vmatprep.subr.bf16.mxu0 0
    %2014 = vmatpush1.bf16.msra.mxu0 0
    %2015 = vmatprep.subr.bf16.mxu0 0
    %2016 = vmatpush1.bf16.msra.mxu0 0
    %2017 = vmatprep.subr.bf16.mxu0 0
    %2018 = vmatpush1.bf16.msra.mxu0 0
    %2019 = vmatprep.subr.bf16.mxu0 0
    %2020 = vmatpush1.bf16.msra.mxu0 0
    %2021 = vmatprep.subr.bf16.mxu0 0
    %2022 = vmatpush1.bf16.msra.mxu0 0
    %2023 = vmatprep.mubr.bf16.mxu0 0
    %2024 = vmatmul.mubr.bf16.gmra.mrb[0].mxu0 %v1989
    %v2025 = vpop.f32.mrb[0].mxu0
    %v2026 = vadd.f32 0.0, %v2025
    %v2027 = vpop.f32.mrb[0].mxu0
    %v2028 = vpop.f32.mrb[0].mxu0
    %v2029 = vadd.f32 0.0, %v2028
    %v2030 = vpop.f32.mrb[0].mxu0
    %2031 = vdwg.mxu0
    %v2033 = vsel %vm483, %v1930, 0
    %2035 = vmatprep.subr.bf16.mxu0 0
    %2036 = vmatpush1.bf16.msra.mxu0 %v712
    %2037 = vmatprep.subr.bf16.mxu0 0
    %2038 = vmatpush1.bf16.msra.mxu0 0
    %2039 = vmatprep.subr.bf16.mxu0 0
    %2040 = vmatpush1.bf16.msra.mxu0 0
    %2041 = vmatprep.subr.bf16.mxu0 0
    %2042 = vmatpush1.bf16.msra.mxu0 0
    %2043 = vmatprep.subr.bf16.mxu0 0
    %2044 = vmatpush1.bf16.msra.mxu0 0
    %2045 = vmatprep.subr.bf16.mxu0 0
    %2046 = vmatpush1.bf16.msra.mxu0 0
    %2047 = vmatprep.subr.bf16.mxu0 0
    %2048 = vmatpush1.bf16.msra.mxu0 0
    %2049 = vmatprep.subr.bf16.mxu0 0
    %2050 = vmatpush1.bf16.msra.mxu0 0
    %2051 = vmatprep.subr.bf16.mxu0 0
    %2052 = vmatpush1.bf16.msra.mxu0 0
    %2053 = vmatprep.subr.bf16.mxu0 0
    %2054 = vmatpush1.bf16.msra.mxu0 0
    %2055 = vmatprep.subr.bf16.mxu0 0
    %2056 = vmatpush1.bf16.msra.mxu0 0
    %2057 = vmatprep.subr.bf16.mxu0 0
    %2058 = vmatpush1.bf16.msra.mxu0 0
    %2059 = vmatprep.subr.bf16.mxu0 0
    %2060 = vmatpush1.bf16.msra.mxu0 0
    %2061 = vmatprep.subr.bf16.mxu0 0
    %2062 = vmatpush1.bf16.msra.mxu0 0
    %2063 = vmatprep.subr.bf16.mxu0 0
    %2064 = vmatpush1.bf16.msra.mxu0 0
    %2065 = vmatprep.subr.bf16.mxu0 0
    %2066 = vmatpush1.bf16.msra.mxu0 0
    %2067 = vmatprep.mubr.bf16.mxu0 0
    %2068 = vmatmul.mubr.bf16.gmra.mrb[0].mxu0 %v2033
    %v2069 = vpop.f32.mrb[0].mxu0
    %v2070 = vadd.f32 0.0, %v2069
    %v2071 = vpop.f32.mrb[0].mxu0
    %v2072 = vpop.f32.mrb[0].mxu0
    %v2073 = vadd.f32 0.0, %v2072
    %v2074 = vpop.f32.mrb[0].mxu0
    %2075 = vdwg.mxu0
    %v2077 = vsel %vm483, %v1931, 0
    %2079 = vmatprep.subr.bf16.mxu0 0
    %2080 = vmatpush1.bf16.msra.mxu0 %v714
    %2081 = vmatprep.subr.bf16.mxu0 0
    %2082 = vmatpush1.bf16.msra.mxu0 0
    %2083 = vmatprep.subr.bf16.mxu0 0
    %2084 = vmatpush1.bf16.msra.mxu0 0
    %2085 = vmatprep.subr.bf16.mxu0 0
    %2086 = vmatpush1.bf16.msra.mxu0 0
    %2087 = vmatprep.subr.bf16.mxu0 0
    %2088 = vmatpush1.bf16.msra.mxu0 0
    %2089 = vmatprep.subr.bf16.mxu0 0
    %2090 = vmatpush1.bf16.msra.mxu0 0
    %2091 = vmatprep.subr.bf16.mxu0 0
    %2092 = vmatpush1.bf16.msra.mxu0 0
    %2093 = vmatprep.subr.bf16.mxu0 0
    %2094 = vmatpush1.bf16.msra.mxu0 0
    %2095 = vmatprep.subr.bf16.mxu0 0
    %2096 = vmatpush1.bf16.msra.mxu0 0
    %2097 = vmatprep.subr.bf16.mxu0 0
    %2098 = vmatpush1.bf16.msra.mxu0 0
    %2099 = vmatprep.subr.bf16.mxu0 0
    %2100 = vmatpush1.bf16.msra.mxu0 0
    %2101 = vmatprep.subr.bf16.mxu0 0
    %2102 = vmatpush1.bf16.msra.mxu0 0
    %2103 = vmatprep.subr.bf16.mxu0 0
    %2104 = vmatpush1.bf16.msra.mxu0 0
    %2105 = vmatprep.subr.bf16.mxu0 0
    %2106 = vmatpush1.bf16.msra.mxu0 0
    %2107 = vmatprep.subr.bf16.mxu0 0
    %2108 = vmatpush1.bf16.msra.mxu0 0
    %2109 = vmatprep.subr.bf16.mxu0 0
    %2110 = vmatpush1.bf16.msra.mxu0 0
    %2111 = vmatprep.mubr.bf16.mxu0 0
    %2112 = vmatmul.mubr.bf16.gmra.mrb[0].mxu0 %v2077
    %v2113 = vpop.f32.mrb[0].mxu0
    %v2114 = vadd.f32 0.0, %v2113
    %v2115 = vpop.f32.mrb[0].mxu0
    %v2116 = vpop.f32.mrb[0].mxu0
    %v2117 = vadd.f32 0.0, %v2116
    %v2118 = vpop.f32.mrb[0].mxu0
    %2119 = vdwg.mxu0
    %v2121 = vsel %vm483, %v1932, 0
    %2123 = vmatprep.subr.bf16.mxu0 0
    %2124 = vmatpush1.bf16.msra.mxu0 %v718
    %2125 = vmatprep.subr.bf16.mxu0 0
    %2126 = vmatpush1.bf16.msra.mxu0 0
    %2127 = vmatprep.subr.bf16.mxu0 0
    %2128 = vmatpush1.bf16.msra.mxu0 0
    %2129 = vmatprep.subr.bf16.mxu0 0
    %2130 = vmatpush1.bf16.msra.mxu0 0
    %2131 = vmatprep.subr.bf16.mxu0 0
    %2132 = vmatpush1.bf16.msra.mxu0 0
    %2133 = vmatprep.subr.bf16.mxu0 0
    %2134 = vmatpush1.bf16.msra.mxu0 0
    %2135 = vmatprep.subr.bf16.mxu0 0
    %2136 = vmatpush1.bf16.msra.mxu0 0
    %2137 = vmatprep.subr.bf16.mxu0 0
    %2138 = vmatpush1.bf16.msra.mxu0 0
    %2139 = vmatprep.subr.bf16.mxu0 0
    %2140 = vmatpush1.bf16.msra.mxu0 0
    %2141 = vmatprep.subr.bf16.mxu0 0
    %2142 = vmatpush1.bf16.msra.mxu0 0
    %2143 = vmatprep.subr.bf16.mxu0 0
    %2144 = vmatpush1.bf16.msra.mxu0 0
    %2145 = vmatprep.subr.bf16.mxu0 0
    %2146 = vmatpush1.bf16.msra.mxu0 0
    %2147 = vmatprep.subr.bf16.mxu0 0
    %2148 = vmatpush1.bf16.msra.mxu0 0
    %2149 = vmatprep.subr.bf16.mxu0 0
    %2150 = vmatpush1.bf16.msra.mxu0 0
    %2151 = vmatprep.subr.bf16.mxu0 0
    %2152 = vmatpush1.bf16.msra.mxu0 0
    %2153 = vmatprep.subr.bf16.mxu0 0
    %2154 = vmatpush1.bf16.msra.mxu0 0
    %2155 = vmatprep.mubr.bf16.mxu0 0
    %2156 = vmatmul.mubr.bf16.gmra.mrb[0].mxu0 %v2121
    %v2157 = vpop.f32.mrb[0].mxu0
    %v2158 = vadd.f32 0.0, %v2157
    %v2159 = vpop.f32.mrb[0].mxu0
    %v2160 = vpop.f32.mrb[0].mxu0
    %v2161 = vadd.f32 0.0, %v2160
    %v2162 = vpop.f32.mrb[0].mxu0
    %2163 = vdwg.mxu0
    %v2165 = vsel %vm483, %v1933, 0
    %2167 = vmatprep.subr.bf16.mxu0 0
    %2168 = vmatpush1.bf16.msra.mxu0 %v720
    %2169 = vmatprep.subr.bf16.mxu0 0
    %2170 = vmatpush1.bf16.msra.mxu0 0
    %2171 = vmatprep.subr.bf16.mxu0 0
    %2172 = vmatpush1.bf16.msra.mxu0 0
    %2173 = vmatprep.subr.bf16.mxu0 0
    %2174 = vmatpush1.bf16.msra.mxu0 0
    %2175 = vmatprep.subr.bf16.mxu0 0
    %2176 = vmatpush1.bf16.msra.mxu0 0
    %2177 = vmatprep.subr.bf16.mxu0 0
    %2178 = vmatpush1.bf16.msra.mxu0 0
    %2179 = vmatprep.subr.bf16.mxu0 0
    %2180 = vmatpush1.bf16.msra.mxu0 0
    %2181 = vmatprep.subr.bf16.mxu0 0
    %2182 = vmatpush1.bf16.msra.mxu0 0
    %2183 = vmatprep.subr.bf16.mxu0 0
    %2184 = vmatpush1.bf16.msra.mxu0 0
    %2185 = vmatprep.subr.bf16.mxu0 0
    %2186 = vmatpush1.bf16.msra.mxu0 0
    %2187 = vmatprep.subr.bf16.mxu0 0
    %2188 = vmatpush1.bf16.msra.mxu0 0
    %2189 = vmatprep.subr.bf16.mxu0 0
    %2190 = vmatpush1.bf16.msra.mxu0 0
    %2191 = vmatprep.subr.bf16.mxu0 0
    %2192 = vmatpush1.bf16.msra.mxu0 0
    %2193 = vmatprep.subr.bf16.mxu0 0
    %2194 = vmatpush1.bf16.msra.mxu0 0
    %2195 = vmatprep.subr.bf16.mxu0 0
    %2196 = vmatpush1.bf16.msra.mxu0 0
    %2197 = vmatprep.subr.bf16.mxu0 0
    %2198 = vmatpush1.bf16.msra.mxu0 0
    %2199 = vmatprep.mubr.bf16.mxu0 0
    %2200 = vmatmul.mubr.bf16.gmra.mrb[0].mxu0 %v2165
    %v2201 = vpop.f32.mrb[0].mxu0
    %v2202 = vadd.f32 0.0, %v2201
    %v2203 = vpop.f32.mrb[0].mxu0
    %v2204 = vpop.f32.mrb[0].mxu0
    %v2205 = vadd.f32 0.0, %v2204
    %v2206 = vpop.f32.mrb[0].mxu0
    %2207 = vdwg.mxu0
    %v2209 = vsel %vm483, %v1934, 0
    %2211 = vmatprep.subr.bf16.mxu0 0
    %2212 = vmatpush1.bf16.msra.mxu0 %v724
    %2213 = vmatprep.subr.bf16.mxu0 0
    %2214 = vmatpush1.bf16.msra.mxu0 0
    %2215 = vmatprep.subr.bf16.mxu0 0
    %2216 = vmatpush1.bf16.msra.mxu0 0
    %2217 = vmatprep.subr.bf16.mxu0 0
    %2218 = vmatpush1.bf16.msra.mxu0 0
    %2219 = vmatprep.subr.bf16.mxu0 0
    %2220 = vmatpush1.bf16.msra.mxu0 0
    %2221 = vmatprep.subr.bf16.mxu0 0
    %2222 = vmatpush1.bf16.msra.mxu0 0
    %2223 = vmatprep.subr.bf16.mxu0 0
    %2224 = vmatpush1.bf16.msra.mxu0 0
    %2225 = vmatprep.subr.bf16.mxu0 0
    %2226 = vmatpush1.bf16.msra.mxu0 0
    %2227 = vmatprep.subr.bf16.mxu0 0
    %2228 = vmatpush1.bf16.msra.mxu0 0
    %2229 = vmatprep.subr.bf16.mxu0 0
    %2230 = vmatpush1.bf16.msra.mxu0 0
    %2231 = vmatprep.subr.bf16.mxu0 0
    %2232 = vmatpush1.bf16.msra.mxu0 0
    %2233 = vmatprep.subr.bf16.mxu0 0
    %2234 = vmatpush1.bf16.msra.mxu0 0
    %2235 = vmatprep.subr.bf16.mxu0 0
    %2236 = vmatpush1.bf16.msra.mxu0 0
    %2237 = vmatprep.subr.bf16.mxu0 0
    %2238 = vmatpush1.bf16.msra.mxu0 0
    %2239 = vmatprep.subr.bf16.mxu0 0
    %2240 = vmatpush1.bf16.msra.mxu0 0
    %2241 = vmatprep.subr.bf16.mxu0 0
    %2242 = vmatpush1.bf16.msra.mxu0 0
    %2243 = vmatprep.mubr.bf16.mxu0 0
    %2244 = vmatmul.mubr.bf16.gmra.mrb[0].mxu0 %v2209
    %v2245 = vpop.f32.mrb[0].mxu0
    %v2246 = vadd.f32 0.0, %v2245
    %v2247 = vpop.f32.mrb[0].mxu0
    %v2248 = vpop.f32.mrb[0].mxu0
    %v2249 = vadd.f32 0.0, %v2248
    %v2250 = vpop.f32.mrb[0].mxu0
    %2251 = vdwg.mxu0
    %v2253 = vsel %vm483, %v1935, 0
    %2255 = vmatprep.subr.bf16.mxu0 0
    %2256 = vmatpush1.bf16.msra.mxu0 %v726
    %2257 = vmatprep.subr.bf16.mxu0 0
    %2258 = vmatpush1.bf16.msra.mxu0 0
    %2259 = vmatprep.subr.bf16.mxu0 0
    %2260 = vmatpush1.bf16.msra.mxu0 0
    %2261 = vmatprep.subr.bf16.mxu0 0
    %2262 = vmatpush1.bf16.msra.mxu0 0
    %2263 = vmatprep.subr.bf16.mxu0 0
    %2264 = vmatpush1.bf16.msra.mxu0 0
    %2265 = vmatprep.subr.bf16.mxu0 0
    %2266 = vmatpush1.bf16.msra.mxu0 0
    %2267 = vmatprep.subr.bf16.mxu0 0
    %2268 = vmatpush1.bf16.msra.mxu0 0
    %2269 = vmatprep.subr.bf16.mxu0 0
    %2270 = vmatpush1.bf16.msra.mxu0 0
    %2271 = vmatprep.subr.bf16.mxu0 0
    %2272 = vmatpush1.bf16.msra.mxu0 0
    %2273 = vmatprep.subr.bf16.mxu0 0
    %2274 = vmatpush1.bf16.msra.mxu0 0
    %2275 = vmatprep.subr.bf16.mxu0 0
    %2276 = vmatpush1.bf16.msra.mxu0 0
    %2277 = vmatprep.subr.bf16.mxu0 0
    %2278 = vmatpush1.bf16.msra.mxu0 0
    %2279 = vmatprep.subr.bf16.mxu0 0
    %2280 = vmatpush1.bf16.msra.mxu0 0
    %2281 = vmatprep.subr.bf16.mxu0 0
    %2282 = vmatpush1.bf16.msra.mxu0 0
    %2283 = vmatprep.subr.bf16.mxu0 0
    %2284 = vmatpush1.bf16.msra.mxu0 0
    %2285 = vmatprep.subr.bf16.mxu0 0
    %2286 = vmatpush1.bf16.msra.mxu0 0
    %2287 = vmatprep.mubr.bf16.mxu0 0
    %2288 = vmatmul.mubr.bf16.gmra.mrb[0].mxu0 %v2253
    %v2289 = vpop.f32.mrb[0].mxu0
    %v2290 = vadd.f32 0.0, %v2289
    %v2291 = vpop.f32.mrb[0].mxu0
    %v2292 = vpop.f32.mrb[0].mxu0
    %v2293 = vadd.f32 0.0, %v2292
    %v2294 = vpop.f32.mrb[0].mxu0
    %2295 = vdwg.mxu0
    %v2297 = vsel %vm483, %v1936, 0
    %2299 = vmatprep.subr.bf16.mxu0 0
    %2300 = vmatpush1.bf16.msra.mxu0 %v730
    %2301 = vmatprep.subr.bf16.mxu0 0
    %2302 = vmatpush1.bf16.msra.mxu0 0
    %2303 = vmatprep.subr.bf16.mxu0 0
    %2304 = vmatpush1.bf16.msra.mxu0 0
    %2305 = vmatprep.subr.bf16.mxu0 0
    %2306 = vmatpush1.bf16.msra.mxu0 0
    %2307 = vmatprep.subr.bf16.mxu0 0
    %2308 = vmatpush1.bf16.msra.mxu0 0
    %2309 = vmatprep.subr.bf16.mxu0 0
    %2310 = vmatpush1.bf16.msra.mxu0 0
    %2311 = vmatprep.subr.bf16.mxu0 0
    %2312 = vmatpush1.bf16.msra.mxu0 0
    %2313 = vmatprep.subr.bf16.mxu0 0
    %2314 = vmatpush1.bf16.msra.mxu0 0
    %2315 = vmatprep.subr.bf16.mxu0 0
    %2316 = vmatpush1.bf16.msra.mxu0 0
    %2317 = vmatprep.subr.bf16.mxu0 0
    %2318 = vmatpush1.bf16.msra.mxu0 0
    %2319 = vmatprep.subr.bf16.mxu0 0
    %2320 = vmatpush1.bf16.msra.mxu0 0
    %2321 = vmatprep.subr.bf16.mxu0 0
    %2322 = vmatpush1.bf16.msra.mxu0 0
    %2323 = vmatprep.subr.bf16.mxu0 0
    %2324 = vmatpush1.bf16.msra.mxu0 0
    %2325 = vmatprep.subr.bf16.mxu0 0
    %2326 = vmatpush1.bf16.msra.mxu0 0
    %2327 = vmatprep.subr.bf16.mxu0 0
    %2328 = vmatpush1.bf16.msra.mxu0 0
    %2329 = vmatprep.subr.bf16.mxu0 0
    %2330 = vmatpush1.bf16.msra.mxu0 0
    %2331 = vmatprep.mubr.bf16.mxu0 0
    %2332 = vmatmul.mubr.bf16.gmra.mrb[0].mxu0 %v2297
    %v2333 = vpop.f32.mrb[0].mxu0
    %v2334 = vadd.f32 0.0, %v2333
    %v2335 = vpop.f32.mrb[0].mxu0
    %v2336 = vpop.f32.mrb[0].mxu0
    %v2337 = vadd.f32 0.0, %v2336
    %v2338 = vpop.f32.mrb[0].mxu0
    %2339 = vdwg.mxu0
    %v2341 = vsel %vm483, %v1937, 0
    %2343 = vmatprep.subr.bf16.mxu0 0
    %2344 = vmatpush1.bf16.msra.mxu0 %v732
    %2345 = vmatprep.subr.bf16.mxu0 0
    %2346 = vmatpush1.bf16.msra.mxu0 0
    %2347 = vmatprep.subr.bf16.mxu0 0
    %2348 = vmatpush1.bf16.msra.mxu0 0
    %2349 = vmatprep.subr.bf16.mxu0 0
    %2350 = vmatpush1.bf16.msra.mxu0 0
    %2351 = vmatprep.subr.bf16.mxu0 0
    %2352 = vmatpush1.bf16.msra.mxu0 0
    %2353 = vmatprep.subr.bf16.mxu0 0
    %2354 = vmatpush1.bf16.msra.mxu0 0
    %2355 = vmatprep.subr.bf16.mxu0 0
    %2356 = vmatpush1.bf16.msra.mxu0 0
    %2357 = vmatprep.subr.bf16.mxu0 0
    %2358 = vmatpush1.bf16.msra.mxu0 0
    %2359 = vmatprep.subr.bf16.mxu0 0
    %2360 = vmatpush1.bf16.msra.mxu0 0
    %2361 = vmatprep.subr.bf16.mxu0 0
    %2362 = vmatpush1.bf16.msra.mxu0 0
    %2363 = vmatprep.subr.bf16.mxu0 0
    %2364 = vmatpush1.bf16.msra.mxu0 0
    %2365 = vmatprep.subr.bf16.mxu0 0
    %2366 = vmatpush1.bf16.msra.mxu0 0
    %2367 = vmatprep.subr.bf16.mxu0 0
    %2368 = vmatpush1.bf16.msra.mxu0 0
    %2369 = vmatprep.subr.bf16.mxu0 0
    %2370 = vmatpush1.bf16.msra.mxu0 0
    %2371 = vmatprep.subr.bf16.mxu0 0
    %2372 = vmatpush1.bf16.msra.mxu0 0
    %2373 = vmatprep.subr.bf16.mxu0 0
    %2374 = vmatpush1.bf16.msra.mxu0 0
    %2375 = vmatprep.mubr.bf16.mxu0 0
    %2376 = vmatmul.mubr.bf16.gmra.mrb[0].mxu0 %v2341
    %v2377 = vpop.f32.mrb[0].mxu0
    %v2378 = vadd.f32 0.0, %v2377
    %v2379 = vpop.f32.mrb[0].mxu0
    %v2380 = vpop.f32.mrb[0].mxu0
    %v2381 = vadd.f32 0.0, %v2380
    %v2382 = vpop.f32.mrb[0].mxu0
    %2383 = vdwg.mxu0
    %v2385 = vsel %vm483, %v1938, 0
    %2387 = vmatprep.subr.bf16.mxu0 0
    %2388 = vmatpush1.bf16.msra.mxu0 %v736
    %2389 = vmatprep.subr.bf16.mxu0 0
    %2390 = vmatpush1.bf16.msra.mxu0 0
    %2391 = vmatprep.subr.bf16.mxu0 0
    %2392 = vmatpush1.bf16.msra.mxu0 0
    %2393 = vmatprep.subr.bf16.mxu0 0
    %2394 = vmatpush1.bf16.msra.mxu0 0
    %2395 = vmatprep.subr.bf16.mxu0 0
    %2396 = vmatpush1.bf16.msra.mxu0 0
    %2397 = vmatprep.subr.bf16.mxu0 0
    %2398 = vmatpush1.bf16.msra.mxu0 0
    %2399 = vmatprep.subr.bf16.mxu0 0
    %2400 = vmatpush1.bf16.msra.mxu0 0
    %2401 = vmatprep.subr.bf16.mxu0 0
    %2402 = vmatpush1.bf16.msra.mxu0 0
    %2403 = vmatprep.subr.bf16.mxu0 0
    %2404 = vmatpush1.bf16.msra.mxu0 0
    %2405 = vmatprep.subr.bf16.mxu0 0
    %2406 = vmatpush1.bf16.msra.mxu0 0
    %2407 = vmatprep.subr.bf16.mxu0 0
    %2408 = vmatpush1.bf16.msra.mxu0 0
    %2409 = vmatprep.subr.bf16.mxu0 0
    %2410 = vmatpush1.bf16.msra.mxu0 0
    %2411 = vmatprep.subr.bf16.mxu0 0
    %2412 = vmatpush1.bf16.msra.mxu0 0
    %2413 = vmatprep.subr.bf16.mxu0 0
    %2414 = vmatpush1.bf16.msra.mxu0 0
    %2415 = vmatprep.subr.bf16.mxu0 0
    %2416 = vmatpush1.bf16.msra.mxu0 0
    %2417 = vmatprep.subr.bf16.mxu0 0
    %2418 = vmatpush1.bf16.msra.mxu0 0
    %2419 = vmatprep.mubr.bf16.mxu0 0
    %2420 = vmatmul.mubr.bf16.gmra.mrb[0].mxu0 %v2385
    %v2421 = vpop.f32.mrb[0].mxu0
    %v2422 = vadd.f32 0.0, %v2421
    %v2423 = vpop.f32.mrb[0].mxu0
    %v2424 = vpop.f32.mrb[0].mxu0
    %v2425 = vadd.f32 0.0, %v2424
    %v2426 = vpop.f32.mrb[0].mxu0
    %2427 = vdwg.mxu0
    %v2429 = vsel %vm483, %v1939, 0
    %2431 = vmatprep.subr.bf16.mxu0 0
    %2432 = vmatpush1.bf16.msra.mxu0 %v738
    %2433 = vmatprep.subr.bf16.mxu0 0
    %2434 = vmatpush1.bf16.msra.mxu0 0
    %2435 = vmatprep.subr.bf16.mxu0 0
    %2436 = vmatpush1.bf16.msra.mxu0 0
    %2437 = vmatprep.subr.bf16.mxu0 0
    %2438 = vmatpush1.bf16.msra.mxu0 0
    %2439 = vmatprep.subr.bf16.mxu0 0
    %2440 = vmatpush1.bf16.msra.mxu0 0
    %2441 = vmatprep.subr.bf16.mxu0 0
    %2442 = vmatpush1.bf16.msra.mxu0 0
    %2443 = vmatprep.subr.bf16.mxu0 0
    %2444 = vmatpush1.bf16.msra.mxu0 0
    %2445 = vmatprep.subr.bf16.mxu0 0
    %2446 = vmatpush1.bf16.msra.mxu0 0
    %2447 = vmatprep.subr.bf16.mxu0 0
    %2448 = vmatpush1.bf16.msra.mxu0 0
    %2449 = vmatprep.subr.bf16.mxu0 0
    %2450 = vmatpush1.bf16.msra.mxu0 0
    %2451 = vmatprep.subr.bf16.mxu0 0
    %2452 = vmatpush1.bf16.msra.mxu0 0
    %2453 = vmatprep.subr.bf16.mxu0 0
    %2454 = vmatpush1.bf16.msra.mxu0 0
    %2455 = vmatprep.subr.bf16.mxu0 0
    %2456 = vmatpush1.bf16.msra.mxu0 0
    %2457 = vmatprep.subr.bf16.mxu0 0
    %2458 = vmatpush1.bf16.msra.mxu0 0
    %2459 = vmatprep.subr.bf16.mxu0 0
    %2460 = vmatpush1.bf16.msra.mxu0 0
    %2461 = vmatprep.subr.bf16.mxu0 0
    %2462 = vmatpush1.bf16.msra.mxu0 0
    %2463 = vmatprep.mubr.bf16.mxu0 0
    %2464 = vmatmul.mubr.bf16.gmra.mrb[0].mxu0 %v2429
    %v2465 = vpop.f32.mrb[0].mxu0
    %v2466 = vadd.f32 0.0, %v2465
    %v2467 = vpop.f32.mrb[0].mxu0
    %v2468 = vpop.f32.mrb[0].mxu0
    %v2469 = vadd.f32 0.0, %v2468
    %v2470 = vpop.f32.mrb[0].mxu0
    %2471 = vdwg.mxu0
    %v2473 = vsel %vm483, %v1940, 0
    %2475 = vmatprep.subr.bf16.mxu0 0
    %2476 = vmatpush1.bf16.msra.mxu0 %v742
    %2477 = vmatprep.subr.bf16.mxu0 0
    %2478 = vmatpush1.bf16.msra.mxu0 0
    %2479 = vmatprep.subr.bf16.mxu0 0
    %2480 = vmatpush1.bf16.msra.mxu0 0
    %2481 = vmatprep.subr.bf16.mxu0 0
    %2482 = vmatpush1.bf16.msra.mxu0 0
    %2483 = vmatprep.subr.bf16.mxu0 0
    %2484 = vmatpush1.bf16.msra.mxu0 0
    %2485 = vmatprep.subr.bf16.mxu0 0
    %2486 = vmatpush1.bf16.msra.mxu0 0
    %2487 = vmatprep.subr.bf16.mxu0 0
    %2488 = vmatpush1.bf16.msra.mxu0 0
    %2489 = vmatprep.subr.bf16.mxu0 0
    %2490 = vmatpush1.bf16.msra.mxu0 0
    %2491 = vmatprep.subr.bf16.mxu0 0
    %2492 = vmatpush1.bf16.msra.mxu0 0
    %2493 = vmatprep.subr.bf16.mxu0 0
    %2494 = vmatpush1.bf16.msra.mxu0 0
    %2495 = vmatprep.subr.bf16.mxu0 0
    %2496 = vmatpush1.bf16.msra.mxu0 0
    %2497 = vmatprep.subr.bf16.mxu0 0
    %2498 = vmatpush1.bf16.msra.mxu0 0
    %2499 = vmatprep.subr.bf16.mxu0 0
    %2500 = vmatpush1.bf16.msra.mxu0 0
    %2501 = vmatprep.subr.bf16.mxu0 0
    %2502 = vmatpush1.bf16.msra.mxu0 0
    %2503 = vmatprep.subr.bf16.mxu0 0
    %2504 = vmatpush1.bf16.msra.mxu0 0
    %2505 = vmatprep.subr.bf16.mxu0 0
    %2506 = vmatpush1.bf16.msra.mxu0 0
    %2507 = vmatprep.mubr.bf16.mxu0 0
    %2508 = vmatmul.mubr.bf16.gmra.mrb[0].mxu0 %v2473
    %v2509 = vpop.f32.mrb[0].mxu0
    %v2510 = vadd.f32 0.0, %v2509
    %v2511 = vpop.f32.mrb[0].mxu0
    %v2512 = vpop.f32.mrb[0].mxu0
    %v2513 = vadd.f32 0.0, %v2512
    %v2514 = vpop.f32.mrb[0].mxu0
    %2515 = vdwg.mxu0
    %v2517 = vsel %vm483, %v1941, 0
    %2519 = vmatprep.subr.bf16.mxu0 0
    %2520 = vmatpush1.bf16.msra.mxu0 %v744
    %2521 = vmatprep.subr.bf16.mxu0 0
    %2522 = vmatpush1.bf16.msra.mxu0 0
    %2523 = vmatprep.subr.bf16.mxu0 0
    %2524 = vmatpush1.bf16.msra.mxu0 0
    %2525 = vmatprep.subr.bf16.mxu0 0
    %2526 = vmatpush1.bf16.msra.mxu0 0
    %2527 = vmatprep.subr.bf16.mxu0 0
    %2528 = vmatpush1.bf16.msra.mxu0 0
    %2529 = vmatprep.subr.bf16.mxu0 0
    %2530 = vmatpush1.bf16.msra.mxu0 0
    %2531 = vmatprep.subr.bf16.mxu0 0
    %2532 = vmatpush1.bf16.msra.mxu0 0
    %2533 = vmatprep.subr.bf16.mxu0 0
    %2534 = vmatpush1.bf16.msra.mxu0 0
    %2535 = vmatprep.subr.bf16.mxu0 0
    %2536 = vmatpush1.bf16.msra.mxu0 0
    %2537 = vmatprep.subr.bf16.mxu0 0
    %2538 = vmatpush1.bf16.msra.mxu0 0
    %2539 = vmatprep.subr.bf16.mxu0 0
    %2540 = vmatpush1.bf16.msra.mxu0 0
    %2541 = vmatprep.subr.bf16.mxu0 0
    %2542 = vmatpush1.bf16.msra.mxu0 0
    %2543 = vmatprep.subr.bf16.mxu0 0
    %2544 = vmatpush1.bf16.msra.mxu0 0
    %2545 = vmatprep.subr.bf16.mxu0 0
    %2546 = vmatpush1.bf16.msra.mxu0 0
    %2547 = vmatprep.subr.bf16.mxu0 0
    %2548 = vmatpush1.bf16.msra.mxu0 0
    %2549 = vmatprep.subr.bf16.mxu0 0
    %2550 = vmatpush1.bf16.msra.mxu0 0
    %2551 = vmatprep.mubr.bf16.mxu0 0
    %2552 = vmatmul.mubr.bf16.gmra.mrb[0].mxu0 %v2517
    %v2553 = vpop.f32.mrb[0].mxu0
    %v2554 = vadd.f32 0.0, %v2553
    %v2555 = vpop.f32.mrb[0].mxu0
    %v2556 = vpop.f32.mrb[0].mxu0
    %v2557 = vadd.f32 0.0, %v2556
    %v2558 = vpop.f32.mrb[0].mxu0
    %2559 = vdwg.mxu0
    %v2561 = vsel %vm483, %v1942, 0
    %2563 = vmatprep.subr.bf16.mxu0 0
    %2564 = vmatpush1.bf16.msra.mxu0 %v748
    %2565 = vmatprep.subr.bf16.mxu0 0
    %2566 = vmatpush1.bf16.msra.mxu0 0
    %2567 = vmatprep.subr.bf16.mxu0 0
    %2568 = vmatpush1.bf16.msra.mxu0 0
    %2569 = vmatprep.subr.bf16.mxu0 0
    %2570 = vmatpush1.bf16.msra.mxu0 0
    %2571 = vmatprep.subr.bf16.mxu0 0
    %2572 = vmatpush1.bf16.msra.mxu0 0
    %2573 = vmatprep.subr.bf16.mxu0 0
    %2574 = vmatpush1.bf16.msra.mxu0 0
    %2575 = vmatprep.subr.bf16.mxu0 0
    %2576 = vmatpush1.bf16.msra.mxu0 0
    %2577 = vmatprep.subr.bf16.mxu0 0
    %2578 = vmatpush1.bf16.msra.mxu0 0
    %2579 = vmatprep.subr.bf16.mxu0 0
    %2580 = vmatpush1.bf16.msra.mxu0 0
    %2581 = vmatprep.subr.bf16.mxu0 0
    %2582 = vmatpush1.bf16.msra.mxu0 0
    %2583 = vmatprep.subr.bf16.mxu0 0
    %2584 = vmatpush1.bf16.msra.mxu0 0
    %2585 = vmatprep.subr.bf16.mxu0 0
    %2586 = vmatpush1.bf16.msra.mxu0 0
    %2587 = vmatprep.subr.bf16.mxu0 0
    %2588 = vmatpush1.bf16.msra.mxu0 0
    %2589 = vmatprep.subr.bf16.mxu0 0
    %2590 = vmatpush1.bf16.msra.mxu0 0
    %2591 = vmatprep.subr.bf16.mxu0 0
    %2592 = vmatpush1.bf16.msra.mxu0 0
    %2593 = vmatprep.subr.bf16.mxu0 0
    %2594 = vmatpush1.bf16.msra.mxu0 0
    %2595 = vmatprep.mubr.bf16.mxu0 0
    %2596 = vmatmul.mubr.bf16.gmra.mrb[0].mxu0 %v2561
    %v2597 = vpop.f32.mrb[0].mxu0
    %v2598 = vadd.f32 0.0, %v2597
    %v2599 = vpop.f32.mrb[0].mxu0
    %v2600 = vpop.f32.mrb[0].mxu0
    %v2601 = vadd.f32 0.0, %v2600
    %v2602 = vpop.f32.mrb[0].mxu0
    %2603 = vdwg.mxu0
    %v2605 = vsel %vm483, %v1943, 0
    %2607 = vmatprep.subr.bf16.mxu0 0
    %2608 = vmatpush1.bf16.msra.mxu0 %v750
    %2609 = vmatprep.subr.bf16.mxu0 0
    %2610 = vmatpush1.bf16.msra.mxu0 0
    %2611 = vmatprep.subr.bf16.mxu0 0
    %2612 = vmatpush1.bf16.msra.mxu0 0
    %2613 = vmatprep.subr.bf16.mxu0 0
    %2614 = vmatpush1.bf16.msra.mxu0 0
    %2615 = vmatprep.subr.bf16.mxu0 0
    %2616 = vmatpush1.bf16.msra.mxu0 0
    %2617 = vmatprep.subr.bf16.mxu0 0
    %2618 = vmatpush1.bf16.msra.mxu0 0
    %2619 = vmatprep.subr.bf16.mxu0 0
    %2620 = vmatpush1.bf16.msra.mxu0 0
    %2621 = vmatprep.subr.bf16.mxu0 0
    %2622 = vmatpush1.bf16.msra.mxu0 0
    %2623 = vmatprep.subr.bf16.mxu0 0
    %2624 = vmatpush1.bf16.msra.mxu0 0
    %2625 = vmatprep.subr.bf16.mxu0 0
    %2626 = vmatpush1.bf16.msra.mxu0 0
    %2627 = vmatprep.subr.bf16.mxu0 0
    %2628 = vmatpush1.bf16.msra.mxu0 0
    %2629 = vmatprep.subr.bf16.mxu0 0
    %2630 = vmatpush1.bf16.msra.mxu0 0
    %2631 = vmatprep.subr.bf16.mxu0 0
    %2632 = vmatpush1.bf16.msra.mxu0 0
    %2633 = vmatprep.subr.bf16.mxu0 0
    %2634 = vmatpush1.bf16.msra.mxu0 0
    %2635 = vmatprep.subr.bf16.mxu0 0
    %2636 = vmatpush1.bf16.msra.mxu0 0
    %2637 = vmatprep.subr.bf16.mxu0 0
    %2638 = vmatpush1.bf16.msra.mxu0 0
    %2639 = vmatprep.mubr.bf16.mxu0 0
    %2640 = vmatmul.mubr.bf16.gmra.mrb[0].mxu0 %v2605
    %v2641 = vpop.f32.mrb[0].mxu0
    %v2642 = vadd.f32 0.0, %v2641
    %v2643 = vpop.f32.mrb[0].mxu0
    %v2644 = vpop.f32.mrb[0].mxu0
    %v2645 = vadd.f32 0.0, %v2644
    %v2646 = vpop.f32.mrb[0].mxu0
    %2647 = vdwg.mxu0
    %v2648 = vpack.c.bf16 %v1985, %v1982
    %v2649 = vpack.c.bf16 %v2029, %v2026
    %v2650 = vpack.c.bf16 %v2073, %v2070
    %v2651 = vpack.c.bf16 %v2117, %v2114
    %v2652 = vpack.c.bf16 %v2161, %v2158
    %v2653 = vpack.c.bf16 %v2205, %v2202
    %v2654 = vpack.c.bf16 %v2249, %v2246
    %v2655 = vpack.c.bf16 %v2293, %v2290
    %v2656 = vpack.c.bf16 %v2337, %v2334
    %v2657 = vpack.c.bf16 %v2381, %v2378
    %v2658 = vpack.c.bf16 %v2425, %v2422
    %v2659 = vpack.c.bf16 %v2469, %v2466
    %v2660 = vpack.c.bf16 %v2513, %v2510
    %v2661 = vpack.c.bf16 %v2557, %v2554
    %v2662 = vpack.c.bf16 %v2601, %v2598
    %v2663 = vpack.c.bf16 %v2645, %v2642
    %2666 = vrot.lane.b32.xlu0 %v2650, 16
    %v2667 = vpop.permute.xlu0 %2666
    %2668 = vrot.lane.b32.xlu0 %v2651, 16
    %v2669 = vpop.permute.xlu0 %2668
    %2672 = vrot.lane.b32.xlu0 %v2652, 32
    %v2673 = vpop.permute.xlu0 %2672
    %2674 = vrot.lane.b32.xlu0 %v2653, 32
    %v2675 = vpop.permute.xlu0 %2674
    %2678 = vrot.lane.b32.xlu0 %v2654, 48
    %v2679 = vpop.permute.xlu0 %2678
    %2680 = vrot.lane.b32.xlu0 %v2655, 48
    %v2681 = vpop.permute.xlu0 %2680
    %2684 = vrot.lane.b32.xlu0 %v2656, 64
    %v2685 = vpop.permute.xlu0 %2684
    %2686 = vrot.lane.b32.xlu0 %v2657, 64
    %v2687 = vpop.permute.xlu0 %2686
    %2690 = vrot.lane.b32.xlu0 %v2658, 80
    %v2691 = vpop.permute.xlu0 %2690
    %2692 = vrot.lane.b32.xlu0 %v2659, 80
    %v2693 = vpop.permute.xlu0 %2692
    %2696 = vrot.lane.b32.xlu0 %v2660, 96
    %v2697 = vpop.permute.xlu0 %2696
    %2698 = vrot.lane.b32.xlu0 %v2661, 96
    %v2699 = vpop.permute.xlu0 %2698
    %2702 = vrot.lane.b32.xlu0 %v2662, 112
    %v2703 = vpop.permute.xlu0 %2702
    %2704 = vrot.lane.b32.xlu0 %v2663, 112
    %v2705 = vpop.permute.xlu0 %2704
    %v2708 = vsel %vm483, %v2648, %v2667
    %v2711 = vsel %vm483, %v2649, %v2669
    %v2713 = vsel %vm486, %v2708, %v2673
    %v2715 = vsel %vm486, %v2711, %v2675
    %v2717 = vsel %vm489, %v2713, %v2679
    %v2719 = vsel %vm489, %v2715, %v2681
    %v2721 = vsel %vm492, %v2717, %v2685
    %v2723 = vsel %vm492, %v2719, %v2687
    %v2725 = vsel %vm495, %v2721, %v2691
    %v2727 = vsel %vm495, %v2723, %v2693
    %v2729 = vsel %vm498, %v2725, %v2697
    %v2731 = vsel %vm498, %v2727, %v2699
    %v2733 = vsel %vm501, %v2729, %v2703
    %v2736 = vsel %vm501, %v2731, %v2705
    %v2738 = vld [vmem:[#allocation10] sm:$0xf]
    %v2739 = vld [vmem:[#allocation10 + $0x4] sm:$0xf]
    %v2740 = vld [vmem:[#allocation10 + $0x8] sm:$0xf]
    %v2741 = vld [vmem:[#allocation10 + $0xc] sm:$0xf]
    %v2742 = vld [vmem:[#allocation10 + $0x10] sm:$0xf]
    %v2743 = vld [vmem:[#allocation10 + $0x14] sm:$0xf]
    %v2744 = vld [vmem:[#allocation10 + $0x18] sm:$0xf]
    %v2745 = vld [vmem:[#allocation10 + $0x1c] sm:$0xf]
    %v2746 = vld [vmem:[#allocation10 + $0x20] sm:$0xf]
    %v2747 = vld [vmem:[#allocation10 + $0x24] sm:$0xf]
    %v2748 = vld [vmem:[#allocation10 + $0x28] sm:$0xf]
    %v2749 = vld [vmem:[#allocation10 + $0x2c] sm:$0xf]
    %v2750 = vld [vmem:[#allocation10 + $0x30] sm:$0xf]
    %v2751 = vld [vmem:[#allocation10 + $0x34] sm:$0xf]
    %v2752 = vld [vmem:[#allocation10 + $0x38] sm:$0xf]
    %v2753 = vld [vmem:[#allocation10 + $0x3c] sm:$0xf]
    %v2770 = vunpack.c.l.b16 %v2738
    %v2771 = vunpack.c.l.b16 %v2739
    %v2772 = vunpack.c.l.b16 %v2740
    %v2773 = vunpack.c.l.b16 %v2741
    %v2774 = vunpack.c.l.b16 %v2742
    %v2775 = vunpack.c.l.b16 %v2743
    %v2776 = vunpack.c.l.b16 %v2744
    %v2777 = vunpack.c.l.b16 %v2745
    %v2778 = vunpack.c.l.b16 %v2746
    %v2779 = vunpack.c.l.b16 %v2747
    %v2780 = vunpack.c.l.b16 %v2748
    %v2781 = vunpack.c.l.b16 %v2749
    %v2782 = vunpack.c.l.b16 %v2750
    %v2783 = vunpack.c.l.b16 %v2751
    %v2784 = vunpack.c.l.b16 %v2752
    %v2785 = vunpack.c.l.b16 %v2753
    %v2786 = vpack.c.b16 %v2771, %v2770
    %v2787 = vpack.c.b16 %v2773, %v2772
    %v2788 = vpack.c.b16 %v2775, %v2774
    %v2789 = vpack.c.b16 %v2777, %v2776
    %v2790 = vpack.c.b16 %v2779, %v2778
    %v2791 = vpack.c.b16 %v2781, %v2780
    %v2792 = vpack.c.b16 %v2783, %v2782
    %v2793 = vpack.c.b16 %v2785, %v2784
    %2802 = vmatprep.subr.bf16.mxu0 0
    %2803 = vmatpush1.bf16.msra.mxu0 %v2786
    %2804 = vmatprep.subr.bf16.mxu0 0
    %2805 = vmatpush1.bf16.msra.mxu0 %v2787
    %2806 = vmatprep.subr.bf16.mxu0 0
    %2807 = vmatpush1.bf16.msra.mxu0 %v2788
    %2808 = vmatprep.subr.bf16.mxu0 0
    %2809 = vmatpush1.bf16.msra.mxu0 %v2789
    %2810 = vmatprep.subr.bf16.mxu0 0
    %2811 = vmatpush1.bf16.msra.mxu0 %v2790
    %2812 = vmatprep.subr.bf16.mxu0 0
    %2813 = vmatpush1.bf16.msra.mxu0 %v2791
    %2814 = vmatprep.subr.bf16.mxu0 0
    %2815 = vmatpush1.bf16.msra.mxu0 %v2792
    %2816 = vmatprep.subr.bf16.mxu0 0
    %2817 = vmatpush1.bf16.msra.mxu0 %v2793
    %2818 = vmatprep.subr.bf16.mxu0 0
    %2819 = vmatpush1.bf16.msra.mxu0 0
    %2820 = vmatprep.subr.bf16.mxu0 0
    %2821 = vmatpush1.bf16.msra.mxu0 0
    %2822 = vmatprep.subr.bf16.mxu0 0
    %2823 = vmatpush1.bf16.msra.mxu0 0
    %2824 = vmatprep.subr.bf16.mxu0 0
    %2825 = vmatpush1.bf16.msra.mxu0 0
    %2826 = vmatprep.subr.bf16.mxu0 0
    %2827 = vmatpush1.bf16.msra.mxu0 0
    %2828 = vmatprep.subr.bf16.mxu0 0
    %2829 = vmatpush1.bf16.msra.mxu0 0
    %2830 = vmatprep.subr.bf16.mxu0 0
    %2831 = vmatpush1.bf16.msra.mxu0 0
    %2832 = vmatprep.subr.bf16.mxu0 0
    %2833 = vmatpush1.bf16.msra.mxu0 0
    %2834 = vmatprep.mubr.bf16.mxu0 0
    %2835 = vmatmul.mubr.bf16.gmra.mrb[0].mxu0 %v2733
    %v2836 = vpop.f32.mrb[0].mxu0
    %v2837 = vadd.f32 0.0, %v2836
    %v2838 = vpop.f32.mrb[0].mxu0
    %v2839 = vpop.f32.mrb[0].mxu0
    %v2840 = vadd.f32 0.0, %v2839
    %v2841 = vpop.f32.mrb[0].mxu0
    %2842 = vmatprep.mubr.bf16.mxu0 0
    %2843 = vmatmul.mubr.bf16.gmra.mrb[0].mxu0 %v2736
    %v2844 = vpop.f32.mrb[0].mxu0
    %v2845 = vadd.f32 0.0, %v2844
    %v2846 = vpop.f32.mrb[0].mxu0
    %v2847 = vpop.f32.mrb[0].mxu0
    %v2848 = vadd.f32 0.0, %v2847
    %v2849 = vpop.f32.mrb[0].mxu0
    %2850 = vdwg.mxu0
    %v2851 = vadd.f32 %v129, %v2837
    %v2852 = vadd.f32 %v130, %v2840
    %v2853 = vadd.f32 %v131, %v2845
    %v2854 = vadd.f32 %v132, %v2848
    %v2855 = vld [vmem:[%s6] sm:$0x1]
    %v2856 = vmul.f32 %v2851, %v2851
    %v2857 = vmul.f32 %v2852, %v2852
    %v2858 = vmul.f32 %v2853, %v2853
    %v2859 = vmul.f32 %v2854, %v2854
    %2860 = vadd.xlane.f32.xlu0 %v2856
    %v2861 = vpop.xlane.xlu0 %2860
    %2862 = vadd.xlane.f32.xlu0 %v2857
    %v2863 = vpop.xlane.xlu0 %2862
    %2864 = vadd.xlane.f32.xlu0 %v2858
    %v2865 = vpop.xlane.xlu0 %2864
    %2866 = vadd.xlane.f32.xlu0 %v2859
    %v2867 = vpop.xlane.xlu0 %2866
    %v2868 = vmul.f32 %v2861, %v146
    %v2869 = vmul.f32 %v2863, %v146
    %v2870 = vmul.f32 %v2865, %v146
    %v2871 = vmul.f32 %v2867, %v146
    %v2872 = vadd.f32 %v2868, 1e-06
    %v2873 = vadd.f32 %v2869, 1e-06
    %v2874 = vadd.f32 %v2870, 1e-06
    %v2875 = vadd.f32 %v2871, 1e-06
    %v2876 = vrsqrt.pop %v2872
    %v2877 = vrsqrt.pop %v2873
    %v2878 = vrsqrt.pop %v2874
    %v2879 = vrsqrt.pop %v2875
    %v2880 = vmul.f32 %v2851, %v2876
    %v2881 = vmul.f32 %v2852, %v2877
    %v2882 = vmul.f32 %v2853, %v2878
    %v2883 = vmul.f32 %v2854, %v2879
    %v2885 = vlaneseq
    %v2886 = vshrl.u32 %v2885, 7
    %v2887 = vsub.s32 0, %v2886
    %v2888 = vrot.slane %v2855, %v2887
    %v2890 = vmul.f32 %v2880, %v2888
    %v2891 = vmul.f32 %v2881, %v2888
    %v2892 = vmul.f32 %v2882, %v2888
    %v2893 = vmul.f32 %v2883, %v2888
    %v2894 = vpack.c.bf16 %v2891, %v2890
    %v2895 = vpack.c.bf16 %v2893, %v2892
    %v2896 = vld [vmem:[#allocation11] sm:$0xff]
    %v2897 = vld [vmem:[#allocation11 + $0x8] sm:$0xff]
    %v2898 = vld [vmem:[#allocation11 + $0x10] sm:$0xff]
    %v2899 = vld [vmem:[#allocation11 + $0x18] sm:$0xff]
    %v2900 = vld [vmem:[#allocation11 + $0x20] sm:$0xff]
    %v2901 = vld [vmem:[#allocation11 + $0x28] sm:$0xff]
    %v2902 = vld [vmem:[#allocation11 + $0x30] sm:$0xff]
    %v2903 = vld [vmem:[#allocation11 + $0x38] sm:$0xff]
    %v2904 = vld [vmem:[#allocation11 + $0x40] sm:$0xff]
    %v2905 = vld [vmem:[#allocation11 + $0x48] sm:$0xff]
    %v2906 = vld [vmem:[#allocation11 + $0x50] sm:$0xff]
    %v2907 = vld [vmem:[#allocation11 + $0x58] sm:$0xff]
    %v2908 = vld [vmem:[#allocation11 + $0x60] sm:$0xff]
    %v2909 = vld [vmem:[#allocation11 + $0x68] sm:$0xff]
    %v2910 = vld [vmem:[#allocation11 + $0x70] sm:$0xff]
    %v2911 = vld [vmem:[#allocation11 + $0x78] sm:$0xff]
    %v2912 = vld [vmem:[#allocation11 + $0x80] sm:$0xff]
    %v2913 = vld [vmem:[#allocation11 + $0x88] sm:$0xff]
    %v2914 = vld [vmem:[#allocation11 + $0x90] sm:$0xff]
    %v2915 = vld [vmem:[#allocation11 + $0x98] sm:$0xff]
    %v2916 = vld [vmem:[#allocation11 + $0xa0] sm:$0xff]
    %v2917 = vld [vmem:[#allocation11 + $0xa8] sm:$0xff]
    %v2918 = vld [vmem:[#allocation11 + $0xb0] sm:$0xff]
    %v2919 = vld [vmem:[#allocation11 + $0xb8] sm:$0xff]
    %v2920 = vld [vmem:[#allocation11 + $0xc0] sm:$0xff]
    %v2921 = vld [vmem:[#allocation11 + $0xc8] sm:$0xff]
    %v2922 = vld [vmem:[#allocation11 + $0xd0] sm:$0xff]
    %v2923 = vld [vmem:[#allocation11 + $0xd8] sm:$0xff]
    %v2924 = vld [vmem:[#allocation11 + $0xe0] sm:$0xff]
    %v2925 = vld [vmem:[#allocation11 + $0xe8] sm:$0xff]
    %v2926 = vld [vmem:[#allocation11 + $0xf0] sm:$0xff]
    %v2927 = vld [vmem:[#allocation11 + $0xf8] sm:$0xff]
    %v2928 = vld [vmem:[#allocation11 + $0x100] sm:$0xff]
    %v2929 = vld [vmem:[#allocation11 + $0x108] sm:$0xff]
    %v2930 = vld [vmem:[#allocation11 + $0x110] sm:$0xff]
    %v2931 = vld [vmem:[#allocation11 + $0x118] sm:$0xff]
    %v2932 = vld [vmem:[#allocation11 + $0x120] sm:$0xff]
    %v2933 = vld [vmem:[#allocation11 + $0x128] sm:$0xff]
    %v2934 = vld [vmem:[#allocation11 + $0x130] sm:$0xff]
    %v2935 = vld [vmem:[#allocation11 + $0x138] sm:$0xff]
    %v2936 = vld [vmem:[#allocation11 + $0x140] sm:$0xff]
    %v2937 = vld [vmem:[#allocation11 + $0x148] sm:$0xff]
    %v2938 = vld [vmem:[#allocation11 + $0x150] sm:$0xff]
    %v2939 = vld [vmem:[#allocation11 + $0x158] sm:$0xff]
    %v2940 = vld [vmem:[#allocation11 + $0x160] sm:$0xff]
    %v2941 = vld [vmem:[#allocation11 + $0x168] sm:$0xff]
    %v2942 = vld [vmem:[#allocation11 + $0x170] sm:$0xff]
    %v2943 = vld [vmem:[#allocation11 + $0x178] sm:$0xff]
    %v2944 = vld [vmem:[#allocation11 + $0x180] sm:$0xff]
    %v2945 = vld [vmem:[#allocation11 + $0x188] sm:$0xff]
    %v2946 = vld [vmem:[#allocation11 + $0x190] sm:$0xff]
    %v2947 = vld [vmem:[#allocation11 + $0x198] sm:$0xff]
    %v2948 = vld [vmem:[#allocation11 + $0x1a0] sm:$0xff]
    %v2949 = vld [vmem:[#allocation11 + $0x1a8] sm:$0xff]
    %v2950 = vld [vmem:[#allocation11 + $0x1b0] sm:$0xff]
    %v2951 = vld [vmem:[#allocation11 + $0x1b8] sm:$0xff]
    %v2952 = vld [vmem:[#allocation11 + $0x1c0] sm:$0xff]
    %v2953 = vld [vmem:[#allocation11 + $0x1c8] sm:$0xff]
    %v2954 = vld [vmem:[#allocation11 + $0x1d0] sm:$0xff]
    %v2955 = vld [vmem:[#allocation11 + $0x1d8] sm:$0xff]
    %v2956 = vld [vmem:[#allocation11 + $0x1e0] sm:$0xff]
    %v2957 = vld [vmem:[#allocation11 + $0x1e8] sm:$0xff]
    %v2958 = vld [vmem:[#allocation11 + $0x1f0] sm:$0xff]
    %v2959 = vld [vmem:[#allocation11 + $0x1f8] sm:$0xff]
    %v3024 = vunpack.c.l.b16 %v2896
    %v3025 = vunpack.c.h.b16 %v2896
    %v3026 = vunpack.c.l.b16 %v2897
    %v3027 = vunpack.c.h.b16 %v2897
    %v3028 = vunpack.c.l.b16 %v2898
    %v3029 = vunpack.c.h.b16 %v2898
    %v3030 = vunpack.c.l.b16 %v2899
    %v3031 = vunpack.c.h.b16 %v2899
    %v3032 = vunpack.c.l.b16 %v2900
    %v3033 = vunpack.c.h.b16 %v2900
    %v3034 = vunpack.c.l.b16 %v2901
    %v3035 = vunpack.c.h.b16 %v2901
    %v3036 = vunpack.c.l.b16 %v2902
    %v3037 = vunpack.c.h.b16 %v2902
    %v3038 = vunpack.c.l.b16 %v2903
    %v3039 = vunpack.c.h.b16 %v2903
    %v3040 = vunpack.c.l.b16 %v2904
    %v3041 = vunpack.c.h.b16 %v2904
    %v3042 = vunpack.c.l.b16 %v2905
    %v3043 = vunpack.c.h.b16 %v2905
    %v3044 = vunpack.c.l.b16 %v2906
    %v3045 = vunpack.c.h.b16 %v2906
    %v3046 = vunpack.c.l.b16 %v2907
    %v3047 = vunpack.c.h.b16 %v2907
    %v3048 = vunpack.c.l.b16 %v2908
    %v3049 = vunpack.c.h.b16 %v2908
    %v3050 = vunpack.c.l.b16 %v2909
    %v3051 = vunpack.c.h.b16 %v2909
    %v3052 = vunpack.c.l.b16 %v2910
    %v3053 = vunpack.c.h.b16 %v2910
    %v3054 = vunpack.c.l.b16 %v2911
    %v3055 = vunpack.c.h.b16 %v2911
    %v3056 = vunpack.c.l.b16 %v2912
    %v3057 = vunpack.c.h.b16 %v2912
    %v3058 = vunpack.c.l.b16 %v2913
    %v3059 = vunpack.c.h.b16 %v2913
    %v3060 = vunpack.c.l.b16 %v2914
    %v3061 = vunpack.c.h.b16 %v2914
    %v3062 = vunpack.c.l.b16 %v2915
    %v3063 = vunpack.c.h.b16 %v2915
    %v3064 = vunpack.c.l.b16 %v2916
    %v3065 = vunpack.c.h.b16 %v2916
    %v3066 = vunpack.c.l.b16 %v2917
    %v3067 = vunpack.c.h.b16 %v2917
    %v3068 = vunpack.c.l.b16 %v2918
    %v3069 = vunpack.c.h.b16 %v2918
    %v3070 = vunpack.c.l.b16 %v2919
    %v3071 = vunpack.c.h.b16 %v2919
    %v3072 = vunpack.c.l.b16 %v2920
    %v3073 = vunpack.c.h.b16 %v2920
    %v3074 = vunpack.c.l.b16 %v2921
    %v3075 = vunpack.c.h.b16 %v2921
    %v3076 = vunpack.c.l.b16 %v2922
    %v3077 = vunpack.c.h.b16 %v2922
    %v3078 = vunpack.c.l.b16 %v2923
    %v3079 = vunpack.c.h.b16 %v2923
    %v3080 = vunpack.c.l.b16 %v2924
    %v3081 = vunpack.c.h.b16 %v2924
    %v3082 = vunpack.c.l.b16 %v2925
    %v3083 = vunpack.c.h.b16 %v2925
    %v3084 = vunpack.c.l.b16 %v2926
    %v3085 = vunpack.c.h.b16 %v2926
    %v3086 = vunpack.c.l.b16 %v2927
    %v3087 = vunpack.c.h.b16 %v2927
    %v3088 = vunpack.c.l.b16 %v2928
    %v3089 = vunpack.c.h.b16 %v2928
    %v3090 = vunpack.c.l.b16 %v2929
    %v3091 = vunpack.c.h.b16 %v2929
    %v3092 = vunpack.c.l.b16 %v2930
    %v3093 = vunpack.c.h.b16 %v2930
    %v3094 = vunpack.c.l.b16 %v2931
    %v3095 = vunpack.c.h.b16 %v2931
    %v3096 = vunpack.c.l.b16 %v2932
    %v3097 = vunpack.c.h.b16 %v2932
    %v3098 = vunpack.c.l.b16 %v2933
    %v3099 = vunpack.c.h.b16 %v2933
    %v3100 = vunpack.c.l.b16 %v2934
    %v3101 = vunpack.c.h.b16 %v2934
    %v3102 = vunpack.c.l.b16 %v2935
    %v3103 = vunpack.c.h.b16 %v2935
    %v3104 = vunpack.c.l.b16 %v2936
    %v3105 = vunpack.c.h.b16 %v2936
    %v3106 = vunpack.c.l.b16 %v2937
    %v3107 = vunpack.c.h.b16 %v2937
    %v3108 = vunpack.c.l.b16 %v2938
    %v3109 = vunpack.c.h.b16 %v2938
    %v3110 = vunpack.c.l.b16 %v2939
    %v3111 = vunpack.c.h.b16 %v2939
    %v3112 = vunpack.c.l.b16 %v2940
    %v3113 = vunpack.c.h.b16 %v2940
    %v3114 = vunpack.c.l.b16 %v2941
    %v3115 = vunpack.c.h.b16 %v2941
    %v3116 = vunpack.c.l.b16 %v2942
    %v3117 = vunpack.c.h.b16 %v2942
    %v3118 = vunpack.c.l.b16 %v2943
    %v3119 = vunpack.c.h.b16 %v2943
    %v3120 = vunpack.c.l.b16 %v2944
    %v3121 = vunpack.c.h.b16 %v2944
    %v3122 = vunpack.c.l.b16 %v2945
    %v3123 = vunpack.c.h.b16 %v2945
    %v3124 = vunpack.c.l.b16 %v2946
    %v3125 = vunpack.c.h.b16 %v2946
    %v3126 = vunpack.c.l.b16 %v2947
    %v3127 = vunpack.c.h.b16 %v2947
    %v3128 = vunpack.c.l.b16 %v2948
    %v3129 = vunpack.c.h.b16 %v2948
    %v3130 = vunpack.c.l.b16 %v2949
    %v3131 = vunpack.c.h.b16 %v2949
    %v3132 = vunpack.c.l.b16 %v2950
    %v3133 = vunpack.c.h.b16 %v2950
    %v3134 = vunpack.c.l.b16 %v2951
    %v3135 = vunpack.c.h.b16 %v2951
    %v3136 = vunpack.c.l.b16 %v2952
    %v3137 = vunpack.c.h.b16 %v2952
    %v3138 = vunpack.c.l.b16 %v2953
    %v3139 = vunpack.c.h.b16 %v2953
    %v3140 = vunpack.c.l.b16 %v2954
    %v3141 = vunpack.c.h.b16 %v2954
    %v3142 = vunpack.c.l.b16 %v2955
    %v3143 = vunpack.c.h.b16 %v2955
    %v3144 = vunpack.c.l.b16 %v2956
    %v3145 = vunpack.c.h.b16 %v2956
    %v3146 = vunpack.c.l.b16 %v2957
    %v3147 = vunpack.c.h.b16 %v2957
    %v3148 = vunpack.c.l.b16 %v2958
    %v3149 = vunpack.c.h.b16 %v2958
    %v3150 = vunpack.c.l.b16 %v2959
    %v3151 = vunpack.c.h.b16 %v2959
    %v3152 = vpack.c.b16 %v3032, %v3024
    %v3153 = vpack.c.b16 %v3033, %v3025
    %v3154 = vpack.c.b16 %v3034, %v3026
    %v3155 = vpack.c.b16 %v3035, %v3027
    %v3156 = vpack.c.b16 %v3036, %v3028
    %v3157 = vpack.c.b16 %v3037, %v3029
    %v3158 = vpack.c.b16 %v3038, %v3030
    %v3159 = vpack.c.b16 %v3039, %v3031
    %v3160 = vpack.c.b16 %v3048, %v3040
    %v3161 = vpack.c.b16 %v3049, %v3041
    %v3162 = vpack.c.b16 %v3050, %v3042
    %v3163 = vpack.c.b16 %v3051, %v3043
    %v3164 = vpack.c.b16 %v3052, %v3044
    %v3165 = vpack.c.b16 %v3053, %v3045
    %v3166 = vpack.c.b16 %v3054, %v3046
    %v3167 = vpack.c.b16 %v3055, %v3047
    %v3168 = vpack.c.b16 %v3064, %v3056
    %v3169 = vpack.c.b16 %v3065, %v3057
    %v3170 = vpack.c.b16 %v3066, %v3058
    %v3171 = vpack.c.b16 %v3067, %v3059
    %v3172 = vpack.c.b16 %v3068, %v3060
    %v3173 = vpack.c.b16 %v3069, %v3061
    %v3174 = vpack.c.b16 %v3070, %v3062
    %v3175 = vpack.c.b16 %v3071, %v3063
    %v3176 = vpack.c.b16 %v3080, %v3072
    %v3177 = vpack.c.b16 %v3081, %v3073
    %v3178 = vpack.c.b16 %v3082, %v3074
    %v3179 = vpack.c.b16 %v3083, %v3075
    %v3180 = vpack.c.b16 %v3084, %v3076
    %v3181 = vpack.c.b16 %v3085, %v3077
    %v3182 = vpack.c.b16 %v3086, %v3078
    %v3183 = vpack.c.b16 %v3087, %v3079
    %v3184 = vpack.c.b16 %v3096, %v3088
    %v3185 = vpack.c.b16 %v3097, %v3089
    %v3186 = vpack.c.b16 %v3098, %v3090
    %v3187 = vpack.c.b16 %v3099, %v3091
    %v3188 = vpack.c.b16 %v3100, %v3092
    %v3189 = vpack.c.b16 %v3101, %v3093
    %v3190 = vpack.c.b16 %v3102, %v3094
    %v3191 = vpack.c.b16 %v3103, %v3095
    %v3192 = vpack.c.b16 %v3112, %v3104
    %v3193 = vpack.c.b16 %v3113, %v3105
    %v3194 = vpack.c.b16 %v3114, %v3106
    %v3195 = vpack.c.b16 %v3115, %v3107
    %v3196 = vpack.c.b16 %v3116, %v3108
    %v3197 = vpack.c.b16 %v3117, %v3109
    %v3198 = vpack.c.b16 %v3118, %v3110
    %v3199 = vpack.c.b16 %v3119, %v3111
    %v3200 = vpack.c.b16 %v3128, %v3120
    %v3201 = vpack.c.b16 %v3129, %v3121
    %v3202 = vpack.c.b16 %v3130, %v3122
    %v3203 = vpack.c.b16 %v3131, %v3123
    %v3204 = vpack.c.b16 %v3132, %v3124
    %v3205 = vpack.c.b16 %v3133, %v3125
    %v3206 = vpack.c.b16 %v3134, %v3126
    %v3207 = vpack.c.b16 %v3135, %v3127
    %v3208 = vpack.c.b16 %v3144, %v3136
    %v3209 = vpack.c.b16 %v3145, %v3137
    %v3210 = vpack.c.b16 %v3146, %v3138
    %v3211 = vpack.c.b16 %v3147, %v3139
    %v3212 = vpack.c.b16 %v3148, %v3140
    %v3213 = vpack.c.b16 %v3149, %v3141
    %v3214 = vpack.c.b16 %v3150, %v3142
    %v3215 = vpack.c.b16 %v3151, %v3143
    %3280 = vmatprep.subr.bf16.mxu0 %v3153
    %3281 = vmatpush1.bf16.msra.mxu0 %v3152
    %3282 = vmatprep.subr.bf16.mxu0 %v3161
    %3283 = vmatpush1.bf16.msra.mxu0 %v3160
    %3284 = vmatprep.subr.bf16.mxu0 %v3169
    %3285 = vmatpush1.bf16.msra.mxu0 %v3168
    %3286 = vmatprep.subr.bf16.mxu0 %v3177
    %3287 = vmatpush1.bf16.msra.mxu0 %v3176
    %3288 = vmatprep.subr.bf16.mxu0 %v3185
    %3289 = vmatpush1.bf16.msra.mxu0 %v3184
    %3290 = vmatprep.subr.bf16.mxu0 %v3193
    %3291 = vmatpush1.bf16.msra.mxu0 %v3192
    %3292 = vmatprep.subr.bf16.mxu0 %v3201
    %3293 = vmatpush1.bf16.msra.mxu0 %v3200
    %3294 = vmatprep.subr.bf16.mxu0 %v3209
    %3295 = vmatpush1.bf16.msra.mxu0 %v3208
    %3296 = vmatprep.subr.bf16.mxu0 0
    %3297 = vmatpush1.bf16.msra.mxu0 0
    %3298 = vmatprep.subr.bf16.mxu0 0
    %3299 = vmatpush1.bf16.msra.mxu0 0
    %3300 = vmatprep.subr.bf16.mxu0 0
    %3301 = vmatpush1.bf16.msra.mxu0 0
    %3302 = vmatprep.subr.bf16.mxu0 0
    %3303 = vmatpush1.bf16.msra.mxu0 0
    %3304 = vmatprep.subr.bf16.mxu0 0
    %3305 = vmatpush1.bf16.msra.mxu0 0
    %3306 = vmatprep.subr.bf16.mxu0 0
    %3307 = vmatpush1.bf16.msra.mxu0 0
    %3308 = vmatprep.subr.bf16.mxu0 0
    %3309 = vmatpush1.bf16.msra.mxu0 0
    %3310 = vmatprep.subr.bf16.mxu0 0
    %3311 = vmatpush1.bf16.msra.mxu0 0
    %3312 = vmatprep.mubr.bf16.mxu0 0
    %3313 = vmatmul.mubr.bf16.gmra.mrb[0].mxu0 %v2894
    %v3314 = vpop.f32.mrb[0].mxu0
    %v3315 = vadd.f32 0.0, %v3314
    %v3316 = vpop.f32.mrb[0].mxu0
    %v3317 = vadd.f32 0.0, %v3316
    %v3318 = vpop.f32.mrb[0].mxu0
    %v3319 = vadd.f32 0.0, %v3318
    %v3320 = vpop.f32.mrb[0].mxu0
    %v3321 = vadd.f32 0.0, %v3320
    %3322 = vmatprep.mubr.bf16.mxu0 0
    %3323 = vmatmul.mubr.bf16.gmra.mrb[0].mxu0 %v2895
    %v3324 = vpop.f32.mrb[0].mxu0
    %v3325 = vadd.f32 0.0, %v3324
    %v3326 = vpop.f32.mrb[0].mxu0
    %v3327 = vadd.f32 0.0, %v3326
    %v3328 = vpop.f32.mrb[0].mxu0
    %v3329 = vadd.f32 0.0, %v3328
    %v3330 = vpop.f32.mrb[0].mxu0
    %v3331 = vadd.f32 0.0, %v3330
    %3332 = vdwg.mxu0
    %3333 = vmatprep.subr.bf16.mxu0 %v3155
    %3334 = vmatpush1.bf16.msra.mxu0 %v3154
    %3335 = vmatprep.subr.bf16.mxu0 %v3163
    %3336 = vmatpush1.bf16.msra.mxu0 %v3162
    %3337 = vmatprep.subr.bf16.mxu0 %v3171
    %3338 = vmatpush1.bf16.msra.mxu0 %v3170
    %3339 = vmatprep.subr.bf16.mxu0 %v3179
    %3340 = vmatpush1.bf16.msra.mxu0 %v3178
    %3341 = vmatprep.subr.bf16.mxu0 %v3187
    %3342 = vmatpush1.bf16.msra.mxu0 %v3186
    %3343 = vmatprep.subr.bf16.mxu0 %v3195
    %3344 = vmatpush1.bf16.msra.mxu0 %v3194
    %3345 = vmatprep.subr.bf16.mxu0 %v3203
    %3346 = vmatpush1.bf16.msra.mxu0 %v3202
    %3347 = vmatprep.subr.bf16.mxu0 %v3211
    %3348 = vmatpush1.bf16.msra.mxu0 %v3210
    %3349 = vmatprep.subr.bf16.mxu0 0
    %3350 = vmatpush1.bf16.msra.mxu0 0
    %3351 = vmatprep.subr.bf16.mxu0 0
    %3352 = vmatpush1.bf16.msra.mxu0 0
    %3353 = vmatprep.subr.bf16.mxu0 0
    %3354 = vmatpush1.bf16.msra.mxu0 0
    %3355 = vmatprep.subr.bf16.mxu0 0
    %3356 = vmatpush1.bf16.msra.mxu0 0
    %3357 = vmatprep.subr.bf16.mxu0 0
    %3358 = vmatpush1.bf16.msra.mxu0 0
    %3359 = vmatprep.subr.bf16.mxu0 0
    %3360 = vmatpush1.bf16.msra.mxu0 0
    %3361 = vmatprep.subr.bf16.mxu0 0
    %3362 = vmatpush1.bf16.msra.mxu0 0
    %3363 = vmatprep.subr.bf16.mxu0 0
    %3364 = vmatpush1.bf16.msra.mxu0 0
    %3365 = vmatprep.mubr.bf16.mxu0 0
    %3366 = vmatmul.mubr.bf16.gmra.mrb[0].mxu0 %v2894
    %v3367 = vpop.f32.mrb[0].mxu0
    %v3368 = vadd.f32 0.0, %v3367
    %v3369 = vpop.f32.mrb[0].mxu0
    %v3370 = vadd.f32 0.0, %v3369
    %v3371 = vpop.f32.mrb[0].mxu0
    %v3372 = vadd.f32 0.0, %v3371
    %v3373 = vpop.f32.mrb[0].mxu0
    %v3374 = vadd.f32 0.0, %v3373
    %3375 = vmatprep.mubr.bf16.mxu0 0
    %3376 = vmatmul.mubr.bf16.gmra.mrb[0].mxu0 %v2895
    %v3377 = vpop.f32.mrb[0].mxu0
    %v3378 = vadd.f32 0.0, %v3377
    %v3379 = vpop.f32.mrb[0].mxu0
    %v3380 = vadd.f32 0.0, %v3379
    %v3381 = vpop.f32.mrb[0].mxu0
    %v3382 = vadd.f32 0.0, %v3381
    %v3383 = vpop.f32.mrb[0].mxu0
    %v3384 = vadd.f32 0.0, %v3383
    %3385 = vdwg.mxu0
    %3386 = vmatprep.subr.bf16.mxu0 %v3157
    %3387 = vmatpush1.bf16.msra.mxu0 %v3156
    %3388 = vmatprep.subr.bf16.mxu0 %v3165
    %3389 = vmatpush1.bf16.msra.mxu0 %v3164
    %3390 = vmatprep.subr.bf16.mxu0 %v3173
    %3391 = vmatpush1.bf16.msra.mxu0 %v3172
    %3392 = vmatprep.subr.bf16.mxu0 %v3181
    %3393 = vmatpush1.bf16.msra.mxu0 %v3180
    %3394 = vmatprep.subr.bf16.mxu0 %v3189
    %3395 = vmatpush1.bf16.msra.mxu0 %v3188
    %3396 = vmatprep.subr.bf16.mxu0 %v3197
    %3397 = vmatpush1.bf16.msra.mxu0 %v3196
    %3398 = vmatprep.subr.bf16.mxu0 %v3205
    %3399 = vmatpush1.bf16.msra.mxu0 %v3204
    %3400 = vmatprep.subr.bf16.mxu0 %v3213
    %3401 = vmatpush1.bf16.msra.mxu0 %v3212
    %3402 = vmatprep.subr.bf16.mxu0 0
    %3403 = vmatpush1.bf16.msra.mxu0 0
    %3404 = vmatprep.subr.bf16.mxu0 0
    %3405 = vmatpush1.bf16.msra.mxu0 0
    %3406 = vmatprep.subr.bf16.mxu0 0
    %3407 = vmatpush1.bf16.msra.mxu0 0
    %3408 = vmatprep.subr.bf16.mxu0 0
    %3409 = vmatpush1.bf16.msra.mxu0 0
    %3410 = vmatprep.subr.bf16.mxu0 0
    %3411 = vmatpush1.bf16.msra.mxu0 0
    %3412 = vmatprep.subr.bf16.mxu0 0
    %3413 = vmatpush1.bf16.msra.mxu0 0
    %3414 = vmatprep.subr.bf16.mxu0 0
    %3415 = vmatpush1.bf16.msra.mxu0 0
    %3416 = vmatprep.subr.bf16.mxu0 0
    %3417 = vmatpush1.bf16.msra.mxu0 0
    %3418 = vmatprep.mubr.bf16.mxu0 0
    %3419 = vmatmul.mubr.bf16.gmra.mrb[0].mxu0 %v2894
    %v3420 = vpop.f32.mrb[0].mxu0
    %v3421 = vadd.f32 0.0, %v3420
    %v3422 = vpop.f32.mrb[0].mxu0
    %v3423 = vadd.f32 0.0, %v3422
    %v3424 = vpop.f32.mrb[0].mxu0
    %v3425 = vadd.f32 0.0, %v3424
    %v3426 = vpop.f32.mrb[0].mxu0
    %v3427 = vadd.f32 0.0, %v3426
    %3428 = vmatprep.mubr.bf16.mxu0 0
    %3429 = vmatmul.mubr.bf16.gmra.mrb[0].mxu0 %v2895
    %v3430 = vpop.f32.mrb[0].mxu0
    %v3431 = vadd.f32 0.0, %v3430
    %v3432 = vpop.f32.mrb[0].mxu0
    %v3433 = vadd.f32 0.0, %v3432
    %v3434 = vpop.f32.mrb[0].mxu0
    %v3435 = vadd.f32 0.0, %v3434
    %v3436 = vpop.f32.mrb[0].mxu0
    %v3437 = vadd.f32 0.0, %v3436
    %3438 = vdwg.mxu0
    %3439 = vmatprep.subr.bf16.mxu0 %v3159
    %3440 = vmatpush1.bf16.msra.mxu0 %v3158
    %3441 = vmatprep.subr.bf16.mxu0 %v3167
    %3442 = vmatpush1.bf16.msra.mxu0 %v3166
    %3443 = vmatprep.subr.bf16.mxu0 %v3175
    %3444 = vmatpush1.bf16.msra.mxu0 %v3174
    %3445 = vmatprep.subr.bf16.mxu0 %v3183
    %3446 = vmatpush1.bf16.msra.mxu0 %v3182
    %3447 = vmatprep.subr.bf16.mxu0 %v3191
    %3448 = vmatpush1.bf16.msra.mxu0 %v3190
    %3449 = vmatprep.subr.bf16.mxu0 %v3199
    %3450 = vmatpush1.bf16.msra.mxu0 %v3198
    %3451 = vmatprep.subr.bf16.mxu0 %v3207
    %3452 = vmatpush1.bf16.msra.mxu0 %v3206
    %3453 = vmatprep.subr.bf16.mxu0 %v3215
    %3454 = vmatpush1.bf16.msra.mxu0 %v3214
    %3455 = vmatprep.subr.bf16.mxu0 0
    %3456 = vmatpush1.bf16.msra.mxu0 0
    %3457 = vmatprep.subr.bf16.mxu0 0
    %3458 = vmatpush1.bf16.msra.mxu0 0
    %3459 = vmatprep.subr.bf16.mxu0 0
    %3460 = vmatpush1.bf16.msra.mxu0 0
    %3461 = vmatprep.subr.bf16.mxu0 0
    %3462 = vmatpush1.bf16.msra.mxu0 0
    %3463 = vmatprep.subr.bf16.mxu0 0
    %3464 = vmatpush1.bf16.msra.mxu0 0
    %3465 = vmatprep.subr.bf16.mxu0 0
    %3466 = vmatpush1.bf16.msra.mxu0 0
    %3467 = vmatprep.subr.bf16.mxu0 0
    %3468 = vmatpush1.bf16.msra.mxu0 0
    %3469 = vmatprep.subr.bf16.mxu0 0
    %3470 = vmatpush1.bf16.msra.mxu0 0
    %3471 = vmatprep.mubr.bf16.mxu0 0
    %3472 = vmatmul.mubr.bf16.gmra.mrb[0].mxu0 %v2894
    %v3473 = vpop.f32.mrb[0].mxu0
    %v3474 = vadd.f32 0.0, %v3473
    %v3475 = vpop.f32.mrb[0].mxu0
    %v3476 = vadd.f32 0.0, %v3475
    %v3477 = vpop.f32.mrb[0].mxu0
    %v3478 = vadd.f32 0.0, %v3477
    %v3479 = vpop.f32.mrb[0].mxu0
    %v3480 = vadd.f32 0.0, %v3479
    %3481 = vmatprep.mubr.bf16.mxu0 0
    %3482 = vmatmul.mubr.bf16.gmra.mrb[0].mxu0 %v2895
    %v3483 = vpop.f32.mrb[0].mxu0
    %v3484 = vadd.f32 0.0, %v3483
    %v3485 = vpop.f32.mrb[0].mxu0
    %v3486 = vadd.f32 0.0, %v3485
    %v3487 = vpop.f32.mrb[0].mxu0
    %v3488 = vadd.f32 0.0, %v3487
    %v3489 = vpop.f32.mrb[0].mxu0
    %v3490 = vadd.f32 0.0, %v3489
    %3491 = vdwg.mxu0
    %v3492 = vxor.u32 %v3315, 2147483648
    %v3493 = vxor.u32 %v3317, 2147483648
    %v3494 = vxor.u32 %v3368, 2147483648
    %v3495 = vxor.u32 %v3370, 2147483648
    %v3496 = vxor.u32 %v3319, 2147483648
    %v3497 = vxor.u32 %v3321, 2147483648
    %v3498 = vxor.u32 %v3372, 2147483648
    %v3499 = vxor.u32 %v3374, 2147483648
    %v3500 = vxor.u32 %v3325, 2147483648
    %v3501 = vxor.u32 %v3327, 2147483648
    %v3502 = vxor.u32 %v3378, 2147483648
    %v3503 = vxor.u32 %v3380, 2147483648
    %v3504 = vxor.u32 %v3329, 2147483648
    %v3505 = vxor.u32 %v3331, 2147483648
    %v3506 = vxor.u32 %v3382, 2147483648
    %v3507 = vxor.u32 %v3384, 2147483648
    %v3508 = vmul.f32 %v3492, 1.442695
    %v3509 = vpow.pop %v3508
    %v3510 = vmul.f32 %v3493, 1.442695
    %v3511 = vpow.pop %v3510
    %v3512 = vmul.f32 %v3494, 1.442695
    %v3513 = vpow.pop %v3512
    %v3514 = vmul.f32 %v3495, 1.442695
    %v3515 = vpow.pop %v3514
    %v3516 = vmul.f32 %v3496, 1.442695
    %v3517 = vpow.pop %v3516
    %v3518 = vmul.f32 %v3497, 1.442695
    %v3519 = vpow.pop %v3518
    %v3520 = vmul.f32 %v3498, 1.442695
    %v3521 = vpow.pop %v3520
    %v3522 = vmul.f32 %v3499, 1.442695
    %v3523 = vpow.pop %v3522
    %v3524 = vmul.f32 %v3500, 1.442695
    %v3525 = vpow.pop %v3524
    %v3526 = vmul.f32 %v3501, 1.442695
    %v3527 = vpow.pop %v3526
    %v3528 = vmul.f32 %v3502, 1.442695
    %v3529 = vpow.pop %v3528
    %v3530 = vmul.f32 %v3503, 1.442695
    %v3531 = vpow.pop %v3530
    %v3532 = vmul.f32 %v3504, 1.442695
    %v3533 = vpow.pop %v3532
    %v3534 = vmul.f32 %v3505, 1.442695
    %v3535 = vpow.pop %v3534
    %v3536 = vmul.f32 %v3506, 1.442695
    %v3537 = vpow.pop %v3536
    %v3538 = vmul.f32 %v3507, 1.442695
    %v3539 = vpow.pop %v3538
    %v3540 = vadd.f32 %v3509, 1.0
    %v3541 = vadd.f32 %v3511, 1.0
    %v3542 = vadd.f32 %v3513, 1.0
    %v3543 = vadd.f32 %v3515, 1.0
    %v3544 = vadd.f32 %v3517, 1.0
    %v3545 = vadd.f32 %v3519, 1.0
    %v3546 = vadd.f32 %v3521, 1.0
    %v3547 = vadd.f32 %v3523, 1.0
    %v3548 = vadd.f32 %v3525, 1.0
    %v3549 = vadd.f32 %v3527, 1.0
    %v3550 = vadd.f32 %v3529, 1.0
    %v3551 = vadd.f32 %v3531, 1.0
    %v3552 = vadd.f32 %v3533, 1.0
    %v3553 = vadd.f32 %v3535, 1.0
    %v3554 = vadd.f32 %v3537, 1.0
    %v3555 = vadd.f32 %v3539, 1.0
    %v3556 = vrcp.pop %v3540
    %v3557 = vmul.f32 1.0, %v3556
    %v3558 = vrcp.pop %v3541
    %v3559 = vmul.f32 1.0, %v3558
    %v3560 = vrcp.pop %v3542
    %v3561 = vmul.f32 1.0, %v3560
    %v3562 = vrcp.pop %v3543
    %v3563 = vmul.f32 1.0, %v3562
    %v3564 = vrcp.pop %v3544
    %v3565 = vmul.f32 1.0, %v3564
    %v3566 = vrcp.pop %v3545
    %v3567 = vmul.f32 1.0, %v3566
    %v3568 = vrcp.pop %v3546
    %v3569 = vmul.f32 1.0, %v3568
    %v3570 = vrcp.pop %v3547
    %v3571 = vmul.f32 1.0, %v3570
    %v3572 = vrcp.pop %v3548
    %v3573 = vmul.f32 1.0, %v3572
    %v3574 = vrcp.pop %v3549
    %v3575 = vmul.f32 1.0, %v3574
    %v3576 = vrcp.pop %v3550
    %v3577 = vmul.f32 1.0, %v3576
    %v3578 = vrcp.pop %v3551
    %v3579 = vmul.f32 1.0, %v3578
    %v3580 = vrcp.pop %v3552
    %v3581 = vmul.f32 1.0, %v3580
    %v3582 = vrcp.pop %v3553
    %v3583 = vmul.f32 1.0, %v3582
    %v3584 = vrcp.pop %v3554
    %v3585 = vmul.f32 1.0, %v3584
    %v3586 = vrcp.pop %v3555
    %v3587 = vmul.f32 1.0, %v3586
    %v3588 = vmul.f32 %v3315, %v3557
    %v3589 = vmul.f32 %v3317, %v3559
    %v3590 = vmul.f32 %v3368, %v3561
    %v3591 = vmul.f32 %v3370, %v3563
    %v3592 = vmul.f32 %v3319, %v3565
    %v3593 = vmul.f32 %v3321, %v3567
    %v3594 = vmul.f32 %v3372, %v3569
    %v3595 = vmul.f32 %v3374, %v3571
    %v3596 = vmul.f32 %v3325, %v3573
    %v3597 = vmul.f32 %v3327, %v3575
    %v3598 = vmul.f32 %v3378, %v3577
    %v3599 = vmul.f32 %v3380, %v3579
    %v3600 = vmul.f32 %v3329, %v3581
    %v3601 = vmul.f32 %v3331, %v3583
    %v3602 = vmul.f32 %v3382, %v3585
    %v3603 = vmul.f32 %v3384, %v3587
    %v3604 = vmul.f32 %v3588, %v3421
    %v3605 = vmul.f32 %v3589, %v3423
    %v3606 = vmul.f32 %v3590, %v3474
    %v3607 = vmul.f32 %v3591, %v3476
    %v3608 = vmul.f32 %v3592, %v3425
    %v3609 = vmul.f32 %v3593, %v3427
    %v3610 = vmul.f32 %v3594, %v3478
    %v3611 = vmul.f32 %v3595, %v3480
    %v3612 = vmul.f32 %v3596, %v3431
    %v3613 = vmul.f32 %v3597, %v3433
    %v3614 = vmul.f32 %v3598, %v3484
    %v3615 = vmul.f32 %v3599, %v3486
    %v3616 = vmul.f32 %v3600, %v3435
    %v3617 = vmul.f32 %v3601, %v3437
    %v3618 = vmul.f32 %v3602, %v3488
    %v3619 = vmul.f32 %v3603, %v3490
    %v3620 = vpack.c.bf16 %v3608, %v3604
    %v3621 = vpack.c.bf16 %v3609, %v3605
    %v3622 = vpack.c.bf16 %v3610, %v3606
    %v3623 = vpack.c.bf16 %v3611, %v3607
    %v3624 = vpack.c.bf16 %v3616, %v3612
    %v3625 = vpack.c.bf16 %v3617, %v3613
    %v3626 = vpack.c.bf16 %v3618, %v3614
    %v3627 = vpack.c.bf16 %v3619, %v3615
    %v3628 = vld [vmem:[#allocation13] sm:$0xf]
    %v3629 = vld [vmem:[#allocation13 + $0x4] sm:$0xf]
    %v3630 = vld [vmem:[#allocation13 + $0x8] sm:$0xf]
    %v3631 = vld [vmem:[#allocation13 + $0xc] sm:$0xf]
    %v3632 = vld [vmem:[#allocation13 + $0x10] sm:$0xf]
    %v3633 = vld [vmem:[#allocation13 + $0x14] sm:$0xf]
    %v3634 = vld [vmem:[#allocation13 + $0x18] sm:$0xf]
    %v3635 = vld [vmem:[#allocation13 + $0x1c] sm:$0xf]
    %v3636 = vld [vmem:[#allocation13 + $0x20] sm:$0xf]
    %v3637 = vld [vmem:[#allocation13 + $0x24] sm:$0xf]
    %v3638 = vld [vmem:[#allocation13 + $0x28] sm:$0xf]
    %v3639 = vld [vmem:[#allocation13 + $0x2c] sm:$0xf]
    %v3640 = vld [vmem:[#allocation13 + $0x30] sm:$0xf]
    %v3641 = vld [vmem:[#allocation13 + $0x34] sm:$0xf]
    %v3642 = vld [vmem:[#allocation13 + $0x38] sm:$0xf]
    %v3643 = vld [vmem:[#allocation13 + $0x3c] sm:$0xf]
    %v3644 = vld [vmem:[#allocation13 + $0x40] sm:$0xf]
    %v3645 = vld [vmem:[#allocation13 + $0x44] sm:$0xf]
    %v3646 = vld [vmem:[#allocation13 + $0x48] sm:$0xf]
    %v3647 = vld [vmem:[#allocation13 + $0x4c] sm:$0xf]
    %v3648 = vld [vmem:[#allocation13 + $0x50] sm:$0xf]
    %v3649 = vld [vmem:[#allocation13 + $0x54] sm:$0xf]
    %v3650 = vld [vmem:[#allocation13 + $0x58] sm:$0xf]
    %v3651 = vld [vmem:[#allocation13 + $0x5c] sm:$0xf]
    %v3652 = vld [vmem:[#allocation13 + $0x60] sm:$0xf]
    %v3653 = vld [vmem:[#allocation13 + $0x64] sm:$0xf]
    %v3654 = vld [vmem:[#allocation13 + $0x68] sm:$0xf]
    %v3655 = vld [vmem:[#allocation13 + $0x6c] sm:$0xf]
    %v3656 = vld [vmem:[#allocation13 + $0x70] sm:$0xf]
    %v3657 = vld [vmem:[#allocation13 + $0x74] sm:$0xf]
    %v3658 = vld [vmem:[#allocation13 + $0x78] sm:$0xf]
    %v3659 = vld [vmem:[#allocation13 + $0x7c] sm:$0xf]
    %v3660 = vld [vmem:[#allocation13 + $0x80] sm:$0xf]
    %v3661 = vld [vmem:[#allocation13 + $0x84] sm:$0xf]
    %v3662 = vld [vmem:[#allocation13 + $0x88] sm:$0xf]
    %v3663 = vld [vmem:[#allocation13 + $0x8c] sm:$0xf]
    %v3664 = vld [vmem:[#allocation13 + $0x90] sm:$0xf]
    %v3665 = vld [vmem:[#allocation13 + $0x94] sm:$0xf]
    %v3666 = vld [vmem:[#allocation13 + $0x98] sm:$0xf]
    %v3667 = vld [vmem:[#allocation13 + $0x9c] sm:$0xf]
    %v3668 = vld [vmem:[#allocation13 + $0xa0] sm:$0xf]
    %v3669 = vld [vmem:[#allocation13 + $0xa4] sm:$0xf]
    %v3670 = vld [vmem:[#allocation13 + $0xa8] sm:$0xf]
    %v3671 = vld [vmem:[#allocation13 + $0xac] sm:$0xf]
    %v3672 = vld [vmem:[#allocation13 + $0xb0] sm:$0xf]
    %v3673 = vld [vmem:[#allocation13 + $0xb4] sm:$0xf]
    %v3674 = vld [vmem:[#allocation13 + $0xb8] sm:$0xf]
    %v3675 = vld [vmem:[#allocation13 + $0xbc] sm:$0xf]
    %v3676 = vld [vmem:[#allocation13 + $0xc0] sm:$0xf]
    %v3677 = vld [vmem:[#allocation13 + $0xc4] sm:$0xf]
    %v3678 = vld [vmem:[#allocation13 + $0xc8] sm:$0xf]
    %v3679 = vld [vmem:[#allocation13 + $0xcc] sm:$0xf]
    %v3680 = vld [vmem:[#allocation13 + $0xd0] sm:$0xf]
    %v3681 = vld [vmem:[#allocation13 + $0xd4] sm:$0xf]
    %v3682 = vld [vmem:[#allocation13 + $0xd8] sm:$0xf]
    %v3683 = vld [vmem:[#allocation13 + $0xdc] sm:$0xf]
    %v3684 = vld [vmem:[#allocation13 + $0xe0] sm:$0xf]
    %v3685 = vld [vmem:[#allocation13 + $0xe4] sm:$0xf]
    %v3686 = vld [vmem:[#allocation13 + $0xe8] sm:$0xf]
    %v3687 = vld [vmem:[#allocation13 + $0xec] sm:$0xf]
    %v3688 = vld [vmem:[#allocation13 + $0xf0] sm:$0xf]
    %v3689 = vld [vmem:[#allocation13 + $0xf4] sm:$0xf]
    %v3690 = vld [vmem:[#allocation13 + $0xf8] sm:$0xf]
    %v3691 = vld [vmem:[#allocation13 + $0xfc] sm:$0xf]
    %v3756 = vunpack.c.l.b16 %v3628
    %v3757 = vunpack.c.l.b16 %v3629
    %v3758 = vunpack.c.l.b16 %v3630
    %v3759 = vunpack.c.l.b16 %v3631
    %v3760 = vunpack.c.l.b16 %v3632
    %v3761 = vunpack.c.l.b16 %v3633
    %v3762 = vunpack.c.l.b16 %v3634
    %v3763 = vunpack.c.l.b16 %v3635
    %v3764 = vunpack.c.l.b16 %v3636
    %v3765 = vunpack.c.l.b16 %v3637
    %v3766 = vunpack.c.l.b16 %v3638
    %v3767 = vunpack.c.l.b16 %v3639
    %v3768 = vunpack.c.l.b16 %v3640
    %v3769 = vunpack.c.l.b16 %v3641
    %v3770 = vunpack.c.l.b16 %v3642
    %v3771 = vunpack.c.l.b16 %v3643
    %v3772 = vunpack.c.l.b16 %v3644
    %v3773 = vunpack.c.l.b16 %v3645
    %v3774 = vunpack.c.l.b16 %v3646
    %v3775 = vunpack.c.l.b16 %v3647
    %v3776 = vunpack.c.l.b16 %v3648
    %v3777 = vunpack.c.l.b16 %v3649
    %v3778 = vunpack.c.l.b16 %v3650
    %v3779 = vunpack.c.l.b16 %v3651
    %v3780 = vunpack.c.l.b16 %v3652
    %v3781 = vunpack.c.l.b16 %v3653
    %v3782 = vunpack.c.l.b16 %v3654
    %v3783 = vunpack.c.l.b16 %v3655
    %v3784 = vunpack.c.l.b16 %v3656
    %v3785 = vunpack.c.l.b16 %v3657
    %v3786 = vunpack.c.l.b16 %v3658
    %v3787 = vunpack.c.l.b16 %v3659
    %v3788 = vunpack.c.l.b16 %v3660
    %v3789 = vunpack.c.l.b16 %v3661
    %v3790 = vunpack.c.l.b16 %v3662
    %v3791 = vunpack.c.l.b16 %v3663
    %v3792 = vunpack.c.l.b16 %v3664
    %v3793 = vunpack.c.l.b16 %v3665
    %v3794 = vunpack.c.l.b16 %v3666
    %v3795 = vunpack.c.l.b16 %v3667
    %v3796 = vunpack.c.l.b16 %v3668
    %v3797 = vunpack.c.l.b16 %v3669
    %v3798 = vunpack.c.l.b16 %v3670
    %v3799 = vunpack.c.l.b16 %v3671
    %v3800 = vunpack.c.l.b16 %v3672
    %v3801 = vunpack.c.l.b16 %v3673
    %v3802 = vunpack.c.l.b16 %v3674
    %v3803 = vunpack.c.l.b16 %v3675
    %v3804 = vunpack.c.l.b16 %v3676
    %v3805 = vunpack.c.l.b16 %v3677
    %v3806 = vunpack.c.l.b16 %v3678
    %v3807 = vunpack.c.l.b16 %v3679
    %v3808 = vunpack.c.l.b16 %v3680
    %v3809 = vunpack.c.l.b16 %v3681
    %v3810 = vunpack.c.l.b16 %v3682
    %v3811 = vunpack.c.l.b16 %v3683
    %v3812 = vunpack.c.l.b16 %v3684
    %v3813 = vunpack.c.l.b16 %v3685
    %v3814 = vunpack.c.l.b16 %v3686
    %v3815 = vunpack.c.l.b16 %v3687
    %v3816 = vunpack.c.l.b16 %v3688
    %v3817 = vunpack.c.l.b16 %v3689
    %v3818 = vunpack.c.l.b16 %v3690
    %v3819 = vunpack.c.l.b16 %v3691
    %v3820 = vpack.c.b16 %v3757, %v3756
    %v3821 = vpack.c.b16 %v3759, %v3758
    %v3822 = vpack.c.b16 %v3761, %v3760
    %v3823 = vpack.c.b16 %v3763, %v3762
    %v3824 = vpack.c.b16 %v3765, %v3764
    %v3825 = vpack.c.b16 %v3767, %v3766
    %v3826 = vpack.c.b16 %v3769, %v3768
    %v3827 = vpack.c.b16 %v3771, %v3770
    %v3828 = vpack.c.b16 %v3773, %v3772
    %v3829 = vpack.c.b16 %v3775, %v3774
    %v3830 = vpack.c.b16 %v3777, %v3776
    %v3831 = vpack.c.b16 %v3779, %v3778
    %v3832 = vpack.c.b16 %v3781, %v3780
    %v3833 = vpack.c.b16 %v3783, %v3782
    %v3834 = vpack.c.b16 %v3785, %v3784
    %v3835 = vpack.c.b16 %v3787, %v3786
    %v3836 = vpack.c.b16 %v3789, %v3788
    %v3837 = vpack.c.b16 %v3791, %v3790
    %v3838 = vpack.c.b16 %v3793, %v3792
    %v3839 = vpack.c.b16 %v3795, %v3794
    %v3840 = vpack.c.b16 %v3797, %v3796
    %v3841 = vpack.c.b16 %v3799, %v3798
    %v3842 = vpack.c.b16 %v3801, %v3800
    %v3843 = vpack.c.b16 %v3803, %v3802
    %v3844 = vpack.c.b16 %v3805, %v3804
    %v3845 = vpack.c.b16 %v3807, %v3806
    %v3846 = vpack.c.b16 %v3809, %v3808
    %v3847 = vpack.c.b16 %v3811, %v3810
    %v3848 = vpack.c.b16 %v3813, %v3812
    %v3849 = vpack.c.b16 %v3815, %v3814
    %v3850 = vpack.c.b16 %v3817, %v3816
    %v3851 = vpack.c.b16 %v3819, %v3818
    %3884 = vmatprep.subr.bf16.mxu0 0
    %3885 = vmatpush1.bf16.msra.mxu0 %v3820
    %3886 = vmatprep.subr.bf16.mxu0 0
    %3887 = vmatpush1.bf16.msra.mxu0 %v3821
    %3888 = vmatprep.subr.bf16.mxu0 0
    %3889 = vmatpush1.bf16.msra.mxu0 %v3822
    %3890 = vmatprep.subr.bf16.mxu0 0
    %3891 = vmatpush1.bf16.msra.mxu0 %v3823
    %3892 = vmatprep.subr.bf16.mxu0 0
    %3893 = vmatpush1.bf16.msra.mxu0 %v3824
    %3894 = vmatprep.subr.bf16.mxu0 0
    %3895 = vmatpush1.bf16.msra.mxu0 %v3825
    %3896 = vmatprep.subr.bf16.mxu0 0
    %3897 = vmatpush1.bf16.msra.mxu0 %v3826
    %3898 = vmatprep.subr.bf16.mxu0 0
    %3899 = vmatpush1.bf16.msra.mxu0 %v3827
    %3900 = vmatprep.subr.bf16.mxu0 0
    %3901 = vmatpush1.bf16.msra.mxu0 %v3828
    %3902 = vmatprep.subr.bf16.mxu0 0
    %3903 = vmatpush1.bf16.msra.mxu0 %v3829
    %3904 = vmatprep.subr.bf16.mxu0 0
    %3905 = vmatpush1.bf16.msra.mxu0 %v3830
    %3906 = vmatprep.subr.bf16.mxu0 0
    %3907 = vmatpush1.bf16.msra.mxu0 %v3831
    %3908 = vmatprep.subr.bf16.mxu0 0
    %3909 = vmatpush1.bf16.msra.mxu0 %v3832
    %3910 = vmatprep.subr.bf16.mxu0 0
    %3911 = vmatpush1.bf16.msra.mxu0 %v3833
    %3912 = vmatprep.subr.bf16.mxu0 0
    %3913 = vmatpush1.bf16.msra.mxu0 %v3834
    %3914 = vmatprep.subr.bf16.mxu0 0
    %3915 = vmatpush1.bf16.msra.mxu0 %v3835
    %3916 = vmatprep.mubr.bf16.mxu0 %v3621
    %3917 = vmatmul.mubr.bf16.gmra.mrb[0].mxu0 %v3620
    %v3918 = vpop.f32.mrb[0].mxu0
    %v3919 = vadd.f32 0.0, %v3918
    %v3920 = vpop.f32.mrb[0].mxu0
    %v3921 = vpop.f32.mrb[0].mxu0
    %v3922 = vadd.f32 0.0, %v3921
    %v3923 = vpop.f32.mrb[0].mxu0
    %3924 = vmatprep.mubr.bf16.mxu0 %v3625
    %3925 = vmatmul.mubr.bf16.gmra.mrb[0].mxu0 %v3624
    %v3926 = vpop.f32.mrb[0].mxu0
    %v3927 = vadd.f32 0.0, %v3926
    %v3928 = vpop.f32.mrb[0].mxu0
    %v3929 = vpop.f32.mrb[0].mxu0
    %v3930 = vadd.f32 0.0, %v3929
    %v3931 = vpop.f32.mrb[0].mxu0
    %3932 = vdwg.mxu0
    %3933 = vmatprep.subr.bf16.mxu0 0
    %3934 = vmatpush1.bf16.msra.mxu0 %v3836
    %3935 = vmatprep.subr.bf16.mxu0 0
    %3936 = vmatpush1.bf16.msra.mxu0 %v3837
    %3937 = vmatprep.subr.bf16.mxu0 0
    %3938 = vmatpush1.bf16.msra.mxu0 %v3838
    %3939 = vmatprep.subr.bf16.mxu0 0
    %3940 = vmatpush1.bf16.msra.mxu0 %v3839
    %3941 = vmatprep.subr.bf16.mxu0 0
    %3942 = vmatpush1.bf16.msra.mxu0 %v3840
    %3943 = vmatprep.subr.bf16.mxu0 0
    %3944 = vmatpush1.bf16.msra.mxu0 %v3841
    %3945 = vmatprep.subr.bf16.mxu0 0
    %3946 = vmatpush1.bf16.msra.mxu0 %v3842
    %3947 = vmatprep.subr.bf16.mxu0 0
    %3948 = vmatpush1.bf16.msra.mxu0 %v3843
    %3949 = vmatprep.subr.bf16.mxu0 0
    %3950 = vmatpush1.bf16.msra.mxu0 %v3844
    %3951 = vmatprep.subr.bf16.mxu0 0
    %3952 = vmatpush1.bf16.msra.mxu0 %v3845
    %3953 = vmatprep.subr.bf16.mxu0 0
    %3954 = vmatpush1.bf16.msra.mxu0 %v3846
    %3955 = vmatprep.subr.bf16.mxu0 0
    %3956 = vmatpush1.bf16.msra.mxu0 %v3847
    %3957 = vmatprep.subr.bf16.mxu0 0
    %3958 = vmatpush1.bf16.msra.mxu0 %v3848
    %3959 = vmatprep.subr.bf16.mxu0 0
    %3960 = vmatpush1.bf16.msra.mxu0 %v3849
    %3961 = vmatprep.subr.bf16.mxu0 0
    %3962 = vmatpush1.bf16.msra.mxu0 %v3850
    %3963 = vmatprep.subr.bf16.mxu0 0
    %3964 = vmatpush1.bf16.msra.mxu0 %v3851
    %3965 = vmatprep.mubr.bf16.mxu0 %v3623
    %3966 = vmatmul.mubr.bf16.gmra.mrb[0].mxu0 %v3622
    %v3967 = vpop.f32.mrb[0].mxu0
    %v3968 = vadd.f32 %v3919, %v3967
    %v3969 = vpop.f32.mrb[0].mxu0
    %v3970 = vpop.f32.mrb[0].mxu0
    %v3971 = vadd.f32 %v3922, %v3970
    %v3972 = vpop.f32.mrb[0].mxu0
    %3973 = vmatprep.mubr.bf16.mxu0 %v3627
    %3974 = vmatmul.mubr.bf16.gmra.mrb[0].mxu0 %v3626
    %v3975 = vpop.f32.mrb[0].mxu0
    %v3976 = vadd.f32 %v3927, %v3975
    %v3977 = vpop.f32.mrb[0].mxu0
    %v3978 = vpop.f32.mrb[0].mxu0
    %v3979 = vadd.f32 %v3930, %v3978
    %v3980 = vpop.f32.mrb[0].mxu0
    %3981 = vdwg.mxu0
    %v3982 = vadd.f32 %v2851, %v3968
    %v3983 = vadd.f32 %v2852, %v3971
    %v3984 = vadd.f32 %v2853, %v3976
    %v3985 = vadd.f32 %v2854, %v3979
    %3986 = vst [vmem:[#allocation14] sm:$0xff] %v3982
    %3987 = vst [vmem:[#allocation14 + $0x8] sm:$0xff] %v3983
    %3988 = vst [vmem:[#allocation14 + $0x10] sm:$0xff] %v3984
    %3989 = vst [vmem:[#allocation14 + $0x18] sm:$0xff] %v3985
    // Predicated region
    $region66: #{tpu_custom_call.1} parent=1 // pred_check
      _
    $region67: #{tpu_custom_call.1} parent=1 // pred_check_branch
      %3991 = sbr.rel (0) target = $region69
    $region68: #{tpu_custom_call.1} parent=1 // pred_region
      %s3993 = ssub.s32 512, 512
      %3994 = vsyncadd [#allocation4], %s3993
      %s3995 = sshll.u32 [#allocation14], 4
      %s3996 = int_to_ptr.vmem [resolvable:$true] %s3995
      %4001 = dma.vmem_to_hbm [thread:$0]  %s3996, 512, %s9, [#allocation4], 128, 128, 8
    $region69: #{tpu_custom_call.1} parent=1 // pred_fallthru
      _
    // Predicated region
    $region70: #{tpu_custom_call.1} parent=1 // pred_check
      _
    $region71: #{tpu_custom_call.1} parent=1 // pred_check_branch
      %4003 = sbr.rel (0) target = $region73
    $region72: #{tpu_custom_call.1} parent=1 // pred_region
      %4004 = dma.done [#allocation4], 512
    $region73: #{tpu_custom_call.1} parent=1 // pred_fallthru
      _
    %4005 = vsyncpa [#allocation3], 1
    %4006 = vsyncpa [#allocation6], 1
    %4007 = vsyncpa [#allocation9], 1
    %4008 = vsyncpa [#allocation12], 1
    %4009 = vsyncpa [#allocation4], 1

</llo_original>
